<compile_context>
chip_gen: v7x
topology: tpu7x:2x2x1
jax: 0.10.0
libtpu: 0.0.40
codegen_flags: <defaults>
</compile_context>

<pallas_src>
import functools
import numpy as np

import jax
import jax.numpy as jnp
from jax.experimental import pallas as pl
from jax.experimental.pallas import tpu as pltpu


_LN_EPS = 1e-6     # annotated-transformer LayerNorm eps (PyTorch nn.LayerNorm default is 1e-5)
_NEG_INF = -1e9    # additive mask bias; scores stay f32, so no overflow


def _device_defaults():
    """Generation-aware row tile and scoped-VMEM limit."""
    vmem = 64 * 1024 * 1024
    try:
        info = pltpu.get_tpu_info()
        vmem = int(getattr(info, "vmem_capacity_bytes", vmem))
    except Exception:
        pass
    if vmem >= 96 * 1024 * 1024:            # v5e / v6e: 128 MiB physical VMEM
        return 512, 96 * 1024 * 1024
    return 256, 44 * 1024 * 1024            # v7x: 64 MiB physical VMEM


_TILE_M, _VMEM_LIMIT = _device_defaults()


def _cp(*sems):
    return pltpu.CompilerParams(dimension_semantics=tuple(sems),
                                vmem_limit_bytes=_VMEM_LIMIT)


def _round_up(x, m):
    return ((x + m - 1) // m) * m


def _pad_rows(x2d, m_padded):
    m = x2d.shape[0]
    if m_padded == m:
        return x2d
    return jnp.pad(x2d, ((0, m_padded - m), (0, 0)))


def _seq_tile(s, target):
    if s <= target:
        return s
    t = (target // 8) * 8
    while t > 8 and s % t:
        t -= 8
    return t if (t > 0 and s % t == 0) else s


def _vocab_tile(v):
    if v <= 4096:
        return v
    for bv in (4096, 2048, 1024, 512, 256, 128):
        if v % bv == 0:
            return bv
    return v   # TODO(synk): pad the vocab axis for non-128-multiple vocabs


# ----------------------------- kernel helpers -------------------------------

def _layer_norm(y, g, b):
    mean = jnp.mean(y, axis=-1, keepdims=True)
    var = jnp.mean((y - mean) ** 2, axis=-1, keepdims=True)
    return (y - mean) * jax.lax.rsqrt(var + _LN_EPS) * g + b


# ----------------------------- Pallas kernels ------------------------------

def _head_proj_kernel(x_ref, w_ref, b_ref, *o_refs, n_heads, dh):
    # fused (Q|K|V) / (K|V) / Q projection, written head-major (B,H,S,Dh)
    y = (jnp.dot(x_ref[0], w_ref[...], preferred_element_type=jnp.float32)
         + b_ref[...])                                       # (tq, n_out*H*dh) f32
    for j, o_ref in enumerate(o_refs):
        for h in range(n_heads):
            off = (j * n_heads + h) * dh
            o_ref[0, h] = y[:, off:off + dh].astype(o_ref.dtype)


def _attn_kernel(q_ref, k_ref, v_ref, bias_ref, o_ref, *, scale, causal):
    # one grid step = one (batch, head) pair
    q = q_ref[0, 0] * jnp.asarray(scale, q_ref.dtype)        # scale folded into q (Sq,Dh)
    k = k_ref[0, 0]
    v = v_ref[0, 0]
    s = jax.lax.dot_general(q, k, (((1,), (1,)), ((), ())),
                            preferred_element_type=jnp.float32)   # (Sq, Sk) f32
    s = s + bias_ref[0]                                           # (1, Sk) key-padding bias
    if causal:
        sq, sk = s.shape
        row = jax.lax.broadcasted_iota(jnp.int32, (sq, sk), 0)
        col = jax.lax.broadcasted_iota(jnp.int32, (sq, sk), 1)
        s = jnp.where(col <= row, s, _NEG_INF)
    m = jnp.max(s, axis=-1, keepdims=True)
    p = jnp.exp(s - m)
    o = jnp.dot(p.astype(jnp.bfloat16), v, preferred_element_type=jnp.float32)
    l = jnp.sum(p, axis=-1, keepdims=True)
    # deferred normalization: (Sq, Dh) multiply instead of (Sq, Sk)
    o_ref[0, 0] = (o * pl.reciprocal(l, approx=True)).astype(o_ref.dtype)


def _merge_proj_add_ln_kernel(attn_ref, x_ref, w_ref, b_ref, g_ref, bt_ref, o_ref,
                              *, n_heads):
    # head merge (in-VMEM lane concat) + output projection + residual + LayerNorm
    a = jnp.concatenate([attn_ref[0, h] for h in range(n_heads)], axis=-1)  # (tq, D) bf16
    y = (jnp.dot(a, w_ref[...], preferred_element_type=jnp.float32)
         + b_ref[...] + x_ref[0].astype(jnp.float32))
    o_ref[0] = _layer_norm(y, g_ref[...], bt_ref[...]).astype(o_ref.dtype)


def _ffn_add_ln_kernel(x_ref, w1_ref, b1_ref, w2_ref, b2_ref, g_ref, bt_ref, o_ref):
    # FFN (matmul + ReLU + matmul) + residual add + post-LayerNorm, fused
    x = x_ref[...]                                                           # bf16
    h = (jnp.dot(x, w1_ref[...], preferred_element_type=jnp.float32) + b1_ref[...])
    h = jnp.maximum(h, 0.0)
    y = (jnp.dot(h.astype(jnp.bfloat16), w2_ref[...],
                 preferred_element_type=jnp.float32)
         + b2_ref[...] + x.astype(jnp.float32))
    o_ref[...] = _layer_norm(y, g_ref[...], bt_ref[...]).astype(o_ref.dtype)


def _gen_logits_kernel(x_ref, w_ref, b_ref, logits_ref, lse_ref, m_sc, l_sc):
    # V-tiled generator matmul with online log-sum-exp accumulation
    v = pl.program_id(1)

    @pl.when(v == 0)
    def _():
        m_sc[...] = jnp.full(m_sc.shape, -jnp.inf, m_sc.dtype)
        l_sc[...] = jnp.zeros(l_sc.shape, l_sc.dtype)

    logits = (jnp.dot(x_ref[...], w_ref[...], preferred_element_type=jnp.float32)
              + b_ref[...])
    logits_ref[...] = logits
    m_prev = m_sc[...]
    m_new = jnp.maximum(m_prev, jnp.max(logits, axis=-1, keepdims=True))
    l_sc[...] = (l_sc[...] * jnp.exp(m_prev - m_new)
                 + jnp.sum(jnp.exp(logits - m_new), axis=-1, keepdims=True))
    m_sc[...] = m_new

    @pl.when(v == pl.num_programs(1) - 1)
    def _():
        lse_ref[...] = m_sc[...] + jnp.log(l_sc[...])


def _sub_lse_kernel(logits_ref, lse_ref, o_ref):
    o_ref[...] = logits_ref[...] - lse_ref[...]


# ----------------------------- kernel wrappers ------------------------------

def _row_tiled(kernel, row_inputs, const_inputs, out_cols, out_dtype=jnp.bfloat16):
    """Row(M)-tiled pipelined call; weights kept resident, M axis parallel."""
    M = row_inputs[0].shape[0]
    bm = min(_TILE_M, _round_up(M, 16))          # 16-row granularity (bf16 sublane pack)
    Mp = _round_up(M, bm)
    row_inputs = [_pad_rows(x, Mp) for x in row_inputs]

    in_specs = [pl.BlockSpec((bm, x.shape[1]), lambda i: (i, 0)) for x in row_inputs]
    in_specs += [pl.BlockSpec(c.shape, lambda i: (0, 0)) for c in const_inputs]

    out = pl.pallas_call(
        kernel,
        out_shape=jax.ShapeDtypeStruct((Mp, out_cols), out_dtype),
        grid=(Mp // bm,),
        in_specs=in_specs,
        out_specs=pl.BlockSpec((bm, out_cols), lambda i: (i, 0)),
        compiler_params=_cp("parallel"),
    )(*row_inputs, *const_inputs)
    return out[:M] if Mp != M else out


def head_proj(x, w, b, n_heads, n_out):
    """x: (B, S, D) bf16 -> n_out head-major tensors of shape (B, H, S, Dh) bf16."""
    B, S, D = x.shape
    dh = D // n_heads
    tq = _seq_tile(S, _TILE_M)
    grid = (B, S // tq)

    out_shapes = tuple(jax.ShapeDtypeStruct((B, n_heads, S, dh), jnp.bfloat16)
                       for _ in range(n_out))
    out_specs = tuple(pl.BlockSpec((1, n_heads, tq, dh), lambda bb, ss: (bb, 0, ss, 0))
                      for _ in range(n_out))

    outs = pl.pallas_call(
        functools.partial(_head_proj_kernel, n_heads=n_heads, dh=dh),
        out_shape=out_shapes,
        grid=grid,
        in_specs=[
            pl.BlockSpec((1, tq, D), lambda bb, ss: (bb, ss, 0)),
            pl.BlockSpec(w.shape, lambda bb, ss: (0, 0)),
            pl.BlockSpec((1, w.shape[1]), lambda bb, ss: (0, 0)),
        ],
        out_specs=out_specs,
        compiler_params=_cp("parallel", "parallel"),
    )(x, w, b.reshape(1, -1))
    if not isinstance(outs, (tuple, list)):
        outs = (outs,)
    return tuple(outs)


def attention(q, k, v, key_bias, *, scale, causal):
    """q/k/v: (B, H, S, Dh) bf16; key_bias: (B, 1, Sk) additive f32. Grid (B, H)."""
    B, H, Sq, Dh = q.shape
    Sk = k.shape[2]
    return pl.pallas_call(
        functools.partial(_attn_kernel, scale=scale, causal=causal),
        out_shape=jax.ShapeDtypeStruct((B, H, Sq, Dh), jnp.bfloat16),
        grid=(B, H),
        in_specs=[
            pl.BlockSpec((1, 1, Sq, Dh), lambda b, h: (b, h, 0, 0)),
            pl.BlockSpec((1, 1, Sk, Dh), lambda b, h: (b, h, 0, 0)),
            pl.BlockSpec((1, 1, Sk, Dh), lambda b, h: (b, h, 0, 0)),
            pl.BlockSpec((1, 1, Sk), lambda b, h: (b, 0, 0)),
        ],
        out_specs=pl.BlockSpec((1, 1, Sq, Dh), lambda b, h: (b, h, 0, 0)),
        compiler_params=_cp("parallel", "parallel"),
    )(q, k, v, key_bias)


def merge_proj_add_ln(attn, xq, w, b, gamma, beta, n_heads):
    """attn: (B, H, S, Dh) bf16; xq (residual): (B, S, D) bf16 -> (B, S, D) bf16."""
    B, H, S, Dh = attn.shape
    D = w.shape[1]
    tq = _seq_tile(S, _TILE_M)
    return pl.pallas_call(
        functools.partial(_merge_proj_add_ln_kernel, n_heads=n_heads),
        out_shape=jax.ShapeDtypeStruct((B, S, D), jnp.bfloat16),
        grid=(B, S // tq),
        in_specs=[
            pl.BlockSpec((1, H, tq, Dh), lambda bb, ss: (bb, 0, ss, 0)),
            pl.BlockSpec((1, tq, D), lambda bb, ss: (bb, ss, 0)),
            pl.BlockSpec(w.shape, lambda bb, ss: (0, 0)),
            pl.BlockSpec((1, D), lambda bb, ss: (0, 0)),
            pl.BlockSpec((1, D), lambda bb, ss: (0, 0)),
            pl.BlockSpec((1, D), lambda bb, ss: (0, 0)),
        ],
        out_specs=pl.BlockSpec((1, tq, D), lambda bb, ss: (bb, ss, 0)),
        compiler_params=_cp("parallel", "parallel"),
    )(attn, xq, w, b.reshape(1, D), gamma.reshape(1, D), beta.reshape(1, D))


def generator(x2d, w, b):
    """log_softmax(x @ w + b): V-tiled matmul with online LSE, then subtract."""
    M, D = x2d.shape
    V = w.shape[1]
    bm = min(_TILE_M, _round_up(M, 16))
    Mp = _round_up(M, bm)
    xp = _pad_rows(x2d, Mp)
    bv = _vocab_tile(V)
    nm, nv = Mp // bm, V // bv

    logits, lse = pl.pallas_call(
        _gen_logits_kernel,
        out_shape=(jax.ShapeDtypeStruct((Mp, V), jnp.float32),
                   jax.ShapeDtypeStruct((Mp, 1), jnp.float32)),
        grid=(nm, nv),
        in_specs=[
            pl.BlockSpec((bm, D), lambda i, v: (i, 0)),
            pl.BlockSpec((D, bv), lambda i, v: (0, v)),
            pl.BlockSpec((1, bv), lambda i, v: (0, v)),
        ],
        out_specs=(pl.BlockSpec((bm, bv), lambda i, v: (i, v)),
                   pl.BlockSpec((bm, 1), lambda i, v: (i, 0))),
        scratch_shapes=[pltpu.VMEM((bm, 1), jnp.float32),
                        pltpu.VMEM((bm, 1), jnp.float32)],
        compiler_params=_cp("parallel", "arbitrary"),
    )(xp, w, b.reshape(1, V))

    logp = pl.pallas_call(
        _sub_lse_kernel,
        out_shape=jax.ShapeDtypeStruct((Mp, V), jnp.float32),
        grid=(nm, nv),
        in_specs=[pl.BlockSpec((bm, bv), lambda i, v: (i, v)),
                  pl.BlockSpec((bm, 1), lambda i, v: (i, 0))],
        out_specs=pl.BlockSpec((bm, bv), lambda i, v: (i, v)),
        compiler_params=_cp("parallel", "parallel"),
    )(logits, lse)
    return logp[:M] if Mp != M else logp


# ----------------------------- model glue -----------------------------------

def positional_encoding(max_len, d_model):
    pos = np.arange(max_len)[:, None].astype(np.float32)
    i = np.arange(0, d_model, 2)[None, :].astype(np.float32)
    angle = pos / np.power(10000.0, i / d_model)
    pe = np.zeros((max_len, d_model), dtype=np.float32)
    pe[:, 0::2] = np.sin(angle)
    pe[:, 1::2] = np.cos(angle)
    return jnp.asarray(pe)


def mha_block(xq, xkv, key_bias, p, ln, n_heads, *, causal, fused_qkv):
    """Attention sub-layer in head-major layout with fused projections."""
    B, Sq, D = xq.shape
    dh = D // n_heads
    if fused_qkv:                      # self-attention: single (D, 3D) matmul
        q, k, v = head_proj(xq, p["wqkv"], p["bqkv"], n_heads, n_out=3)
    else:                              # cross-attention: Q from xq, fused K|V from xkv
        (q,) = head_proj(xq, p["wq"], p["bq"], n_heads, n_out=1)
        k, v = head_proj(xkv, p["wkv"], p["bkv"], n_heads, n_out=2)
    attn = attention(q, k, v, key_bias, scale=1.0 / np.sqrt(dh), causal=causal)
    return merge_proj_add_ln(attn, xq, p["wo"], p["bo"], ln["g"], ln["b"], n_heads)


def ffn_block(x, pf, ln):
    B, S, D = x.shape
    y = _row_tiled(
        _ffn_add_ln_kernel, [x.reshape(B * S, D)],
        [pf["w1"], pf["b1"].reshape(1, -1), pf["w2"], pf["b2"].reshape(1, D),
         ln["g"].reshape(1, D), ln["b"].reshape(1, D)], D)
    return y.reshape(B, S, D)


def encoder_layer(x, src_key_bias, p, n_heads):
    x = mha_block(x, x, src_key_bias, p["self_attn"], p["ln1"], n_heads,
                  causal=False, fused_qkv=True)
    x = ffn_block(x, p["ffn"], p["ln2"])
    return x


def decoder_layer(x, enc_out, src_key_bias, tgt_key_bias, p, n_heads):
    x = mha_block(x, x, tgt_key_bias, p["self_attn"], p["ln1"], n_heads,
                  causal=True, fused_qkv=True)
    x = mha_block(x, enc_out, src_key_bias, p["cross_attn"], p["ln2"], n_heads,
                  causal=False, fused_qkv=False)
    x = ffn_block(x, p["ffn"], p["ln3"])
    return x


def transformer_forward(params, src_ids, tgt_ids, *, n_heads, pad_id=0):
    d_model = params["src_embed"].shape[1]
    B, Ss = src_ids.shape
    St = tgt_ids.shape[1]

    # key-padding biases only (B, 1, Sk); the causal triangle is built in-kernel.
    src_key_bias = jnp.where(src_ids != pad_id, 0.0, _NEG_INF).astype(jnp.float32)[:, None, :]
    tgt_key_bias = jnp.where(tgt_ids != pad_id, 0.0, _NEG_INF).astype(jnp.float32)[:, None, :]

    pe = positional_encoding(max(Ss, St), d_model)

    # encoder  (TODO(synk): embedding gather stays a plain-JAX jnp.take)
    x = jnp.take(params["src_embed"], src_ids, axis=0) * np.sqrt(d_model)
    x = (x + pe[None, :Ss, :]).astype(jnp.bfloat16)
    for lp in params["enc_layers"]:
        x = encoder_layer(x, src_key_bias, lp, n_heads)
    enc_out = x

    # decoder
    y = jnp.take(params["tgt_embed"], tgt_ids, axis=0) * np.sqrt(d_model)
    y = (y + pe[None, :St, :]).astype(jnp.bfloat16)
    for lp in params["dec_layers"]:
        y = decoder_layer(y, enc_out, src_key_bias, tgt_key_bias, lp, n_heads)

    # generator: linear + log_softmax over target vocab (f32 output)
    logp = generator(y.reshape(B * St, d_model), params["gen_w"], params["gen_b"])
    logp = logp.reshape(B, St, -1)

    # final_output.permute(1, 0, 2)
    return jnp.transpose(logp, (1, 0, 2))


# ----------------------------- parameter init --------------------------------

def _dense_init(key, fan_in, fan_out):
    # weights stored bf16 (halves weight DMA; MXU runs bf16 anyway)
    w = (jax.random.normal(key, (fan_in, fan_out), jnp.float32)
         * (1.0 / np.sqrt(fan_in))).astype(jnp.bfloat16)
    b = jnp.zeros((fan_out,), jnp.float32)
    return w, b


def init_params(key, vocab_src, vocab_tgt, d_model, d_ff, n_layers):
    keys = iter(jax.random.split(key, 256))

    def self_attn_params():
        wqkv, bqkv = _dense_init(next(keys), d_model, 3 * d_model)   # fused Q|K|V
        wo, bo = _dense_init(next(keys), d_model, d_model)
        return {"wqkv": wqkv, "bqkv": bqkv, "wo": wo, "bo": bo}

    def cross_attn_params():
        wq, bq = _dense_init(next(keys), d_model, d_model)
        wkv, bkv = _dense_init(next(keys), d_model, 2 * d_model)     # fused K|V
        wo, bo = _dense_init(next(keys), d_model, d_model)
        return {"wq": wq, "bq": bq, "wkv": wkv, "bkv": bkv, "wo": wo, "bo": bo}

    def ffn_params():
        w1, b1 = _dense_init(next(keys), d_model, d_ff)
        w2, b2 = _dense_init(next(keys), d_ff, d_model)
        return {"w1": w1, "b1": b1, "w2": w2, "b2": b2}

    def ln_params():
        return {"g": jnp.ones((d_model,), jnp.float32),
                "b": jnp.zeros((d_model,), jnp.float32)}

    enc_layers = [
        {"self_attn": self_attn_params(), "ln1": ln_params(),
         "ffn": ffn_params(), "ln2": ln_params()}
        for _ in range(n_layers)
    ]
    dec_layers = [
        {"self_attn": self_attn_params(), "ln1": ln_params(),
         "cross_attn": cross_attn_params(), "ln2": ln_params(),
         "ffn": ffn_params(), "ln3": ln_params()}
        for _ in range(n_layers)
    ]

    gen_w, gen_b = _dense_init(next(keys), d_model, vocab_tgt)
    return {
        "src_embed": jax.random.normal(next(keys), (vocab_src, d_model), jnp.float32) * 0.02,
        "tgt_embed": jax.random.normal(next(keys), (vocab_tgt, d_model), jnp.float32) * 0.02,
        "enc_layers": enc_layers,
        "dec_layers": dec_layers,
        "gen_w": gen_w,
        "gen_b": gen_b,
    }


# ----------------------------- main ------------------------------------------

if __name__ == "__main__":
    # small, module-consistent shapes
    batch, src_len, tgt_len = 2, 8, 8
    d_model, n_heads, n_layers, d_ff = 32, 4, 2, 64
    vocab_src, vocab_tgt = 40, 48
    pad_id = 0

    root = jax.random.PRNGKey(0)
    k_param, k_src, k_tgt = jax.random.split(root, 3)

    params = init_params(k_param, vocab_src, vocab_tgt, d_model, d_ff, n_layers)

    src_ids = jax.random.randint(k_src, (batch, src_len), 1, vocab_src, dtype=jnp.int32)
    tgt_ids = jax.random.randint(k_tgt, (batch, tgt_len), 1, vocab_tgt, dtype=jnp.int32)
    # simulate padding on the last two positions of the second example
    src_ids = src_ids.at[1, -2:].set(pad_id)
    tgt_ids = tgt_ids.at[1, -2:].set(pad_id)

    fwd = jax.jit(functools.partial(transformer_forward, n_heads=n_heads, pad_id=pad_id))
    out = fwd(params, src_ids, tgt_ids)
    out = jax.block_until_ready(out)

    assert out.shape == (tgt_len, batch, vocab_tgt), out.shape
    assert bool(jnp.all(jnp.isfinite(out)))
    # rows are log-probabilities: logsumexp over vocab ~= 0
    lse = jax.scipy.special.logsumexp(out, axis=-1)
    assert bool(jnp.all(jnp.abs(lse) < 1e-3))

    print("KERNEL_OK")
</pallas_src>

<mosaic_0001>
module attributes {stable_mosaic.version = 11 : i64} {
  func.func @_merge_proj_add_ln_kernel(%arg0: i32, %arg1: i32, %arg2: memref<1x4x8x8xbf16, #tpu.memory_space<vmem>>, %arg3: memref<1x8x32xbf16, #tpu.memory_space<vmem>>, %arg4: memref<32x32xbf16, #tpu.memory_space<vmem>>, %arg5: memref<1x32xf32, #tpu.memory_space<vmem>>, %arg6: memref<1x32xf32, #tpu.memory_space<vmem>>, %arg7: memref<1x32xf32, #tpu.memory_space<vmem>>, %arg8: memref<1x8x32xbf16, #tpu.memory_space<vmem>>) attributes {dimension_semantics = [#tpu.dimension_semantics<parallel>, #tpu.dimension_semantics<parallel>], iteration_bounds = array<i64: 2, 1>, scalar_prefetch = 0 : i64, scratch_operands = 0 : i64, tpu.core_type = #tpu.core_type<tc>, window_params = [{transform_indices = @transform_0, window_bounds = array<i64: 1, 4, 8, 8>}, {transform_indices = @transform_1, window_bounds = array<i64: 1, 8, 32>}, {pipeline_mode = #tpu.pipeline_mode<synchronous>, transform_indices = @transform_2, window_bounds = array<i64: 32, 32>}, {pipeline_mode = #tpu.pipeline_mode<synchronous>, transform_indices = @transform_3, window_bounds = array<i64: 1, 32>}, {pipeline_mode = #tpu.pipeline_mode<synchronous>, transform_indices = @transform_4, window_bounds = array<i64: 1, 32>}, {pipeline_mode = #tpu.pipeline_mode<synchronous>, transform_indices = @transform_5, window_bounds = array<i64: 1, 32>}, {transform_indices = @transform_6, window_bounds = array<i64: 1, 8, 32>}]} {
    %c0 = arith.constant 0 : index
    %c0_0 = arith.constant 0 : index
    %c0_1 = arith.constant 0 : index
    %c0_2 = arith.constant 0 : index
    %0 = vector.load %arg2[%c0, %c0_0, %c0_1, %c0_2] : memref<1x4x8x8xbf16, #tpu.memory_space<vmem>>, vector<1x1x8x8xbf16>
    %1 = vector.shape_cast %0 : vector<1x1x8x8xbf16> to vector<8x8xbf16>
    %c0_3 = arith.constant 0 : index
    %c1 = arith.constant 1 : index
    %c0_4 = arith.constant 0 : index
    %c0_5 = arith.constant 0 : index
    %2 = vector.load %arg2[%c0_3, %c1, %c0_4, %c0_5] : memref<1x4x8x8xbf16, #tpu.memory_space<vmem>>, vector<1x1x8x8xbf16>
    %3 = vector.shape_cast %2 : vector<1x1x8x8xbf16> to vector<8x8xbf16>
    %c0_6 = arith.constant 0 : index
    %c2 = arith.constant 2 : index
    %c0_7 = arith.constant 0 : index
    %c0_8 = arith.constant 0 : index
    %4 = vector.load %arg2[%c0_6, %c2, %c0_7, %c0_8] : memref<1x4x8x8xbf16, #tpu.memory_space<vmem>>, vector<1x1x8x8xbf16>
    %5 = vector.shape_cast %4 : vector<1x1x8x8xbf16> to vector<8x8xbf16>
    %c0_9 = arith.constant 0 : index
    %c3 = arith.constant 3 : index
    %c0_10 = arith.constant 0 : index
    %c0_11 = arith.constant 0 : index
    %6 = vector.load %arg2[%c0_9, %c3, %c0_10, %c0_11] : memref<1x4x8x8xbf16, #tpu.memory_space<vmem>>, vector<1x1x8x8xbf16>
    %7 = vector.shape_cast %6 : vector<1x1x8x8xbf16> to vector<8x8xbf16>
    %8 = tpu.concatenate %1, %3, %5, %7 in 1 : vector<8x8xbf16>, vector<8x8xbf16>, vector<8x8xbf16>, vector<8x8xbf16> -> vector<8x32xbf16>
    %c0_12 = arith.constant 0 : index
    %c0_13 = arith.constant 0 : index
    %9 = vector.load %arg4[%c0_12, %c0_13] : memref<32x32xbf16, #tpu.memory_space<vmem>>, vector<32x32xbf16>
    %cst = arith.constant dense<0.000000e+00> : vector<8x32xf32>
    %10 = tpu.matmul %8, %9, %cst {dimension_numbers = #tpu.dot_dimension_numbers<[1], [0], [0], [1], [0, 0, 1, 1], [], []>} : vector<8x32xbf16>, vector<32x32xbf16>, vector<8x32xf32> -> vector<8x32xf32>
    %c0_14 = arith.constant 0 : index
    %c0_15 = arith.constant 0 : index
    %11 = vector.load %arg5[%c0_14, %c0_15] : memref<1x32xf32, #tpu.memory_space<vmem>>, vector<1x32xf32>
    %12 = vector.broadcast %11 : vector<1x32xf32> to vector<8x32xf32>
    %13 = arith.addf %10, %12 : vector<8x32xf32>
    %c0_16 = arith.constant 0 : index
    %c0_17 = arith.constant 0 : index
    %c0_18 = arith.constant 0 : index
    %14 = vector.load %arg3[%c0_16, %c0_17, %c0_18] : memref<1x8x32xbf16, #tpu.memory_space<vmem>>, vector<1x8x32xbf16>
    %15 = vector.shape_cast %14 : vector<1x8x32xbf16> to vector<8x32xbf16>
    %16 = arith.extf %15 : vector<8x32xbf16> to vector<8x32xf32>
    %17 = arith.addf %13, %16 : vector<8x32xf32>
    %c0_19 = arith.constant 0 : index
    %c0_20 = arith.constant 0 : index
    %18 = vector.load %arg6[%c0_19, %c0_20] : memref<1x32xf32, #tpu.memory_space<vmem>>, vector<1x32xf32>
    %c0_21 = arith.constant 0 : index
    %c0_22 = arith.constant 0 : index
    %19 = vector.load %arg7[%c0_21, %c0_22] : memref<1x32xf32, #tpu.memory_space<vmem>>, vector<1x32xf32>
    %cst_23 = arith.constant dense<0.000000e+00> : vector<8xf32>
    %20 = vector.multi_reduction <add>, %17, %cst_23 [1] : vector<8x32xf32> to vector<8xf32>
    %21 = vector.shape_cast %20 : vector<8xf32> to vector<8x1xf32>
    %cst_24 = arith.constant 3.200000e+01 : f32
    %22 = vector.broadcast %cst_24 : f32 to vector<8x1xf32>
    %23 = arith.divf %21, %22 : vector<8x1xf32>
    %24 = vector.broadcast %23 : vector<8x1xf32> to vector<8x32xf32>
    %25 = arith.subf %17, %24 : vector<8x32xf32>
    %26 = arith.mulf %25, %25 : vector<8x32xf32>
    %cst_25 = arith.constant dense<0.000000e+00> : vector<8xf32>
    %27 = vector.multi_reduction <add>, %26, %cst_25 [1] : vector<8x32xf32> to vector<8xf32>
    %28 = vector.shape_cast %27 : vector<8xf32> to vector<8x1xf32>
    %cst_26 = arith.constant 3.200000e+01 : f32
    %29 = vector.broadcast %cst_26 : f32 to vector<8x1xf32>
    %30 = arith.divf %28, %29 : vector<8x1xf32>
    %31 = vector.broadcast %23 : vector<8x1xf32> to vector<8x32xf32>
    %32 = arith.subf %17, %31 : vector<8x32xf32>
    %cst_27 = arith.constant 9.99999997E-7 : f32
    %33 = vector.broadcast %cst_27 : f32 to vector<8x1xf32>
    %34 = arith.addf %30, %33 : vector<8x1xf32>
    %35 = math.rsqrt %34 : vector<8x1xf32>
    %36 = vector.broadcast %35 : vector<8x1xf32> to vector<8x32xf32>
    %37 = arith.mulf %32, %36 : vector<8x32xf32>
    %38 = vector.broadcast %18 : vector<1x32xf32> to vector<8x32xf32>
    %39 = arith.mulf %37, %38 : vector<8x32xf32>
    %40 = vector.broadcast %19 : vector<1x32xf32> to vector<8x32xf32>
    %41 = arith.addf %39, %40 : vector<8x32xf32>
    %42 = arith.truncf %41 : vector<8x32xf32> to vector<8x32xbf16>
    %c0_28 = arith.constant 0 : index
    %c0_29 = arith.constant 0 : index
    %c0_30 = arith.constant 0 : index
    %43 = vector.load %arg8[%c0_28, %c0_29, %c0_30] : memref<1x8x32xbf16, #tpu.memory_space<vmem>>, vector<1x8x32xbf16>
    %44 = vector.shape_cast %43 : vector<1x8x32xbf16> to vector<8x32xbf16>
    %45 = vector.shape_cast %42 : vector<8x32xbf16> to vector<1x8x32xbf16>
    tpu.vector_store %arg8[%c0_28, %c0_29, %c0_30], %45 {strides = array<i32>} : memref<1x8x32xbf16, #tpu.memory_space<vmem>>, vector<1x8x32xbf16>,
    return
  }
  func.func @transform_0(%arg0: i32, %arg1: i32) -> (i32, i32, i32, i32) {
    %c0_i32 = arith.constant 0 : i32
    %c0_i32_0 = arith.constant 0 : i32
    %c0_i32_1 = arith.constant 0 : i32
    return %arg0, %c0_i32, %arg1, %c0_i32_0 : i32, i32, i32, i32
  }
  func.func @transform_1(%arg0: i32, %arg1: i32) -> (i32, i32, i32) {
    %c0_i32 = arith.constant 0 : i32
    %c0_i32_0 = arith.constant 0 : i32
    return %arg0, %arg1, %c0_i32 : i32, i32, i32
  }
  func.func @transform_2(%arg0: i32, %arg1: i32) -> (i32, i32) {
    %c0_i32 = arith.constant 0 : i32
    %c0_i32_0 = arith.constant 0 : i32
    %c0_i32_1 = arith.constant 0 : i32
    return %c0_i32, %c0_i32_0 : i32, i32
  }
  func.func @transform_3(%arg0: i32, %arg1: i32) -> (i32, i32) {
    %c0_i32 = arith.constant 0 : i32
    %c0_i32_0 = arith.constant 0 : i32
    %c0_i32_1 = arith.constant 0 : i32
    return %c0_i32, %c0_i32_0 : i32, i32
  }
  func.func @transform_4(%arg0: i32, %arg1: i32) -> (i32, i32) {
    %c0_i32 = arith.constant 0 : i32
    %c0_i32_0 = arith.constant 0 : i32
    %c0_i32_1 = arith.constant 0 : i32
    return %c0_i32, %c0_i32_0 : i32, i32
  }
  func.func @transform_5(%arg0: i32, %arg1: i32) -> (i32, i32) {
    %c0_i32 = arith.constant 0 : i32
    %c0_i32_0 = arith.constant 0 : i32
    %c0_i32_1 = arith.constant 0 : i32
    return %c0_i32, %c0_i32_0 : i32, i32
  }
  func.func @transform_6(%arg0: i32, %arg1: i32) -> (i32, i32, i32) {
    %c0_i32 = arith.constant 0 : i32
    %c0_i32_0 = arith.constant 0 : i32
    return %arg0, %arg1, %c0_i32 : i32, i32, i32
  }
}

module attributes {stable_mosaic.version = 11 : i64} {
  func.func @_attn_kernel(%arg0: i32, %arg1: i32, %arg2: memref<1x1x8x8xbf16, #tpu.memory_space<vmem>>, %arg3: memref<1x1x8x8xbf16, #tpu.memory_space<vmem>>, %arg4: memref<1x1x8x8xbf16, #tpu.memory_space<vmem>>, %arg5: memref<1x1x8xf32, #tpu.memory_space<vmem>>, %arg6: memref<1x1x8x8xbf16, #tpu.memory_space<vmem>>) attributes {dimension_semantics = [#tpu.dimension_semantics<parallel>, #tpu.dimension_semantics<parallel>], iteration_bounds = array<i64: 2, 4>, scalar_prefetch = 0 : i64, scratch_operands = 0 : i64, tpu.core_type = #tpu.core_type<tc>, window_params = [{transform_indices = @transform_0, window_bounds = array<i64: 1, 1, 8, 8>}, {transform_indices = @transform_1, window_bounds = array<i64: 1, 1, 8, 8>}, {transform_indices = @transform_2, window_bounds = array<i64: 1, 1, 8, 8>}, {transform_indices = @transform_3, window_bounds = array<i64: 1, 1, 8>}, {transform_indices = @transform_4, window_bounds = array<i64: 1, 1, 8, 8>}]} {
    %c0 = arith.constant 0 : index
    %c0_0 = arith.constant 0 : index
    %c0_1 = arith.constant 0 : index
    %c0_2 = arith.constant 0 : index
    %0 = vector.load %arg2[%c0, %c0_0, %c0_1, %c0_2] : memref<1x1x8x8xbf16, #tpu.memory_space<vmem>>, vector<1x1x8x8xbf16>
    %1 = vector.shape_cast %0 : vector<1x1x8x8xbf16> to vector<8x8xbf16>
    %cst = arith.constant 3.535160e-01 : bf16
    %2 = vector.broadcast %cst : bf16 to vector<8x8xbf16>
    %3 = arith.mulf %1, %2 : vector<8x8xbf16>
    %c0_3 = arith.constant 0 : index
    %c0_4 = arith.constant 0 : index
    %c0_5 = arith.constant 0 : index
    %c0_6 = arith.constant 0 : index
    %4 = vector.load %arg3[%c0_3, %c0_4, %c0_5, %c0_6] : memref<1x1x8x8xbf16, #tpu.memory_space<vmem>>, vector<1x1x8x8xbf16>
    %5 = vector.shape_cast %4 : vector<1x1x8x8xbf16> to vector<8x8xbf16>
    %c0_7 = arith.constant 0 : index
    %c0_8 = arith.constant 0 : index
    %c0_9 = arith.constant 0 : index
    %c0_10 = arith.constant 0 : index
    %6 = vector.load %arg4[%c0_7, %c0_8, %c0_9, %c0_10] : memref<1x1x8x8xbf16, #tpu.memory_space<vmem>>, vector<1x1x8x8xbf16>
    %7 = vector.shape_cast %6 : vector<1x1x8x8xbf16> to vector<8x8xbf16>
    %cst_11 = arith.constant dense<0.000000e+00> : vector<8x8xf32>
    %8 = tpu.matmul %3, %5, %cst_11 {dimension_numbers = #tpu.dot_dimension_numbers<[1], [1], [0], [0], [0, 0, 1, 0], [], []>} : vector<8x8xbf16>, vector<8x8xbf16>, vector<8x8xf32> -> vector<8x8xf32>
    %c0_12 = arith.constant 0 : index
    %c0_13 = arith.constant 0 : index
    %c0_14 = arith.constant 0 : index
    %9 = vector.load %arg5[%c0_12, %c0_13, %c0_14] : memref<1x1x8xf32, #tpu.memory_space<vmem>>, vector<1x1x8xf32>
    %10 = vector.shape_cast %9 : vector<1x1x8xf32> to vector<1x8xf32>
    %11 = vector.broadcast %10 : vector<1x8xf32> to vector<8x8xf32>
    %12 = arith.addf %8, %11 : vector<8x8xf32>
    %13 = tpu.iota {dimensions = array<i32: 0>} : vector<8x8xi32>
    %14 = tpu.iota {dimensions = array<i32: 1>} : vector<8x8xi32>
    %15 = arith.cmpi sle, %14, %13 : vector<8x8xi32>
    %cst_15 = arith.constant -1.000000e+09 : f32
    %16 = vector.broadcast %cst_15 : f32 to vector<8x8xf32>
    %17 = arith.select %15, %12, %16 : vector<8x8xi1>, vector<8x8xf32>
    %cst_16 = arith.constant dense<0xFF800000> : vector<8xf32>
    %18 = vector.multi_reduction <maximumf>, %17, %cst_16 [1] : vector<8x8xf32> to vector<8xf32>
    %19 = vector.shape_cast %18 : vector<8xf32> to vector<8x1xf32>
    %20 = vector.broadcast %19 : vector<8x1xf32> to vector<8x8xf32>
    %21 = arith.subf %17, %20 : vector<8x8xf32>
    %22 = math.exp %21 : vector<8x8xf32>
    %23 = arith.truncf %22 : vector<8x8xf32> to vector<8x8xbf16>
    %cst_17 = arith.constant dense<0.000000e+00> : vector<8x8xf32>
    %24 = tpu.matmul %23, %7, %cst_17 {dimension_numbers = #tpu.dot_dimension_numbers<[1], [0], [0], [1], [0, 0, 1, 1], [], []>} : vector<8x8xbf16>, vector<8x8xbf16>, vector<8x8xf32> -> vector<8x8xf32>
    %cst_18 = arith.constant dense<0.000000e+00> : vector<8xf32>
    %25 = vector.multi_reduction <add>, %22, %cst_18 [1] : vector<8x8xf32> to vector<8xf32>
    %26 = vector.shape_cast %25 : vector<8xf32> to vector<8x1xf32>
    %27 = tpu.reciprocal %26 {approx = true} : vector<8x1xf32> -> vector<8x1xf32>
    %28 = vector.broadcast %27 : vector<8x1xf32> to vector<8x8xf32>
    %29 = arith.mulf %24, %28 : vector<8x8xf32>
    %30 = arith.truncf %29 : vector<8x8xf32> to vector<8x8xbf16>
    %c0_19 = arith.constant 0 : index
    %c0_20 = arith.constant 0 : index
    %c0_21 = arith.constant 0 : index
    %c0_22 = arith.constant 0 : index
    %31 = vector.load %arg6[%c0_19, %c0_20, %c0_21, %c0_22] : memref<1x1x8x8xbf16, #tpu.memory_space<vmem>>, vector<1x1x8x8xbf16>
    %32 = vector.shape_cast %31 : vector<1x1x8x8xbf16> to vector<8x8xbf16>
    %33 = vector.shape_cast %30 : vector<8x8xbf16> to vector<1x1x8x8xbf16>
    tpu.vector_store %arg6[%c0_19, %c0_20, %c0_21, %c0_22], %33 {strides = array<i32>} : memref<1x1x8x8xbf16, #tpu.memory_space<vmem>>, vector<1x1x8x8xbf16>,
    return
  }
  func.func @transform_0(%arg0: i32, %arg1: i32) -> (i32, i32, i32, i32) {
    %c0_i32 = arith.constant 0 : i32
    %c0_i32_0 = arith.constant 0 : i32
    %c0_i32_1 = arith.constant 0 : i32
    return %arg0, %arg1, %c0_i32, %c0_i32_0 : i32, i32, i32, i32
  }
  func.func @transform_1(%arg0: i32, %arg1: i32) -> (i32, i32, i32, i32) {
    %c0_i32 = arith.constant 0 : i32
    %c0_i32_0 = arith.constant 0 : i32
    %c0_i32_1 = arith.constant 0 : i32
    return %arg0, %arg1, %c0_i32, %c0_i32_0 : i32, i32, i32, i32
  }
  func.func @transform_2(%arg0: i32, %arg1: i32) -> (i32, i32, i32, i32) {
    %c0_i32 = arith.constant 0 : i32
    %c0_i32_0 = arith.constant 0 : i32
    %c0_i32_1 = arith.constant 0 : i32
    return %arg0, %arg1, %c0_i32, %c0_i32_0 : i32, i32, i32, i32
  }
  func.func @transform_3(%arg0: i32, %arg1: i32) -> (i32, i32, i32) {
    %c0_i32 = arith.constant 0 : i32
    %c0_i32_0 = arith.constant 0 : i32
    %c0_i32_1 = arith.constant 0 : i32
    return %arg0, %c0_i32, %c0_i32_0 : i32, i32, i32
  }
  func.func @transform_4(%arg0: i32, %arg1: i32) -> (i32, i32, i32, i32) {
    %c0_i32 = arith.constant 0 : i32
    %c0_i32_0 = arith.constant 0 : i32
    %c0_i32_1 = arith.constant 0 : i32
    return %arg0, %arg1, %c0_i32, %c0_i32_0 : i32, i32, i32, i32
  }
}

module attributes {stable_mosaic.version = 11 : i64} {
  func.func @_head_proj_kernel(%arg0: i32, %arg1: i32, %arg2: memref<1x8x32xbf16, #tpu.memory_space<vmem>>, %arg3: memref<32x32xbf16, #tpu.memory_space<vmem>>, %arg4: memref<1x32xf32, #tpu.memory_space<vmem>>, %arg5: memref<1x4x8x8xbf16, #tpu.memory_space<vmem>>) attributes {dimension_semantics = [#tpu.dimension_semantics<parallel>, #tpu.dimension_semantics<parallel>], iteration_bounds = array<i64: 2, 1>, scalar_prefetch = 0 : i64, scratch_operands = 0 : i64, tpu.core_type = #tpu.core_type<tc>, window_params = [{transform_indices = @transform_0, window_bounds = array<i64: 1, 8, 32>}, {pipeline_mode = #tpu.pipeline_mode<synchronous>, transform_indices = @transform_1, window_bounds = array<i64: 32, 32>}, {pipeline_mode = #tpu.pipeline_mode<synchronous>, transform_indices = @transform_2, window_bounds = array<i64: 1, 32>}, {transform_indices = @transform_3, window_bounds = array<i64: 1, 4, 8, 8>}]} {
    %c0 = arith.constant 0 : index
    %c0_0 = arith.constant 0 : index
    %c0_1 = arith.constant 0 : index
    %0 = vector.load %arg2[%c0, %c0_0, %c0_1] : memref<1x8x32xbf16, #tpu.memory_space<vmem>>, vector<1x8x32xbf16>
    %1 = vector.shape_cast %0 : vector<1x8x32xbf16> to vector<8x32xbf16>
    %c0_2 = arith.constant 0 : index
    %c0_3 = arith.constant 0 : index
    %2 = vector.load %arg3[%c0_2, %c0_3] : memref<32x32xbf16, #tpu.memory_space<vmem>>, vector<32x32xbf16>
    %cst = arith.constant dense<0.000000e+00> : vector<8x32xf32>
    %3 = tpu.matmul %1, %2, %cst {dimension_numbers = #tpu.dot_dimension_numbers<[1], [0], [0], [1], [0, 0, 1, 1], [], []>} : vector<8x32xbf16>, vector<32x32xbf16>, vector<8x32xf32> -> vector<8x32xf32>
    %c0_4 = arith.constant 0 : index
    %c0_5 = arith.constant 0 : index
    %4 = vector.load %arg4[%c0_4, %c0_5] : memref<1x32xf32, #tpu.memory_space<vmem>>, vector<1x32xf32>
    %5 = vector.broadcast %4 : vector<1x32xf32> to vector<8x32xf32>
    %6 = arith.addf %3, %5 : vector<8x32xf32>
    %7 = vector.extract_strided_slice %6 {offsets = [0, 0], sizes = [8, 8], strides = [1, 1]} : vector<8x32xf32> to vector<8x8xf32>
    %8 = arith.truncf %7 : vector<8x8xf32> to vector<8x8xbf16>
    %c0_6 = arith.constant 0 : index
    %c0_7 = arith.constant 0 : index
    %c0_8 = arith.constant 0 : index
    %c0_9 = arith.constant 0 : index
    %9 = vector.load %arg5[%c0_6, %c0_7, %c0_8, %c0_9] : memref<1x4x8x8xbf16, #tpu.memory_space<vmem>>, vector<1x1x8x8xbf16>
    %10 = vector.shape_cast %9 : vector<1x1x8x8xbf16> to vector<8x8xbf16>
    %11 = vector.shape_cast %8 : vector<8x8xbf16> to vector<1x1x8x8xbf16>
    tpu.vector_store %arg5[%c0_6, %c0_7, %c0_8, %c0_9], %11 {strides = array<i32>} : memref<1x4x8x8xbf16, #tpu.memory_space<vmem>>, vector<1x1x8x8xbf16>,
    %12 = vector.extract_strided_slice %6 {offsets = [0, 8], sizes = [8, 8], strides = [1, 1]} : vector<8x32xf32> to vector<8x8xf32>
    %13 = arith.truncf %12 : vector<8x8xf32> to vector<8x8xbf16>
    %c0_10 = arith.constant 0 : index
    %c1 = arith.constant 1 : index
    %c0_11 = arith.constant 0 : index
    %c0_12 = arith.constant 0 : index
    %14 = vector.load %arg5[%c0_10, %c1, %c0_11, %c0_12] : memref<1x4x8x8xbf16, #tpu.memory_space<vmem>>, vector<1x1x8x8xbf16>
    %15 = vector.shape_cast %14 : vector<1x1x8x8xbf16> to vector<8x8xbf16>
    %16 = vector.shape_cast %13 : vector<8x8xbf16> to vector<1x1x8x8xbf16>
    tpu.vector_store %arg5[%c0_10, %c1, %c0_11, %c0_12], %16 {strides = array<i32>} : memref<1x4x8x8xbf16, #tpu.memory_space<vmem>>, vector<1x1x8x8xbf16>,
    %17 = vector.extract_strided_slice %6 {offsets = [0, 16], sizes = [8, 8], strides = [1, 1]} : vector<8x32xf32> to vector<8x8xf32>
    %18 = arith.truncf %17 : vector<8x8xf32> to vector<8x8xbf16>
    %c0_13 = arith.constant 0 : index
    %c2 = arith.constant 2 : index
    %c0_14 = arith.constant 0 : index
    %c0_15 = arith.constant 0 : index
    %19 = vector.load %arg5[%c0_13, %c2, %c0_14, %c0_15] : memref<1x4x8x8xbf16, #tpu.memory_space<vmem>>, vector<1x1x8x8xbf16>
    %20 = vector.shape_cast %19 : vector<1x1x8x8xbf16> to vector<8x8xbf16>
    %21 = vector.shape_cast %18 : vector<8x8xbf16> to vector<1x1x8x8xbf16>
    tpu.vector_store %arg5[%c0_13, %c2, %c0_14, %c0_15], %21 {strides = array<i32>} : memref<1x4x8x8xbf16, #tpu.memory_space<vmem>>, vector<1x1x8x8xbf16>,
    %22 = vector.extract_strided_slice %6 {offsets = [0, 24], sizes = [8, 8], strides = [1, 1]} : vector<8x32xf32> to vector<8x8xf32>
    %23 = arith.truncf %22 : vector<8x8xf32> to vector<8x8xbf16>
    %c0_16 = arith.constant 0 : index
    %c3 = arith.constant 3 : index
    %c0_17 = arith.constant 0 : index
    %c0_18 = arith.constant 0 : index
    %24 = vector.load %arg5[%c0_16, %c3, %c0_17, %c0_18] : memref<1x4x8x8xbf16, #tpu.memory_space<vmem>>, vector<1x1x8x8xbf16>
    %25 = vector.shape_cast %24 : vector<1x1x8x8xbf16> to vector<8x8xbf16>
    %26 = vector.shape_cast %23 : vector<8x8xbf16> to vector<1x1x8x8xbf16>
    tpu.vector_store %arg5[%c0_16, %c3, %c0_17, %c0_18], %26 {strides = array<i32>} : memref<1x4x8x8xbf16, #tpu.memory_space<vmem>>, vector<1x1x8x8xbf16>,
    return
  }
  func.func @transform_0(%arg0: i32, %arg1: i32) -> (i32, i32, i32) {
    %c0_i32 = arith.constant 0 : i32
    %c0_i32_0 = arith.constant 0 : i32
    return %arg0, %arg1, %c0_i32 : i32, i32, i32
  }
  func.func @transform_1(%arg0: i32, %arg1: i32) -> (i32, i32) {
    %c0_i32 = arith.constant 0 : i32
    %c0_i32_0 = arith.constant 0 : i32
    %c0_i32_1 = arith.constant 0 : i32
    return %c0_i32, %c0_i32_0 : i32, i32
  }
  func.func @transform_2(%arg0: i32, %arg1: i32) -> (i32, i32) {
    %c0_i32 = arith.constant 0 : i32
    %c0_i32_0 = arith.constant 0 : i32
    %c0_i32_1 = arith.constant 0 : i32
    return %c0_i32, %c0_i32_0 : i32, i32
  }
  func.func @transform_3(%arg0: i32, %arg1: i32) -> (i32, i32, i32, i32) {
    %c0_i32 = arith.constant 0 : i32
    %c0_i32_0 = arith.constant 0 : i32
    %c0_i32_1 = arith.constant 0 : i32
    return %arg0, %c0_i32, %arg1, %c0_i32_0 : i32, i32, i32, i32
  }
}

module attributes {stable_mosaic.version = 11 : i64} {
  func.func @_head_proj_kernel(%arg0: i32, %arg1: i32, %arg2: memref<1x8x32xbf16, #tpu.memory_space<vmem>>, %arg3: memref<32x96xbf16, #tpu.memory_space<vmem>>, %arg4: memref<1x96xf32, #tpu.memory_space<vmem>>, %arg5: memref<1x4x8x8xbf16, #tpu.memory_space<vmem>>, %arg6: memref<1x4x8x8xbf16, #tpu.memory_space<vmem>>, %arg7: memref<1x4x8x8xbf16, #tpu.memory_space<vmem>>) attributes {dimension_semantics = [#tpu.dimension_semantics<parallel>, #tpu.dimension_semantics<parallel>], iteration_bounds = array<i64: 2, 1>, scalar_prefetch = 0 : i64, scratch_operands = 0 : i64, tpu.core_type = #tpu.core_type<tc>, window_params = [{transform_indices = @transform_0, window_bounds = array<i64: 1, 8, 32>}, {pipeline_mode = #tpu.pipeline_mode<synchronous>, transform_indices = @transform_1, window_bounds = array<i64: 32, 96>}, {pipeline_mode = #tpu.pipeline_mode<synchronous>, transform_indices = @transform_2, window_bounds = array<i64: 1, 96>}, {transform_indices = @transform_3, window_bounds = array<i64: 1, 4, 8, 8>}, {transform_indices = @transform_4, window_bounds = array<i64: 1, 4, 8, 8>}, {transform_indices = @transform_5, window_bounds = array<i64: 1, 4, 8, 8>}]} {
    %c0 = arith.constant 0 : index
    %c0_0 = arith.constant 0 : index
    %c0_1 = arith.constant 0 : index
    %0 = vector.load %arg2[%c0, %c0_0, %c0_1] : memref<1x8x32xbf16, #tpu.memory_space<vmem>>, vector<1x8x32xbf16>
    %1 = vector.shape_cast %0 : vector<1x8x32xbf16> to vector<8x32xbf16>
    %c0_2 = arith.constant 0 : index
    %c0_3 = arith.constant 0 : index
    %2 = vector.load %arg3[%c0_2, %c0_3] : memref<32x96xbf16, #tpu.memory_space<vmem>>, vector<32x96xbf16>
    %cst = arith.constant dense<0.000000e+00> : vector<8x96xf32>
    %3 = tpu.matmul %1, %2, %cst {dimension_numbers = #tpu.dot_dimension_numbers<[1], [0], [0], [1], [0, 0, 1, 1], [], []>} : vector<8x32xbf16>, vector<32x96xbf16>, vector<8x96xf32> -> vector<8x96xf32>
    %c0_4 = arith.constant 0 : index
    %c0_5 = arith.constant 0 : index
    %4 = vector.load %arg4[%c0_4, %c0_5] : memref<1x96xf32, #tpu.memory_space<vmem>>, vector<1x96xf32>
    %5 = vector.broadcast %4 : vector<1x96xf32> to vector<8x96xf32>
    %6 = arith.addf %3, %5 : vector<8x96xf32>
    %7 = vector.extract_strided_slice %6 {offsets = [0, 0], sizes = [8, 8], strides = [1, 1]} : vector<8x96xf32> to vector<8x8xf32>
    %8 = arith.truncf %7 : vector<8x8xf32> to vector<8x8xbf16>
    %c0_6 = arith.constant 0 : index
    %c0_7 = arith.constant 0 : index
    %c0_8 = arith.constant 0 : index
    %c0_9 = arith.constant 0 : index
    %9 = vector.load %arg5[%c0_6, %c0_7, %c0_8, %c0_9] : memref<1x4x8x8xbf16, #tpu.memory_space<vmem>>, vector<1x1x8x8xbf16>
    %10 = vector.shape_cast %9 : vector<1x1x8x8xbf16> to vector<8x8xbf16>
    %11 = vector.shape_cast %8 : vector<8x8xbf16> to vector<1x1x8x8xbf16>
    tpu.vector_store %arg5[%c0_6, %c0_7, %c0_8, %c0_9], %11 {strides = array<i32>} : memref<1x4x8x8xbf16, #tpu.memory_space<vmem>>, vector<1x1x8x8xbf16>,
    %12 = vector.extract_strided_slice %6 {offsets = [0, 8], sizes = [8, 8], strides = [1, 1]} : vector<8x96xf32> to vector<8x8xf32>
    %13 = arith.truncf %12 : vector<8x8xf32> to vector<8x8xbf16>
    %c0_10 = arith.constant 0 : index
    %c1 = arith.constant 1 : index
    %c0_11 = arith.constant 0 : index
    %c0_12 = arith.constant 0 : index
    %14 = vector.load %arg5[%c0_10, %c1, %c0_11, %c0_12] : memref<1x4x8x8xbf16, #tpu.memory_space<vmem>>, vector<1x1x8x8xbf16>
    %15 = vector.shape_cast %14 : vector<1x1x8x8xbf16> to vector<8x8xbf16>
    %16 = vector.shape_cast %13 : vector<8x8xbf16> to vector<1x1x8x8xbf16>
    tpu.vector_store %arg5[%c0_10, %c1, %c0_11, %c0_12], %16 {strides = array<i32>} : memref<1x4x8x8xbf16, #tpu.memory_space<vmem>>, vector<1x1x8x8xbf16>,
    %17 = vector.extract_strided_slice %6 {offsets = [0, 16], sizes = [8, 8], strides = [1, 1]} : vector<8x96xf32> to vector<8x8xf32>
    %18 = arith.truncf %17 : vector<8x8xf32> to vector<8x8xbf16>
    %c0_13 = arith.constant 0 : index
    %c2 = arith.constant 2 : index
    %c0_14 = arith.constant 0 : index
    %c0_15 = arith.constant 0 : index
    %19 = vector.load %arg5[%c0_13, %c2, %c0_14, %c0_15] : memref<1x4x8x8xbf16, #tpu.memory_space<vmem>>, vector<1x1x8x8xbf16>
    %20 = vector.shape_cast %19 : vector<1x1x8x8xbf16> to vector<8x8xbf16>
    %21 = vector.shape_cast %18 : vector<8x8xbf16> to vector<1x1x8x8xbf16>
    tpu.vector_store %arg5[%c0_13, %c2, %c0_14, %c0_15], %21 {strides = array<i32>} : memref<1x4x8x8xbf16, #tpu.memory_space<vmem>>, vector<1x1x8x8xbf16>,
    %22 = vector.extract_strided_slice %6 {offsets = [0, 24], sizes = [8, 8], strides = [1, 1]} : vector<8x96xf32> to vector<8x8xf32>
    %23 = arith.truncf %22 : vector<8x8xf32> to vector<8x8xbf16>
    %c0_16 = arith.constant 0 : index
    %c3 = arith.constant 3 : index
    %c0_17 = arith.constant 0 : index
    %c0_18 = arith.constant 0 : index
    %24 = vector.load %arg5[%c0_16, %c3, %c0_17, %c0_18] : memref<1x4x8x8xbf16, #tpu.memory_space<vmem>>, vector<1x1x8x8xbf16>
    %25 = vector.shape_cast %24 : vector<1x1x8x8xbf16> to vector<8x8xbf16>
    %26 = vector.shape_cast %23 : vector<8x8xbf16> to vector<1x1x8x8xbf16>
    tpu.vector_store %arg5[%c0_16, %c3, %c0_17, %c0_18], %26 {strides = array<i32>} : memref<1x4x8x8xbf16, #tpu.memory_space<vmem>>, vector<1x1x8x8xbf16>,
    %27 = vector.extract_strided_slice %6 {offsets = [0, 32], sizes = [8, 8], strides = [1, 1]} : vector<8x96xf32> to vector<8x8xf32>
    %28 = arith.truncf %27 : vector<8x8xf32> to vector<8x8xbf16>
    %c0_19 = arith.constant 0 : index
    %c0_20 = arith.constant 0 : index
    %c0_21 = arith.constant 0 : index
    %c0_22 = arith.constant 0 : index
    %29 = vector.load %arg6[%c0_19, %c0_20, %c0_21, %c0_22] : memref<1x4x8x8xbf16, #tpu.memory_space<vmem>>, vector<1x1x8x8xbf16>
    %30 = vector.shape_cast %29 : vector<1x1x8x8xbf16> to vector<8x8xbf16>
    %31 = vector.shape_cast %28 : vector<8x8xbf16> to vector<1x1x8x8xbf16>
    tpu.vector_store %arg6[%c0_19, %c0_20, %c0_21, %c0_22], %31 {strides = array<i32>} : memref<1x4x8x8xbf16, #tpu.memory_space<vmem>>, vector<1x1x8x8xbf16>,
    %32 = vector.extract_strided_slice %6 {offsets = [0, 40], sizes = [8, 8], strides = [1, 1]} : vector<8x96xf32> to vector<8x8xf32>
    %33 = arith.truncf %32 : vector<8x8xf32> to vector<8x8xbf16>
    %c0_23 = arith.constant 0 : index
    %c1_24 = arith.constant 1 : index
    %c0_25 = arith.constant 0 : index
    %c0_26 = arith.constant 0 : index
    %34 = vector.load %arg6[%c0_23, %c1_24, %c0_25, %c0_26] : memref<1x4x8x8xbf16, #tpu.memory_space<vmem>>, vector<1x1x8x8xbf16>
    %35 = vector.shape_cast %34 : vector<1x1x8x8xbf16> to vector<8x8xbf16>
    %36 = vector.shape_cast %33 : vector<8x8xbf16> to vector<1x1x8x8xbf16>
    tpu.vector_store %arg6[%c0_23, %c1_24, %c0_25, %c0_26], %36 {strides = array<i32>} : memref<1x4x8x8xbf16, #tpu.memory_space<vmem>>, vector<1x1x8x8xbf16>,
    %37 = vector.extract_strided_slice %6 {offsets = [0, 48], sizes = [8, 8], strides = [1, 1]} : vector<8x96xf32> to vector<8x8xf32>
    %38 = arith.truncf %37 : vector<8x8xf32> to vector<8x8xbf16>
    %c0_27 = arith.constant 0 : index
    %c2_28 = arith.constant 2 : index
    %c0_29 = arith.constant 0 : index
    %c0_30 = arith.constant 0 : index
    %39 = vector.load %arg6[%c0_27, %c2_28, %c0_29, %c0_30] : memref<1x4x8x8xbf16, #tpu.memory_space<vmem>>, vector<1x1x8x8xbf16>
    %40 = vector.shape_cast %39 : vector<1x1x8x8xbf16> to vector<8x8xbf16>
    %41 = vector.shape_cast %38 : vector<8x8xbf16> to vector<1x1x8x8xbf16>
    tpu.vector_store %arg6[%c0_27, %c2_28, %c0_29, %c0_30], %41 {strides = array<i32>} : memref<1x4x8x8xbf16, #tpu.memory_space<vmem>>, vector<1x1x8x8xbf16>,
    %42 = vector.extract_strided_slice %6 {offsets = [0, 56], sizes = [8, 8], strides = [1, 1]} : vector<8x96xf32> to vector<8x8xf32>
    %43 = arith.truncf %42 : vector<8x8xf32> to vector<8x8xbf16>
    %c0_31 = arith.constant 0 : index
    %c3_32 = arith.constant 3 : index
    %c0_33 = arith.constant 0 : index
    %c0_34 = arith.constant 0 : index
    %44 = vector.load %arg6[%c0_31, %c3_32, %c0_33, %c0_34] : memref<1x4x8x8xbf16, #tpu.memory_space<vmem>>, vector<1x1x8x8xbf16>
    %45 = vector.shape_cast %44 : vector<1x1x8x8xbf16> to vector<8x8xbf16>
    %46 = vector.shape_cast %43 : vector<8x8xbf16> to vector<1x1x8x8xbf16>
    tpu.vector_store %arg6[%c0_31, %c3_32, %c0_33, %c0_34], %46 {strides = array<i32>} : memref<1x4x8x8xbf16, #tpu.memory_space<vmem>>, vector<1x1x8x8xbf16>,
    %47 = vector.extract_strided_slice %6 {offsets = [0, 64], sizes = [8, 8], strides = [1, 1]} : vector<8x96xf32> to vector<8x8xf32>
    %48 = arith.truncf %47 : vector<8x8xf32> to vector<8x8xbf16>
    %c0_35 = arith.constant 0 : index
    %c0_36 = arith.constant 0 : index
    %c0_37 = arith.constant 0 : index
    %c0_38 = arith.constant 0 : index
    %49 = vector.load %arg7[%c0_35, %c0_36, %c0_37, %c0_38] : memref<1x4x8x8xbf16, #tpu.memory_space<vmem>>, vector<1x1x8x8xbf16>
    %50 = vector.shape_cast %49 : vector<1x1x8x8xbf16> to vector<8x8xbf16>
    %51 = vector.shape_cast %48 : vector<8x8xbf16> to vector<1x1x8x8xbf16>
    tpu.vector_store %arg7[%c0_35, %c0_36, %c0_37, %c0_38], %51 {strides = array<i32>} : memref<1x4x8x8xbf16, #tpu.memory_space<vmem>>, vector<1x1x8x8xbf16>,
    %52 = vector.extract_strided_slice %6 {offsets = [0, 72], sizes = [8, 8], strides = [1, 1]} : vector<8x96xf32> to vector<8x8xf32>
    %53 = arith.truncf %52 : vector<8x8xf32> to vector<8x8xbf16>
    %c0_39 = arith.constant 0 : index
    %c1_40 = arith.constant 1 : index
    %c0_41 = arith.constant 0 : index
    %c0_42 = arith.constant 0 : index
    %54 = vector.load %arg7[%c0_39, %c1_40, %c0_41, %c0_42] : memref<1x4x8x8xbf16, #tpu.memory_space<vmem>>, vector<1x1x8x8xbf16>
    %55 = vector.shape_cast %54 : vector<1x1x8x8xbf16> to vector<8x8xbf16>
    %56 = vector.shape_cast %53 : vector<8x8xbf16> to vector<1x1x8x8xbf16>
    tpu.vector_store %arg7[%c0_39, %c1_40, %c0_41, %c0_42], %56 {strides = array<i32>} : memref<1x4x8x8xbf16, #tpu.memory_space<vmem>>, vector<1x1x8x8xbf16>,
    %57 = vector.extract_strided_slice %6 {offsets = [0, 80], sizes = [8, 8], strides = [1, 1]} : vector<8x96xf32> to vector<8x8xf32>
    %58 = arith.truncf %57 : vector<8x8xf32> to vector<8x8xbf16>
    %c0_43 = arith.constant 0 : index
    %c2_44 = arith.constant 2 : index
    %c0_45 = arith.constant 0 : index
    %c0_46 = arith.constant 0 : index
    %59 = vector.load %arg7[%c0_43, %c2_44, %c0_45, %c0_46] : memref<1x4x8x8xbf16, #tpu.memory_space<vmem>>, vector<1x1x8x8xbf16>
    %60 = vector.shape_cast %59 : vector<1x1x8x8xbf16> to vector<8x8xbf16>
    %61 = vector.shape_cast %58 : vector<8x8xbf16> to vector<1x1x8x8xbf16>
    tpu.vector_store %arg7[%c0_43, %c2_44, %c0_45, %c0_46], %61 {strides = array<i32>} : memref<1x4x8x8xbf16, #tpu.memory_space<vmem>>, vector<1x1x8x8xbf16>,
    %62 = vector.extract_strided_slice %6 {offsets = [0, 88], sizes = [8, 8], strides = [1, 1]} : vector<8x96xf32> to vector<8x8xf32>
    %63 = arith.truncf %62 : vector<8x8xf32> to vector<8x8xbf16>
    %c0_47 = arith.constant 0 : index
    %c3_48 = arith.constant 3 : index
    %c0_49 = arith.constant 0 : index
    %c0_50 = arith.constant 0 : index
    %64 = vector.load %arg7[%c0_47, %c3_48, %c0_49, %c0_50] : memref<1x4x8x8xbf16, #tpu.memory_space<vmem>>, vector<1x1x8x8xbf16>
    %65 = vector.shape_cast %64 : vector<1x1x8x8xbf16> to vector<8x8xbf16>
    %66 = vector.shape_cast %63 : vector<8x8xbf16> to vector<1x1x8x8xbf16>
    tpu.vector_store %arg7[%c0_47, %c3_48, %c0_49, %c0_50], %66 {strides = array<i32>} : memref<1x4x8x8xbf16, #tpu.memory_space<vmem>>, vector<1x1x8x8xbf16>,
    return
  }
  func.func @transform_0(%arg0: i32, %arg1: i32) -> (i32, i32, i32) {
    %c0_i32 = arith.constant 0 : i32
    %c0_i32_0 = arith.constant 0 : i32
    return %arg0, %arg1, %c0_i32 : i32, i32, i32
  }
  func.func @transform_1(%arg0: i32, %arg1: i32) -> (i32, i32) {
    %c0_i32 = arith.constant 0 : i32
    %c0_i32_0 = arith.constant 0 : i32
    %c0_i32_1 = arith.constant 0 : i32
    return %c0_i32, %c0_i32_0 : i32, i32
  }
  func.func @transform_2(%arg0: i32, %arg1: i32) -> (i32, i32) {
    %c0_i32 = arith.constant 0 : i32
    %c0_i32_0 = arith.constant 0 : i32
    %c0_i32_1 = arith.constant 0 : i32
    return %c0_i32, %c0_i32_0 : i32, i32
  }
  func.func @transform_3(%arg0: i32, %arg1: i32) -> (i32, i32, i32, i32) {
    %c0_i32 = arith.constant 0 : i32
    %c0_i32_0 = arith.constant 0 : i32
    %c0_i32_1 = arith.constant 0 : i32
    return %arg0, %c0_i32, %arg1, %c0_i32_0 : i32, i32, i32, i32
  }
  func.func @transform_4(%arg0: i32, %arg1: i32) -> (i32, i32, i32, i32) {
    %c0_i32 = arith.constant 0 : i32
    %c0_i32_0 = arith.constant 0 : i32
    %c0_i32_1 = arith.constant 0 : i32
    return %arg0, %c0_i32, %arg1, %c0_i32_0 : i32, i32, i32, i32
  }
  func.func @transform_5(%arg0: i32, %arg1: i32) -> (i32, i32, i32, i32) {
    %c0_i32 = arith.constant 0 : i32
    %c0_i32_0 = arith.constant 0 : i32
    %c0_i32_1 = arith.constant 0 : i32
    return %arg0, %c0_i32, %arg1, %c0_i32_0 : i32, i32, i32, i32
  }
}

module attributes {stable_mosaic.version = 11 : i64} {
  func.func @_ffn_add_ln_kernel(%arg0: i32, %arg1: memref<16x32xbf16, #tpu.memory_space<vmem>>, %arg2: memref<32x64xbf16, #tpu.memory_space<vmem>>, %arg3: memref<1x64xf32, #tpu.memory_space<vmem>>, %arg4: memref<64x32xbf16, #tpu.memory_space<vmem>>, %arg5: memref<1x32xf32, #tpu.memory_space<vmem>>, %arg6: memref<1x32xf32, #tpu.memory_space<vmem>>, %arg7: memref<1x32xf32, #tpu.memory_space<vmem>>, %arg8: memref<16x32xbf16, #tpu.memory_space<vmem>>) attributes {dimension_semantics = [#tpu.dimension_semantics<parallel>], iteration_bounds = array<i64: 1>, scalar_prefetch = 0 : i64, scratch_operands = 0 : i64, tpu.core_type = #tpu.core_type<tc>, window_params = [{transform_indices = @transform_0, window_bounds = array<i64: 16, 32>}, {pipeline_mode = #tpu.pipeline_mode<synchronous>, transform_indices = @transform_1, window_bounds = array<i64: 32, 64>}, {pipeline_mode = #tpu.pipeline_mode<synchronous>, transform_indices = @transform_2, window_bounds = array<i64: 1, 64>}, {pipeline_mode = #tpu.pipeline_mode<synchronous>, transform_indices = @transform_3, window_bounds = array<i64: 64, 32>}, {pipeline_mode = #tpu.pipeline_mode<synchronous>, transform_indices = @transform_4, window_bounds = array<i64: 1, 32>}, {pipeline_mode = #tpu.pipeline_mode<synchronous>, transform_indices = @transform_5, window_bounds = array<i64: 1, 32>}, {pipeline_mode = #tpu.pipeline_mode<synchronous>, transform_indices = @transform_6, window_bounds = array<i64: 1, 32>}, {transform_indices = @transform_7, window_bounds = array<i64: 16, 32>}]} {
    %c0 = arith.constant 0 : index
    %c0_0 = arith.constant 0 : index
    %0 = vector.load %arg1[%c0, %c0_0] : memref<16x32xbf16, #tpu.memory_space<vmem>>, vector<16x32xbf16>
    %c0_1 = arith.constant 0 : index
    %c0_2 = arith.constant 0 : index
    %1 = vector.load %arg2[%c0_1, %c0_2] : memref<32x64xbf16, #tpu.memory_space<vmem>>, vector<32x64xbf16>
    %cst = arith.constant dense<0.000000e+00> : vector<16x64xf32>
    %2 = tpu.matmul %0, %1, %cst {dimension_numbers = #tpu.dot_dimension_numbers<[1], [0], [0], [1], [0, 0, 1, 1], [], []>} : vector<16x32xbf16>, vector<32x64xbf16>, vector<16x64xf32> -> vector<16x64xf32>
    %c0_3 = arith.constant 0 : index
    %c0_4 = arith.constant 0 : index
    %3 = vector.load %arg3[%c0_3, %c0_4] : memref<1x64xf32, #tpu.memory_space<vmem>>, vector<1x64xf32>
    %4 = vector.broadcast %3 : vector<1x64xf32> to vector<16x64xf32>
    %5 = arith.addf %2, %4 : vector<16x64xf32>
    %cst_5 = arith.constant 0.000000e+00 : f32
    %6 = vector.broadcast %cst_5 : f32 to vector<16x64xf32>
    %7 = arith.maximumf %5, %6 : vector<16x64xf32>
    %8 = arith.truncf %7 : vector<16x64xf32> to vector<16x64xbf16>
    %c0_6 = arith.constant 0 : index
    %c0_7 = arith.constant 0 : index
    %9 = vector.load %arg4[%c0_6, %c0_7] : memref<64x32xbf16, #tpu.memory_space<vmem>>, vector<64x32xbf16>
    %cst_8 = arith.constant dense<0.000000e+00> : vector<16x32xf32>
    %10 = tpu.matmul %8, %9, %cst_8 {dimension_numbers = #tpu.dot_dimension_numbers<[1], [0], [0], [1], [0, 0, 1, 1], [], []>} : vector<16x64xbf16>, vector<64x32xbf16>, vector<16x32xf32> -> vector<16x32xf32>
    %c0_9 = arith.constant 0 : index
    %c0_10 = arith.constant 0 : index
    %11 = vector.load %arg5[%c0_9, %c0_10] : memref<1x32xf32, #tpu.memory_space<vmem>>, vector<1x32xf32>
    %12 = vector.broadcast %11 : vector<1x32xf32> to vector<16x32xf32>
    %13 = arith.addf %10, %12 : vector<16x32xf32>
    %14 = arith.extf %0 : vector<16x32xbf16> to vector<16x32xf32>
    %15 = arith.addf %13, %14 : vector<16x32xf32>
    %c0_11 = arith.constant 0 : index
    %c0_12 = arith.constant 0 : index
    %16 = vector.load %arg6[%c0_11, %c0_12] : memref<1x32xf32, #tpu.memory_space<vmem>>, vector<1x32xf32>
    %c0_13 = arith.constant 0 : index
    %c0_14 = arith.constant 0 : index
    %17 = vector.load %arg7[%c0_13, %c0_14] : memref<1x32xf32, #tpu.memory_space<vmem>>, vector<1x32xf32>
    %cst_15 = arith.constant dense<0.000000e+00> : vector<16xf32>
    %18 = vector.multi_reduction <add>, %15, %cst_15 [1] : vector<16x32xf32> to vector<16xf32>
    %19 = vector.shape_cast %18 : vector<16xf32> to vector<16x1xf32>
    %cst_16 = arith.constant 3.200000e+01 : f32
    %20 = vector.broadcast %cst_16 : f32 to vector<16x1xf32>
    %21 = arith.divf %19, %20 : vector<16x1xf32>
    %22 = vector.broadcast %21 : vector<16x1xf32> to vector<16x32xf32>
    %23 = arith.subf %15, %22 : vector<16x32xf32>
    %24 = arith.mulf %23, %23 : vector<16x32xf32>
    %cst_17 = arith.constant dense<0.000000e+00> : vector<16xf32>
    %25 = vector.multi_reduction <add>, %24, %cst_17 [1] : vector<16x32xf32> to vector<16xf32>
    %26 = vector.shape_cast %25 : vector<16xf32> to vector<16x1xf32>
    %cst_18 = arith.constant 3.200000e+01 : f32
    %27 = vector.broadcast %cst_18 : f32 to vector<16x1xf32>
    %28 = arith.divf %26, %27 : vector<16x1xf32>
    %29 = vector.broadcast %21 : vector<16x1xf32> to vector<16x32xf32>
    %30 = arith.subf %15, %29 : vector<16x32xf32>
    %cst_19 = arith.constant 9.99999997E-7 : f32
    %31 = vector.broadcast %cst_19 : f32 to vector<16x1xf32>
    %32 = arith.addf %28, %31 : vector<16x1xf32>
    %33 = math.rsqrt %32 : vector<16x1xf32>
    %34 = vector.broadcast %33 : vector<16x1xf32> to vector<16x32xf32>
    %35 = arith.mulf %30, %34 : vector<16x32xf32>
    %36 = vector.broadcast %16 : vector<1x32xf32> to vector<16x32xf32>
    %37 = arith.mulf %35, %36 : vector<16x32xf32>
    %38 = vector.broadcast %17 : vector<1x32xf32> to vector<16x32xf32>
    %39 = arith.addf %37, %38 : vector<16x32xf32>
    %40 = arith.truncf %39 : vector<16x32xf32> to vector<16x32xbf16>
    %c0_20 = arith.constant 0 : index
    %c0_21 = arith.constant 0 : index
    %41 = vector.load %arg8[%c0_20, %c0_21] : memref<16x32xbf16, #tpu.memory_space<vmem>>, vector<16x32xbf16>
    tpu.vector_store %arg8[%c0_20, %c0_21], %40 {strides = array<i32>} : memref<16x32xbf16, #tpu.memory_space<vmem>>, vector<16x32xbf16>,
    return
  }
  func.func @transform_0(%arg0: i32) -> (i32, i32) {
    %c0_i32 = arith.constant 0 : i32
    %c0_i32_0 = arith.constant 0 : i32
    return %arg0, %c0_i32 : i32, i32
  }
  func.func @transform_1(%arg0: i32) -> (i32, i32) {
    %c0_i32 = arith.constant 0 : i32
    %c0_i32_0 = arith.constant 0 : i32
    %c0_i32_1 = arith.constant 0 : i32
    return %c0_i32, %c0_i32_0 : i32, i32
  }
  func.func @transform_2(%arg0: i32) -> (i32, i32) {
    %c0_i32 = arith.constant 0 : i32
    %c0_i32_0 = arith.constant 0 : i32
    %c0_i32_1 = arith.constant 0 : i32
    return %c0_i32, %c0_i32_0 : i32, i32
  }
  func.func @transform_3(%arg0: i32) -> (i32, i32) {
    %c0_i32 = arith.constant 0 : i32
    %c0_i32_0 = arith.constant 0 : i32
    %c0_i32_1 = arith.constant 0 : i32
    return %c0_i32, %c0_i32_0 : i32, i32
  }
  func.func @transform_4(%arg0: i32) -> (i32, i32) {
    %c0_i32 = arith.constant 0 : i32
    %c0_i32_0 = arith.constant 0 : i32
    %c0_i32_1 = arith.constant 0 : i32
    return %c0_i32, %c0_i32_0 : i32, i32
  }
  func.func @transform_5(%arg0: i32) -> (i32, i32) {
    %c0_i32 = arith.constant 0 : i32
    %c0_i32_0 = arith.constant 0 : i32
    %c0_i32_1 = arith.constant 0 : i32
    return %c0_i32, %c0_i32_0 : i32, i32
  }
  func.func @transform_6(%arg0: i32) -> (i32, i32) {
    %c0_i32 = arith.constant 0 : i32
    %c0_i32_0 = arith.constant 0 : i32
    %c0_i32_1 = arith.constant 0 : i32
    return %c0_i32, %c0_i32_0 : i32, i32
  }
  func.func @transform_7(%arg0: i32) -> (i32, i32) {
    %c0_i32 = arith.constant 0 : i32
    %c0_i32_0 = arith.constant 0 : i32
    return %arg0, %c0_i32 : i32, i32
  }
}

module attributes {stable_mosaic.version = 11 : i64} {
  func.func @_gen_logits_kernel(%arg0: i32, %arg1: i32, %arg2: memref<16x32xbf16, #tpu.memory_space<vmem>>, %arg3: memref<32x48xbf16, #tpu.memory_space<vmem>>, %arg4: memref<1x48xf32, #tpu.memory_space<vmem>>, %arg5: memref<16x48xf32, #tpu.memory_space<vmem>>, %arg6: memref<16x1xf32, #tpu.memory_space<vmem>>, %arg7: memref<16x1xf32, #tpu.memory_space<vmem>>, %arg8: memref<16x1xf32, #tpu.memory_space<vmem>>) attributes {dimension_semantics = [#tpu.dimension_semantics<parallel>, #tpu.dimension_semantics<arbitrary>], iteration_bounds = array<i64: 1, 1>, scalar_prefetch = 0 : i64, scratch_operands = 2 : i64, tpu.core_type = #tpu.core_type<tc>, window_params = [{transform_indices = @transform_0, window_bounds = array<i64: 16, 32>}, {transform_indices = @transform_1, window_bounds = array<i64: 32, 48>}, {transform_indices = @transform_2, window_bounds = array<i64: 1, 48>}, {transform_indices = @transform_3, window_bounds = array<i64: 16, 48>}, {transform_indices = @transform_4, window_bounds = array<i64: 16, 1>}]} {
    %c0_i32 = arith.constant 0 : i32
    %0 = arith.cmpi eq, %arg1, %c0_i32 : i32
    %1 = arith.extui %0 : i1 to i32
    %c0_i32_0 = arith.constant 0 : i32
    %2 = arith.cmpi ne, %1, %c0_i32_0 : i32
    scf.if %2 {
      %cst_20 = arith.constant 0xFF800000 : f32
      %29 = vector.broadcast %cst_20 : f32 to vector<16x1xf32>
      %c0_21 = arith.constant 0 : index
      %c0_22 = arith.constant 0 : index
      %30 = vector.load %arg7[%c0_21, %c0_22] : memref<16x1xf32, #tpu.memory_space<vmem>>, vector<16x1xf32>
      tpu.vector_store %arg7[%c0_21, %c0_22], %29 {strides = array<i32>} : memref<16x1xf32, #tpu.memory_space<vmem>>, vector<16x1xf32>,
      %cst_23 = arith.constant 0.000000e+00 : f32
      %31 = vector.broadcast %cst_23 : f32 to vector<16x1xf32>
      %c0_24 = arith.constant 0 : index
      %c0_25 = arith.constant 0 : index
      %32 = vector.load %arg8[%c0_24, %c0_25] : memref<16x1xf32, #tpu.memory_space<vmem>>, vector<16x1xf32>
      tpu.vector_store %arg8[%c0_24, %c0_25], %31 {strides = array<i32>} : memref<16x1xf32, #tpu.memory_space<vmem>>, vector<16x1xf32>,
    } else {
    }
    %c0 = arith.constant 0 : index
    %c0_1 = arith.constant 0 : index
    %3 = vector.load %arg2[%c0, %c0_1] : memref<16x32xbf16, #tpu.memory_space<vmem>>, vector<16x32xbf16>
    %c0_2 = arith.constant 0 : index
    %c0_3 = arith.constant 0 : index
    %4 = vector.load %arg3[%c0_2, %c0_3] : memref<32x48xbf16, #tpu.memory_space<vmem>>, vector<32x48xbf16>
    %cst = arith.constant dense<0.000000e+00> : vector<16x48xf32>
    %5 = tpu.matmul %3, %4, %cst {dimension_numbers = #tpu.dot_dimension_numbers<[1], [0], [0], [1], [0, 0, 1, 1], [], []>} : vector<16x32xbf16>, vector<32x48xbf16>, vector<16x48xf32> -> vector<16x48xf32>
    %c0_4 = arith.constant 0 : index
    %c0_5 = arith.constant 0 : index
    %6 = vector.load %arg4[%c0_4, %c0_5] : memref<1x48xf32, #tpu.memory_space<vmem>>, vector<1x48xf32>
    %7 = vector.broadcast %6 : vector<1x48xf32> to vector<16x48xf32>
    %8 = arith.addf %5, %7 : vector<16x48xf32>
    %c0_6 = arith.constant 0 : index
    %c0_7 = arith.constant 0 : index
    %9 = vector.load %arg5[%c0_6, %c0_7] : memref<16x48xf32, #tpu.memory_space<vmem>>, vector<16x48xf32>
    tpu.vector_store %arg5[%c0_6, %c0_7], %8 {strides = array<i32>} : memref<16x48xf32, #tpu.memory_space<vmem>>, vector<16x48xf32>,
    %c0_8 = arith.constant 0 : index
    %c0_9 = arith.constant 0 : index
    %10 = vector.load %arg7[%c0_8, %c0_9] : memref<16x1xf32, #tpu.memory_space<vmem>>, vector<16x1xf32>
    %cst_10 = arith.constant dense<0xFF800000> : vector<16xf32>
    %11 = vector.multi_reduction <maximumf>, %8, %cst_10 [1] : vector<16x48xf32> to vector<16xf32>
    %12 = vector.shape_cast %11 : vector<16xf32> to vector<16x1xf32>
    %13 = arith.maximumf %10, %12 : vector<16x1xf32>
    %c0_11 = arith.constant 0 : index
    %c0_12 = arith.constant 0 : index
    %14 = vector.load %arg8[%c0_11, %c0_12] : memref<16x1xf32, #tpu.memory_space<vmem>>, vector<16x1xf32>
    %15 = arith.subf %10, %13 : vector<16x1xf32>
    %16 = math.exp %15 : vector<16x1xf32>
    %17 = arith.mulf %14, %16 : vector<16x1xf32>
    %18 = vector.broadcast %13 : vector<16x1xf32> to vector<16x48xf32>
    %19 = arith.subf %8, %18 : vector<16x48xf32>
    %20 = math.exp %19 : vector<16x48xf32>
    %cst_13 = arith.constant dense<0.000000e+00> : vector<16xf32>
    %21 = vector.multi_reduction <add>, %20, %cst_13 [1] : vector<16x48xf32> to vector<16xf32>
    %22 = vector.shape_cast %21 : vector<16xf32> to vector<16x1xf32>
    %23 = arith.addf %17, %22 : vector<16x1xf32>
    %c0_14 = arith.constant 0 : index
    %c0_15 = arith.constant 0 : index
    %24 = vector.load %arg8[%c0_14, %c0_15] : memref<16x1xf32, #tpu.memory_space<vmem>>, vector<16x1xf32>
    tpu.vector_store %arg8[%c0_14, %c0_15], %23 {strides = array<i32>} : memref<16x1xf32, #tpu.memory_space<vmem>>, vector<16x1xf32>,
    %c0_16 = arith.constant 0 : index
    %c0_17 = arith.constant 0 : index
    %25 = vector.load %arg7[%c0_16, %c0_17] : memref<16x1xf32, #tpu.memory_space<vmem>>, vector<16x1xf32>
    tpu.vector_store %arg7[%c0_16, %c0_17], %13 {strides = array<i32>} : memref<16x1xf32, #tpu.memory_space<vmem>>, vector<16x1xf32>,
    %c0_i32_18 = arith.constant 0 : i32
    %26 = arith.cmpi eq, %arg1, %c0_i32_18 : i32
    %27 = arith.extui %26 : i1 to i32
    %c0_i32_19 = arith.constant 0 : i32
    %28 = arith.cmpi ne, %27, %c0_i32_19 : i32
    scf.if %28 {
      %c0_20 = arith.constant 0 : index
      %c0_21 = arith.constant 0 : index
      %29 = vector.load %arg7[%c0_20, %c0_21] : memref<16x1xf32, #tpu.memory_space<vmem>>, vector<16x1xf32>
      %c0_22 = arith.constant 0 : index
      %c0_23 = arith.constant 0 : index
      %30 = vector.load %arg8[%c0_22, %c0_23] : memref<16x1xf32, #tpu.memory_space<vmem>>, vector<16x1xf32>
      %31 = math.log %30 : vector<16x1xf32>
      %32 = arith.addf %29, %31 : vector<16x1xf32>
      %c0_24 = arith.constant 0 : index
      %c0_25 = arith.constant 0 : index
      %33 = vector.load %arg6[%c0_24, %c0_25] : memref<16x1xf32, #tpu.memory_space<vmem>>, vector<16x1xf32>
      tpu.vector_store %arg6[%c0_24, %c0_25], %32 {strides = array<i32>} : memref<16x1xf32, #tpu.memory_space<vmem>>, vector<16x1xf32>,
    } else {
    }
    return
  }
  func.func @transform_0(%arg0: i32, %arg1: i32) -> (i32, i32) {
    %c0_i32 = arith.constant 0 : i32
    %c0_i32_0 = arith.constant 0 : i32
    return %arg0, %c0_i32 : i32, i32
  }
  func.func @transform_1(%arg0: i32, %arg1: i32) -> (i32, i32) {
    %c0_i32 = arith.constant 0 : i32
    %c0_i32_0 = arith.constant 0 : i32
    return %c0_i32, %arg1 : i32, i32
  }
  func.func @transform_2(%arg0: i32, %arg1: i32) -> (i32, i32) {
    %c0_i32 = arith.constant 0 : i32
    %c0_i32_0 = arith.constant 0 : i32
    return %c0_i32, %arg1 : i32, i32
  }
  func.func @transform_3(%arg0: i32, %arg1: i32) -> (i32, i32) {
    %c0_i32 = arith.constant 0 : i32
    return %arg0, %arg1 : i32, i32
  }
  func.func @transform_4(%arg0: i32, %arg1: i32) -> (i32, i32) {
    %c0_i32 = arith.constant 0 : i32
    %c0_i32_0 = arith.constant 0 : i32
    return %arg0, %c0_i32 : i32, i32
  }
}

module attributes {stable_mosaic.version = 11 : i64} {
  func.func @_head_proj_kernel(%arg0: i32, %arg1: i32, %arg2: memref<1x8x32xbf16, #tpu.memory_space<vmem>>, %arg3: memref<32x64xbf16, #tpu.memory_space<vmem>>, %arg4: memref<1x64xf32, #tpu.memory_space<vmem>>, %arg5: memref<1x4x8x8xbf16, #tpu.memory_space<vmem>>, %arg6: memref<1x4x8x8xbf16, #tpu.memory_space<vmem>>) attributes {dimension_semantics = [#tpu.dimension_semantics<parallel>, #tpu.dimension_semantics<parallel>], iteration_bounds = array<i64: 2, 1>, scalar_prefetch = 0 : i64, scratch_operands = 0 : i64, tpu.core_type = #tpu.core_type<tc>, window_params = [{transform_indices = @transform_0, window_bounds = array<i64: 1, 8, 32>}, {pipeline_mode = #tpu.pipeline_mode<synchronous>, transform_indices = @transform_1, window_bounds = array<i64: 32, 64>}, {pipeline_mode = #tpu.pipeline_mode<synchronous>, transform_indices = @transform_2, window_bounds = array<i64: 1, 64>}, {transform_indices = @transform_3, window_bounds = array<i64: 1, 4, 8, 8>}, {transform_indices = @transform_4, window_bounds = array<i64: 1, 4, 8, 8>}]} {
    %c0 = arith.constant 0 : index
    %c0_0 = arith.constant 0 : index
    %c0_1 = arith.constant 0 : index
    %0 = vector.load %arg2[%c0, %c0_0, %c0_1] : memref<1x8x32xbf16, #tpu.memory_space<vmem>>, vector<1x8x32xbf16>
    %1 = vector.shape_cast %0 : vector<1x8x32xbf16> to vector<8x32xbf16>
    %c0_2 = arith.constant 0 : index
    %c0_3 = arith.constant 0 : index
    %2 = vector.load %arg3[%c0_2, %c0_3] : memref<32x64xbf16, #tpu.memory_space<vmem>>, vector<32x64xbf16>
    %cst = arith.constant dense<0.000000e+00> : vector<8x64xf32>
    %3 = tpu.matmul %1, %2, %cst {dimension_numbers = #tpu.dot_dimension_numbers<[1], [0], [0], [1], [0, 0, 1, 1], [], []>} : vector<8x32xbf16>, vector<32x64xbf16>, vector<8x64xf32> -> vector<8x64xf32>
    %c0_4 = arith.constant 0 : index
    %c0_5 = arith.constant 0 : index
    %4 = vector.load %arg4[%c0_4, %c0_5] : memref<1x64xf32, #tpu.memory_space<vmem>>, vector<1x64xf32>
    %5 = vector.broadcast %4 : vector<1x64xf32> to vector<8x64xf32>
    %6 = arith.addf %3, %5 : vector<8x64xf32>
    %7 = vector.extract_strided_slice %6 {offsets = [0, 0], sizes = [8, 8], strides = [1, 1]} : vector<8x64xf32> to vector<8x8xf32>
    %8 = arith.truncf %7 : vector<8x8xf32> to vector<8x8xbf16>
    %c0_6 = arith.constant 0 : index
    %c0_7 = arith.constant 0 : index
    %c0_8 = arith.constant 0 : index
    %c0_9 = arith.constant 0 : index
    %9 = vector.load %arg5[%c0_6, %c0_7, %c0_8, %c0_9] : memref<1x4x8x8xbf16, #tpu.memory_space<vmem>>, vector<1x1x8x8xbf16>
    %10 = vector.shape_cast %9 : vector<1x1x8x8xbf16> to vector<8x8xbf16>
    %11 = vector.shape_cast %8 : vector<8x8xbf16> to vector<1x1x8x8xbf16>
    tpu.vector_store %arg5[%c0_6, %c0_7, %c0_8, %c0_9], %11 {strides = array<i32>} : memref<1x4x8x8xbf16, #tpu.memory_space<vmem>>, vector<1x1x8x8xbf16>,
    %12 = vector.extract_strided_slice %6 {offsets = [0, 8], sizes = [8, 8], strides = [1, 1]} : vector<8x64xf32> to vector<8x8xf32>
    %13 = arith.truncf %12 : vector<8x8xf32> to vector<8x8xbf16>
    %c0_10 = arith.constant 0 : index
    %c1 = arith.constant 1 : index
    %c0_11 = arith.constant 0 : index
    %c0_12 = arith.constant 0 : index
    %14 = vector.load %arg5[%c0_10, %c1, %c0_11, %c0_12] : memref<1x4x8x8xbf16, #tpu.memory_space<vmem>>, vector<1x1x8x8xbf16>
    %15 = vector.shape_cast %14 : vector<1x1x8x8xbf16> to vector<8x8xbf16>
    %16 = vector.shape_cast %13 : vector<8x8xbf16> to vector<1x1x8x8xbf16>
    tpu.vector_store %arg5[%c0_10, %c1, %c0_11, %c0_12], %16 {strides = array<i32>} : memref<1x4x8x8xbf16, #tpu.memory_space<vmem>>, vector<1x1x8x8xbf16>,
    %17 = vector.extract_strided_slice %6 {offsets = [0, 16], sizes = [8, 8], strides = [1, 1]} : vector<8x64xf32> to vector<8x8xf32>
    %18 = arith.truncf %17 : vector<8x8xf32> to vector<8x8xbf16>
    %c0_13 = arith.constant 0 : index
    %c2 = arith.constant 2 : index
    %c0_14 = arith.constant 0 : index
    %c0_15 = arith.constant 0 : index
    %19 = vector.load %arg5[%c0_13, %c2, %c0_14, %c0_15] : memref<1x4x8x8xbf16, #tpu.memory_space<vmem>>, vector<1x1x8x8xbf16>
    %20 = vector.shape_cast %19 : vector<1x1x8x8xbf16> to vector<8x8xbf16>
    %21 = vector.shape_cast %18 : vector<8x8xbf16> to vector<1x1x8x8xbf16>
    tpu.vector_store %arg5[%c0_13, %c2, %c0_14, %c0_15], %21 {strides = array<i32>} : memref<1x4x8x8xbf16, #tpu.memory_space<vmem>>, vector<1x1x8x8xbf16>,
    %22 = vector.extract_strided_slice %6 {offsets = [0, 24], sizes = [8, 8], strides = [1, 1]} : vector<8x64xf32> to vector<8x8xf32>
    %23 = arith.truncf %22 : vector<8x8xf32> to vector<8x8xbf16>
    %c0_16 = arith.constant 0 : index
    %c3 = arith.constant 3 : index
    %c0_17 = arith.constant 0 : index
    %c0_18 = arith.constant 0 : index
    %24 = vector.load %arg5[%c0_16, %c3, %c0_17, %c0_18] : memref<1x4x8x8xbf16, #tpu.memory_space<vmem>>, vector<1x1x8x8xbf16>
    %25 = vector.shape_cast %24 : vector<1x1x8x8xbf16> to vector<8x8xbf16>
    %26 = vector.shape_cast %23 : vector<8x8xbf16> to vector<1x1x8x8xbf16>
    tpu.vector_store %arg5[%c0_16, %c3, %c0_17, %c0_18], %26 {strides = array<i32>} : memref<1x4x8x8xbf16, #tpu.memory_space<vmem>>, vector<1x1x8x8xbf16>,
    %27 = vector.extract_strided_slice %6 {offsets = [0, 32], sizes = [8, 8], strides = [1, 1]} : vector<8x64xf32> to vector<8x8xf32>
    %28 = arith.truncf %27 : vector<8x8xf32> to vector<8x8xbf16>
    %c0_19 = arith.constant 0 : index
    %c0_20 = arith.constant 0 : index
    %c0_21 = arith.constant 0 : index
    %c0_22 = arith.constant 0 : index
    %29 = vector.load %arg6[%c0_19, %c0_20, %c0_21, %c0_22] : memref<1x4x8x8xbf16, #tpu.memory_space<vmem>>, vector<1x1x8x8xbf16>
    %30 = vector.shape_cast %29 : vector<1x1x8x8xbf16> to vector<8x8xbf16>
    %31 = vector.shape_cast %28 : vector<8x8xbf16> to vector<1x1x8x8xbf16>
    tpu.vector_store %arg6[%c0_19, %c0_20, %c0_21, %c0_22], %31 {strides = array<i32>} : memref<1x4x8x8xbf16, #tpu.memory_space<vmem>>, vector<1x1x8x8xbf16>,
    %32 = vector.extract_strided_slice %6 {offsets = [0, 40], sizes = [8, 8], strides = [1, 1]} : vector<8x64xf32> to vector<8x8xf32>
    %33 = arith.truncf %32 : vector<8x8xf32> to vector<8x8xbf16>
    %c0_23 = arith.constant 0 : index
    %c1_24 = arith.constant 1 : index
    %c0_25 = arith.constant 0 : index
    %c0_26 = arith.constant 0 : index
    %34 = vector.load %arg6[%c0_23, %c1_24, %c0_25, %c0_26] : memref<1x4x8x8xbf16, #tpu.memory_space<vmem>>, vector<1x1x8x8xbf16>
    %35 = vector.shape_cast %34 : vector<1x1x8x8xbf16> to vector<8x8xbf16>
    %36 = vector.shape_cast %33 : vector<8x8xbf16> to vector<1x1x8x8xbf16>
    tpu.vector_store %arg6[%c0_23, %c1_24, %c0_25, %c0_26], %36 {strides = array<i32>} : memref<1x4x8x8xbf16, #tpu.memory_space<vmem>>, vector<1x1x8x8xbf16>,
    %37 = vector.extract_strided_slice %6 {offsets = [0, 48], sizes = [8, 8], strides = [1, 1]} : vector<8x64xf32> to vector<8x8xf32>
    %38 = arith.truncf %37 : vector<8x8xf32> to vector<8x8xbf16>
    %c0_27 = arith.constant 0 : index
    %c2_28 = arith.constant 2 : index
    %c0_29 = arith.constant 0 : index
    %c0_30 = arith.constant 0 : index
    %39 = vector.load %arg6[%c0_27, %c2_28, %c0_29, %c0_30] : memref<1x4x8x8xbf16, #tpu.memory_space<vmem>>, vector<1x1x8x8xbf16>
    %40 = vector.shape_cast %39 : vector<1x1x8x8xbf16> to vector<8x8xbf16>
    %41 = vector.shape_cast %38 : vector<8x8xbf16> to vector<1x1x8x8xbf16>
    tpu.vector_store %arg6[%c0_27, %c2_28, %c0_29, %c0_30], %41 {strides = array<i32>} : memref<1x4x8x8xbf16, #tpu.memory_space<vmem>>, vector<1x1x8x8xbf16>,
    %42 = vector.extract_strided_slice %6 {offsets = [0, 56], sizes = [8, 8], strides = [1, 1]} : vector<8x64xf32> to vector<8x8xf32>
    %43 = arith.truncf %42 : vector<8x8xf32> to vector<8x8xbf16>
    %c0_31 = arith.constant 0 : index
    %c3_32 = arith.constant 3 : index
    %c0_33 = arith.constant 0 : index
    %c0_34 = arith.constant 0 : index
    %44 = vector.load %arg6[%c0_31, %c3_32, %c0_33, %c0_34] : memref<1x4x8x8xbf16, #tpu.memory_space<vmem>>, vector<1x1x8x8xbf16>
    %45 = vector.shape_cast %44 : vector<1x1x8x8xbf16> to vector<8x8xbf16>
    %46 = vector.shape_cast %43 : vector<8x8xbf16> to vector<1x1x8x8xbf16>
    tpu.vector_store %arg6[%c0_31, %c3_32, %c0_33, %c0_34], %46 {strides = array<i32>} : memref<1x4x8x8xbf16, #tpu.memory_space<vmem>>, vector<1x1x8x8xbf16>,
    return
  }
  func.func @transform_0(%arg0: i32, %arg1: i32) -> (i32, i32, i32) {
    %c0_i32 = arith.constant 0 : i32
    %c0_i32_0 = arith.constant 0 : i32
    return %arg0, %arg1, %c0_i32 : i32, i32, i32
  }
  func.func @transform_1(%arg0: i32, %arg1: i32) -> (i32, i32) {
    %c0_i32 = arith.constant 0 : i32
    %c0_i32_0 = arith.constant 0 : i32
    %c0_i32_1 = arith.constant 0 : i32
    return %c0_i32, %c0_i32_0 : i32, i32
  }
  func.func @transform_2(%arg0: i32, %arg1: i32) -> (i32, i32) {
    %c0_i32 = arith.constant 0 : i32
    %c0_i32_0 = arith.constant 0 : i32
    %c0_i32_1 = arith.constant 0 : i32
    return %c0_i32, %c0_i32_0 : i32, i32
  }
  func.func @transform_3(%arg0: i32, %arg1: i32) -> (i32, i32, i32, i32) {
    %c0_i32 = arith.constant 0 : i32
    %c0_i32_0 = arith.constant 0 : i32
    %c0_i32_1 = arith.constant 0 : i32
    return %arg0, %c0_i32, %arg1, %c0_i32_0 : i32, i32, i32, i32
  }
  func.func @transform_4(%arg0: i32, %arg1: i32) -> (i32, i32, i32, i32) {
    %c0_i32 = arith.constant 0 : i32
    %c0_i32_0 = arith.constant 0 : i32
    %c0_i32_1 = arith.constant 0 : i32
    return %arg0, %c0_i32, %arg1, %c0_i32_0 : i32, i32, i32, i32
  }
}

module attributes {stable_mosaic.version = 11 : i64} {
  func.func @_attn_kernel(%arg0: i32, %arg1: i32, %arg2: memref<1x1x8x8xbf16, #tpu.memory_space<vmem>>, %arg3: memref<1x1x8x8xbf16, #tpu.memory_space<vmem>>, %arg4: memref<1x1x8x8xbf16, #tpu.memory_space<vmem>>, %arg5: memref<1x1x8xf32, #tpu.memory_space<vmem>>, %arg6: memref<1x1x8x8xbf16, #tpu.memory_space<vmem>>) attributes {dimension_semantics = [#tpu.dimension_semantics<parallel>, #tpu.dimension_semantics<parallel>], iteration_bounds = array<i64: 2, 4>, scalar_prefetch = 0 : i64, scratch_operands = 0 : i64, tpu.core_type = #tpu.core_type<tc>, window_params = [{transform_indices = @transform_0, window_bounds = array<i64: 1, 1, 8, 8>}, {transform_indices = @transform_1, window_bounds = array<i64: 1, 1, 8, 8>}, {transform_indices = @transform_2, window_bounds = array<i64: 1, 1, 8, 8>}, {transform_indices = @transform_3, window_bounds = array<i64: 1, 1, 8>}, {transform_indices = @transform_4, window_bounds = array<i64: 1, 1, 8, 8>}]} {
    %c0 = arith.constant 0 : index
    %c0_0 = arith.constant 0 : index
    %c0_1 = arith.constant 0 : index
    %c0_2 = arith.constant 0 : index
    %0 = vector.load %arg2[%c0, %c0_0, %c0_1, %c0_2] : memref<1x1x8x8xbf16, #tpu.memory_space<vmem>>, vector<1x1x8x8xbf16>
    %1 = vector.shape_cast %0 : vector<1x1x8x8xbf16> to vector<8x8xbf16>
    %cst = arith.constant 3.535160e-01 : bf16
    %2 = vector.broadcast %cst : bf16 to vector<8x8xbf16>
    %3 = arith.mulf %1, %2 : vector<8x8xbf16>
    %c0_3 = arith.constant 0 : index
    %c0_4 = arith.constant 0 : index
    %c0_5 = arith.constant 0 : index
    %c0_6 = arith.constant 0 : index
    %4 = vector.load %arg3[%c0_3, %c0_4, %c0_5, %c0_6] : memref<1x1x8x8xbf16, #tpu.memory_space<vmem>>, vector<1x1x8x8xbf16>
    %5 = vector.shape_cast %4 : vector<1x1x8x8xbf16> to vector<8x8xbf16>
    %c0_7 = arith.constant 0 : index
    %c0_8 = arith.constant 0 : index
    %c0_9 = arith.constant 0 : index
    %c0_10 = arith.constant 0 : index
    %6 = vector.load %arg4[%c0_7, %c0_8, %c0_9, %c0_10] : memref<1x1x8x8xbf16, #tpu.memory_space<vmem>>, vector<1x1x8x8xbf16>
    %7 = vector.shape_cast %6 : vector<1x1x8x8xbf16> to vector<8x8xbf16>
    %cst_11 = arith.constant dense<0.000000e+00> : vector<8x8xf32>
    %8 = tpu.matmul %3, %5, %cst_11 {dimension_numbers = #tpu.dot_dimension_numbers<[1], [1], [0], [0], [0, 0, 1, 0], [], []>} : vector<8x8xbf16>, vector<8x8xbf16>, vector<8x8xf32> -> vector<8x8xf32>
    %c0_12 = arith.constant 0 : index
    %c0_13 = arith.constant 0 : index
    %c0_14 = arith.constant 0 : index
    %9 = vector.load %arg5[%c0_12, %c0_13, %c0_14] : memref<1x1x8xf32, #tpu.memory_space<vmem>>, vector<1x1x8xf32>
    %10 = vector.shape_cast %9 : vector<1x1x8xf32> to vector<1x8xf32>
    %11 = vector.broadcast %10 : vector<1x8xf32> to vector<8x8xf32>
    %12 = arith.addf %8, %11 : vector<8x8xf32>
    %cst_15 = arith.constant dense<0xFF800000> : vector<8xf32>
    %13 = vector.multi_reduction <maximumf>, %12, %cst_15 [1] : vector<8x8xf32> to vector<8xf32>
    %14 = vector.shape_cast %13 : vector<8xf32> to vector<8x1xf32>
    %15 = vector.broadcast %14 : vector<8x1xf32> to vector<8x8xf32>
    %16 = arith.subf %12, %15 : vector<8x8xf32>
    %17 = math.exp %16 : vector<8x8xf32>
    %18 = arith.truncf %17 : vector<8x8xf32> to vector<8x8xbf16>
    %cst_16 = arith.constant dense<0.000000e+00> : vector<8x8xf32>
    %19 = tpu.matmul %18, %7, %cst_16 {dimension_numbers = #tpu.dot_dimension_numbers<[1], [0], [0], [1], [0, 0, 1, 1], [], []>} : vector<8x8xbf16>, vector<8x8xbf16>, vector<8x8xf32> -> vector<8x8xf32>
    %cst_17 = arith.constant dense<0.000000e+00> : vector<8xf32>
    %20 = vector.multi_reduction <add>, %17, %cst_17 [1] : vector<8x8xf32> to vector<8xf32>
    %21 = vector.shape_cast %20 : vector<8xf32> to vector<8x1xf32>
    %22 = tpu.reciprocal %21 {approx = true} : vector<8x1xf32> -> vector<8x1xf32>
    %23 = vector.broadcast %22 : vector<8x1xf32> to vector<8x8xf32>
    %24 = arith.mulf %19, %23 : vector<8x8xf32>
    %25 = arith.truncf %24 : vector<8x8xf32> to vector<8x8xbf16>
    %c0_18 = arith.constant 0 : index
    %c0_19 = arith.constant 0 : index
    %c0_20 = arith.constant 0 : index
    %c0_21 = arith.constant 0 : index
    %26 = vector.load %arg6[%c0_18, %c0_19, %c0_20, %c0_21] : memref<1x1x8x8xbf16, #tpu.memory_space<vmem>>, vector<1x1x8x8xbf16>
    %27 = vector.shape_cast %26 : vector<1x1x8x8xbf16> to vector<8x8xbf16>
    %28 = vector.shape_cast %25 : vector<8x8xbf16> to vector<1x1x8x8xbf16>
    tpu.vector_store %arg6[%c0_18, %c0_19, %c0_20, %c0_21], %28 {strides = array<i32>} : memref<1x1x8x8xbf16, #tpu.memory_space<vmem>>, vector<1x1x8x8xbf16>,
    return
  }
  func.func @transform_0(%arg0: i32, %arg1: i32) -> (i32, i32, i32, i32) {
    %c0_i32 = arith.constant 0 : i32
    %c0_i32_0 = arith.constant 0 : i32
    %c0_i32_1 = arith.constant 0 : i32
    return %arg0, %arg1, %c0_i32, %c0_i32_0 : i32, i32, i32, i32
  }
  func.func @transform_1(%arg0: i32, %arg1: i32) -> (i32, i32, i32, i32) {
    %c0_i32 = arith.constant 0 : i32
    %c0_i32_0 = arith.constant 0 : i32
    %c0_i32_1 = arith.constant 0 : i32
    return %arg0, %arg1, %c0_i32, %c0_i32_0 : i32, i32, i32, i32
  }
  func.func @transform_2(%arg0: i32, %arg1: i32) -> (i32, i32, i32, i32) {
    %c0_i32 = arith.constant 0 : i32
    %c0_i32_0 = arith.constant 0 : i32
    %c0_i32_1 = arith.constant 0 : i32
    return %arg0, %arg1, %c0_i32, %c0_i32_0 : i32, i32, i32, i32
  }
  func.func @transform_3(%arg0: i32, %arg1: i32) -> (i32, i32, i32) {
    %c0_i32 = arith.constant 0 : i32
    %c0_i32_0 = arith.constant 0 : i32
    %c0_i32_1 = arith.constant 0 : i32
    return %arg0, %c0_i32, %c0_i32_0 : i32, i32, i32
  }
  func.func @transform_4(%arg0: i32, %arg1: i32) -> (i32, i32, i32, i32) {
    %c0_i32 = arith.constant 0 : i32
    %c0_i32_0 = arith.constant 0 : i32
    %c0_i32_1 = arith.constant 0 : i32
    return %arg0, %arg1, %c0_i32, %c0_i32_0 : i32, i32, i32, i32
  }
}

module attributes {stable_mosaic.version = 11 : i64} {
  func.func @_sub_lse_kernel(%arg0: i32, %arg1: i32, %arg2: memref<16x48xf32, #tpu.memory_space<vmem>>, %arg3: memref<16x1xf32, #tpu.memory_space<vmem>>, %arg4: memref<16x48xf32, #tpu.memory_space<vmem>>) attributes {dimension_semantics = [#tpu.dimension_semantics<parallel>, #tpu.dimension_semantics<parallel>], iteration_bounds = array<i64: 1, 1>, scalar_prefetch = 0 : i64, scratch_operands = 0 : i64, tpu.core_type = #tpu.core_type<tc>, window_params = [{transform_indices = @transform_0, window_bounds = array<i64: 16, 48>}, {transform_indices = @transform_1, window_bounds = array<i64: 16, 1>}, {transform_indices = @transform_2, window_bounds = array<i64: 16, 48>}]} {
    %c0 = arith.constant 0 : index
    %c0_0 = arith.constant 0 : index
    %0 = vector.load %arg2[%c0, %c0_0] : memref<16x48xf32, #tpu.memory_space<vmem>>, vector<16x48xf32>
    %c0_1 = arith.constant 0 : index
    %c0_2 = arith.constant 0 : index
    %1 = vector.load %arg3[%c0_1, %c0_2] : memref<16x1xf32, #tpu.memory_space<vmem>>, vector<16x1xf32>
    %2 = vector.broadcast %1 : vector<16x1xf32> to vector<16x48xf32>
    %3 = arith.subf %0, %2 : vector<16x48xf32>
    %c0_3 = arith.constant 0 : index
    %c0_4 = arith.constant 0 : index
    %4 = vector.load %arg4[%c0_3, %c0_4] : memref<16x48xf32, #tpu.memory_space<vmem>>, vector<16x48xf32>
    tpu.vector_store %arg4[%c0_3, %c0_4], %3 {strides = array<i32>} : memref<16x48xf32, #tpu.memory_space<vmem>>, vector<16x48xf32>,
    return
  }
  func.func @transform_0(%arg0: i32, %arg1: i32) -> (i32, i32) {
    %c0_i32 = arith.constant 0 : i32
    return %arg0, %arg1 : i32, i32
  }
  func.func @transform_1(%arg0: i32, %arg1: i32) -> (i32, i32) {
    %c0_i32 = arith.constant 0 : i32
    %c0_i32_0 = arith.constant 0 : i32
    return %arg0, %c0_i32 : i32, i32
  }
  func.func @transform_2(%arg0: i32, %arg1: i32) -> (i32, i32) {
    %c0_i32 = arith.constant 0 : i32
    return %arg0, %arg1 : i32, i32
  }
}

</mosaic_0001>

<llo_original>
// kernel: transformer_forward.36
$region0: #{transformer_forward.36}
  #allocation0 [shape = 'u32[]', space=smem, size = 0x4, offset = 0x4, fixed_abs, tag = 'smem constant byte address 0x4 - core index']
  #allocation1 [shape = 'u32[144,128]{1,0:T(1,128)}', space=vmem, size = 0x12000, scoped, tag = 'internal scratch']
  %s0 = inlined_call_operand.vmem [shape: bf16[2,4,8,8], index: 0, kind: input, shape index: {}]
  %s1 = inlined_call_operand.vmem [shape: bf16[2,8,32], index: 1, kind: input, shape index: {}]
  %s2 = inlined_call_operand.vmem [shape: bf16[32,32], index: 2, kind: input, shape index: {}]
  %s3 = inlined_call_operand.vmem [shape: f32[1,32], index: 3, kind: input, shape index: {}]
  %s4 = inlined_call_operand.vmem [shape: f32[1,32], index: 4, kind: input, shape index: {}]
  %s5 = inlined_call_operand.vmem [shape: f32[1,32], index: 5, kind: input, shape index: {}]
  %s6 = inlined_call_operand.vmem [shape: bf16[2,8,32], index: 6, kind: output, shape index: {}]
  %s7 = sld [smem:[#allocation0]]
  $region57: #{transformer_forward.36} parent=0
    _
  %s9 = ssub.s32 1, %s7
  %s10 = scalar_select 0, %s9, %s7
  loop: start=0, step=1, limit=4
  $region2: #{transformer_forward.36} parent=0 // loop_pre_header
    _
  $region3: #{transformer_forward.36} parent=0 // loop_header
    %s12 = sphi 0, %s16
    %p13 = scmp.ge.s32.totalorder %s12, 4
    %s19 = sphi 0, %s31
    %s20 = sphi 0, %s27
    %s21 = sphi 0, %s19
    %s22 = sphi 0, %s20
    %s23 = sphi 0, %s21
    %s24 = sphi 0, %s22
    %s36 = sphi 0, %s38
    %s39 = sphi 0, %s36
    %s40 = sphi 0, %s39
    %s56 = sphi 0, %s40
    %s64 = sphi 0, %s66
    %s67 = sphi 0, %s64
    %s68 = sphi 0, %s67
    %s84 = sphi 0, %s68
    %s88 = sphi 0, %s88
    %s90 = sphi 0, %s88
    %s91 = sphi 0, %s90
    %s105 = sphi 0, %s91
    %s109 = sphi 0, %s109
    %s111 = sphi 0, %s109
    %s112 = sphi 0, %s111
    %s126 = sphi 0, %s112
    %s130 = sphi 0, %s130
    %s132 = sphi 0, %s130
    %s133 = sphi 0, %s132
    %s147 = sphi 0, %s133
    %s151 = sphi 0, %s151
    %s153 = sphi 0, %s151
    %s154 = sphi 0, %s153
    %s168 = sphi 0, %s154
    %s176 = sphi 0, %s178
    %s179 = sphi 0, %s176
    %s180 = sphi 0, %s179
    %s196 = sphi 0, %s180
  $region4: #{transformer_forward.36} parent=0 // loop_header_branch
    %15 = sbr.rel (%p13) target = $region8
  $region5: #{transformer_forward.36} parent=0 // loop_body
    %s17 = ssub.s32 %s12, 1
    %s18 = ssub.s32 %s12, 2
    %s25 = sadd.s32 1, %s20
    %p26 = scmp.ge.s32.totalorder %s25, 1
    %s27 = scalar_select %p26, 0, %s25
    %s28 = sadd.s32 1, %s19
    %s29 = scalar_select %p26, %s28, %s19
    %p30 = scmp.ge.s32.totalorder %s29, 2
    %s31 = scalar_select %p30, 0, %s29
    %s32 = ssub.s32 %s19, %s31
    %s33 = ssub.s32 %s20, %s27
    %s34 = sor.u32 %s32, %s33
    %p35 = scmp.eq.s32.totalorder %s34, 0
    %s37 = sadd.s32 %s36, 1
    %s38 = scalar_select %p35, %s36, %s37
    %p41 = pneg %p35
    %p42 = scmp.eq.s32.totalorder %s12, 1
    %p43 = por %p41, %p42
    %p44 = scmp.ne.s32.totalorder %s36, %s39
    %p45 = scmp.eq.s32.totalorder %s12, 0
    %p46 = por %p44, %p45
    %p47 = scmp.ne.s32.totalorder %s36, %s39
    %p48 = scmp.eq.s32.totalorder %s17, 1
    %p49 = por %p47, %p48
    %p50 = scmp.ne.s32.totalorder %s39, %s40
    %p51 = scmp.eq.s32.totalorder %s17, 0
    %p52 = por %p50, %p51
    %p53 = scmp.ne.s32.totalorder %s39, %s40
    %p54 = scmp.eq.s32.totalorder %s18, 1
    %p55 = por %p53, %p54
    %p57 = scmp.ne.s32.totalorder %s40, %s56
    %p58 = scmp.eq.s32.totalorder %s18, 0
    %p59 = por %p57, %p58
    %s60 = ssub.s32 %s19, %s31
    %s61 = ssub.s32 %s20, %s27
    %s62 = sor.u32 %s60, %s61
    %p63 = scmp.eq.s32.totalorder %s62, 0
    %s65 = sadd.s32 %s64, 1
    %s66 = scalar_select %p63, %s64, %s65
    %p69 = pneg %p63
    %p70 = scmp.eq.s32.totalorder %s12, 1
    %p71 = por %p69, %p70
    %p72 = scmp.ne.s32.totalorder %s64, %s67
    %p73 = scmp.eq.s32.totalorder %s12, 0
    %p74 = por %p72, %p73
    %p75 = scmp.ne.s32.totalorder %s64, %s67
    %p76 = scmp.eq.s32.totalorder %s17, 1
    %p77 = por %p75, %p76
    %p78 = scmp.ne.s32.totalorder %s67, %s68
    %p79 = scmp.eq.s32.totalorder %s17, 0
    %p80 = por %p78, %p79
    %p81 = scmp.ne.s32.totalorder %s67, %s68
    %p82 = scmp.eq.s32.totalorder %s18, 1
    %p83 = por %p81, %p82
    %p85 = scmp.ne.s32.totalorder %s68, %s84
    %p86 = scmp.eq.s32.totalorder %s18, 0
    %p87 = por %p85, %p86
    %s89 = sadd.s32 %s88, 1
    %p92 = scmp.eq.s32.totalorder %s12, 1
    %p93 = scmp.ne.s32.totalorder %s88, %s90
    %p94 = scmp.eq.s32.totalorder %s12, 0
    %p95 = por %p93, %p94
    %p96 = scmp.ne.s32.totalorder %s88, %s90
    %p97 = scmp.eq.s32.totalorder %s17, 1
    %p98 = por %p96, %p97
    %p99 = scmp.ne.s32.totalorder %s90, %s91
    %p100 = scmp.eq.s32.totalorder %s17, 0
    %p101 = por %p99, %p100
    %p102 = scmp.ne.s32.totalorder %s90, %s91
    %p103 = scmp.eq.s32.totalorder %s18, 1
    %p104 = por %p102, %p103
    %p106 = scmp.ne.s32.totalorder %s91, %s105
    %p107 = scmp.eq.s32.totalorder %s18, 0
    %p108 = por %p106, %p107
    %s110 = sadd.s32 %s109, 1
    %p113 = scmp.eq.s32.totalorder %s12, 1
    %p114 = scmp.ne.s32.totalorder %s109, %s111
    %p115 = scmp.eq.s32.totalorder %s12, 0
    %p116 = por %p114, %p115
    %p117 = scmp.ne.s32.totalorder %s109, %s111
    %p118 = scmp.eq.s32.totalorder %s17, 1
    %p119 = por %p117, %p118
    %p120 = scmp.ne.s32.totalorder %s111, %s112
    %p121 = scmp.eq.s32.totalorder %s17, 0
    %p122 = por %p120, %p121
    %p123 = scmp.ne.s32.totalorder %s111, %s112
    %p124 = scmp.eq.s32.totalorder %s18, 1
    %p125 = por %p123, %p124
    %p127 = scmp.ne.s32.totalorder %s112, %s126
    %p128 = scmp.eq.s32.totalorder %s18, 0
    %p129 = por %p127, %p128
    %s131 = sadd.s32 %s130, 1
    %p134 = scmp.eq.s32.totalorder %s12, 1
    %p135 = scmp.ne.s32.totalorder %s130, %s132
    %p136 = scmp.eq.s32.totalorder %s12, 0
    %p137 = por %p135, %p136
    %p138 = scmp.ne.s32.totalorder %s130, %s132
    %p139 = scmp.eq.s32.totalorder %s17, 1
    %p140 = por %p138, %p139
    %p141 = scmp.ne.s32.totalorder %s132, %s133
    %p142 = scmp.eq.s32.totalorder %s17, 0
    %p143 = por %p141, %p142
    %p144 = scmp.ne.s32.totalorder %s132, %s133
    %p145 = scmp.eq.s32.totalorder %s18, 1
    %p146 = por %p144, %p145
    %p148 = scmp.ne.s32.totalorder %s133, %s147
    %p149 = scmp.eq.s32.totalorder %s18, 0
    %p150 = por %p148, %p149
    %s152 = sadd.s32 %s151, 1
    %p155 = scmp.eq.s32.totalorder %s12, 1
    %p156 = scmp.ne.s32.totalorder %s151, %s153
    %p157 = scmp.eq.s32.totalorder %s12, 0
    %p158 = por %p156, %p157
    %p159 = scmp.ne.s32.totalorder %s151, %s153
    %p160 = scmp.eq.s32.totalorder %s17, 1
    %p161 = por %p159, %p160
    %p162 = scmp.ne.s32.totalorder %s153, %s154
    %p163 = scmp.eq.s32.totalorder %s17, 0
    %p164 = por %p162, %p163
    %p165 = scmp.ne.s32.totalorder %s153, %s154
    %p166 = scmp.eq.s32.totalorder %s18, 1
    %p167 = por %p165, %p166
    %p169 = scmp.ne.s32.totalorder %s154, %s168
    %p170 = scmp.eq.s32.totalorder %s18, 0
    %p171 = por %p169, %p170
    %s172 = ssub.s32 %s19, %s31
    %s173 = ssub.s32 %s20, %s27
    %s174 = sor.u32 %s172, %s173
    %p175 = scmp.eq.s32.totalorder %s174, 0
    %s177 = sadd.s32 %s176, 1
    %s178 = scalar_select %p175, %s176, %s177
    %p181 = pneg %p175
    %p182 = scmp.eq.s32.totalorder %s12, 1
    %p183 = por %p181, %p182
    %p184 = scmp.ne.s32.totalorder %s176, %s179
    %p185 = scmp.eq.s32.totalorder %s12, 0
    %p186 = por %p184, %p185
    %p187 = scmp.ne.s32.totalorder %s176, %s179
    %p188 = scmp.eq.s32.totalorder %s17, 1
    %p189 = por %p187, %p188
    %p190 = scmp.ne.s32.totalorder %s179, %s180
    %p191 = scmp.eq.s32.totalorder %s17, 0
    %p192 = por %p190, %p191
    %p193 = scmp.ne.s32.totalorder %s179, %s180
    %p194 = scmp.eq.s32.totalorder %s18, 1
    %p195 = por %p193, %p194
    %p197 = scmp.ne.s32.totalorder %s180, %s196
    %p198 = scmp.eq.s32.totalorder %s18, 0
    %p199 = por %p197, %p198
    %p200 = scmp.le.s32.totalorder 1, %s12
    %p201 = scmp.lt.s32.totalorder %s12, 3
    %p202 = pnand %p200, %p201
    %p203 = pneg %p202
    // Predicated region
    $region9: #{transformer_forward.36} parent=5 // pred_check
      _
    $region10: #{transformer_forward.36} parent=5 // pred_check_branch
      %205 = sbr.rel (%p202) target = $region12
    $region11: #{transformer_forward.36} parent=5 // pred_region
      %s206 = ssub.s32 %s12, 1
      // Predicated region
      $region13: #{transformer_forward.36} parent=11 // pred_check
        %p207 = pneg %p101
      $region14: #{transformer_forward.36} parent=11 // pred_check_branch
        %209 = sbr.rel (%p207) target = $region16
      $region15: #{transformer_forward.36} parent=11 // pred_region
        _
      $region16: #{transformer_forward.36} parent=11 // pred_fallthru
        _
      // Predicated region
      $region17: #{transformer_forward.36} parent=11 // pred_check
        %p210 = pneg %p122
      $region18: #{transformer_forward.36} parent=11 // pred_check_branch
        %212 = sbr.rel (%p210) target = $region20
      $region19: #{transformer_forward.36} parent=11 // pred_region
        _
      $region20: #{transformer_forward.36} parent=11 // pred_fallthru
        _
      // Predicated region
      $region21: #{transformer_forward.36} parent=11 // pred_check
        %p213 = pneg %p143
      $region22: #{transformer_forward.36} parent=11 // pred_check_branch
        %215 = sbr.rel (%p213) target = $region24
      $region23: #{transformer_forward.36} parent=11 // pred_region
        _
      $region24: #{transformer_forward.36} parent=11 // pred_fallthru
        _
      // Predicated region
      $region25: #{transformer_forward.36} parent=11 // pred_check
        %p216 = pneg %p164
      $region26: #{transformer_forward.36} parent=11 // pred_check_branch
        %218 = sbr.rel (%p216) target = $region28
      $region27: #{transformer_forward.36} parent=11 // pred_region
        _
      $region28: #{transformer_forward.36} parent=11 // pred_fallthru
        _
    $region12: #{transformer_forward.36} parent=5 // pred_fallthru
      _
    %p219 = scmp.lt.s32.totalorder %s12, 2
    // Predicated region
    $region29: #{transformer_forward.36} parent=5 // pred_check
      %p220 = pneg %p219
    $region30: #{transformer_forward.36} parent=5 // pred_check_branch
      %222 = sbr.rel (%p220) target = $region32
    $region31: #{transformer_forward.36} parent=5 // pred_region
      // Predicated region
      $region33: #{transformer_forward.36} parent=31 // pred_check
        %p223 = pneg %p46
      $region34: #{transformer_forward.36} parent=31 // pred_check_branch
        %225 = sbr.rel (%p223) target = $region36
      $region35: #{transformer_forward.36} parent=31 // pred_region
        %p226 = scmp.lt.s32.totalorder %s19, 1
        %s227 = scalar_select %p226, %s19, 1
        %p228 = scmp.lt.s32.totalorder %s20, 0
        %s229 = scalar_select %p228, %s20, 0
        %s230 = smul.addr %s227, 4
        %s231 = sadd.s32 %s229, %s230
        %s232 = smul.addr %s231, 4
        %s233 = scalar_lea.vmem %s0, %s232
      $region36: #{transformer_forward.36} parent=31 // pred_fallthru
        _
      // Predicated region
      $region37: #{transformer_forward.36} parent=31 // pred_check
        %p234 = pneg %p74
      $region38: #{transformer_forward.36} parent=31 // pred_check_branch
        %236 = sbr.rel (%p234) target = $region40
      $region39: #{transformer_forward.36} parent=31 // pred_region
        %p237 = scmp.lt.s32.totalorder %s19, 1
        %s238 = scalar_select %p237, %s19, 1
        %p239 = scmp.lt.s32.totalorder %s20, 0
        %s240 = scalar_select %p239, %s20, 0
        %s241 = sadd.s32 %s240, %s238
        %s242 = smul.addr %s241, 4
        %s243 = scalar_lea.vmem %s1, %s242
      $region40: #{transformer_forward.36} parent=31 // pred_fallthru
        _
    $region32: #{transformer_forward.36} parent=5 // pred_fallthru
      _
    %p244 = scmp.le.s32.totalorder 1, %s12
    %p245 = scmp.lt.s32.totalorder %s12, 3
    %p246 = pnand %p244, %p245
    %p247 = pneg %p246
    // Predicated region
    $region41: #{transformer_forward.36} parent=5 // pred_check
      _
    $region42: #{transformer_forward.36} parent=5 // pred_check_branch
      %249 = sbr.rel (%p246) target = $region44
    $region43: #{transformer_forward.36} parent=5 // pred_region
      %s250 = ssub.s32 %s12, 1
      %p251 = scmp.lt.s32.totalorder %s21, 1
      %s252 = scalar_select %p251, %s21, 1
      %p253 = scmp.lt.s32.totalorder %s22, 0
      %s254 = scalar_select %p253, %s22, 0
      %s255 = smul.addr %s252, 4
      %s256 = sadd.s32 %s254, %s255
      %s257 = smul.addr %s256, 4
      %s258 = scalar_lea.vmem %s0, %s257
      %p259 = pneg %p52
      %p260 = pneg %p49
      %p261 = scmp.lt.s32.totalorder %s21, 1
      %s262 = scalar_select %p261, %s21, 1
      %p263 = scmp.lt.s32.totalorder %s22, 0
      %s264 = scalar_select %p263, %s22, 0
      %s265 = sadd.s32 %s264, %s262
      %s266 = smul.addr %s265, 4
      %s267 = scalar_lea.vmem %s1, %s266
      %p268 = pneg %p80
      %p269 = pneg %p77
      %p270 = pneg %p101
      %p271 = pneg %p98
      %p272 = pneg %p122
      %p273 = pneg %p119
      %p274 = pneg %p143
      %p275 = pneg %p140
      %p276 = pneg %p164
      %p277 = pneg %p161
      %p278 = pneg %p192
      %p279 = pneg %p189
      %p280 = scmp.lt.s32.totalorder %s21, 1
      %s281 = scalar_select %p280, %s21, 1
      %p282 = scmp.lt.s32.totalorder %s22, 0
      %s283 = scalar_select %p282, %s22, 0
      %s284 = sadd.s32 %s283, %s281
      %s285 = smul.addr %s284, 4
      %s286 = scalar_lea.vmem %s6, %s285
      %p287 = scmp.lt.s32.totalorder %s21, 1
      %s288 = scalar_select %p287, %s21, 1
      %p289 = scmp.lt.s32.totalorder %s22, 0
      %s290 = scalar_select %p289, %s22, 0
      %s291 = smul.addr %s288, 4
      %s292 = sadd.s32 %s290, %s291
      %s293 = smul.addr %s292, 4
      %s294 = scalar_lea.vmem %s0, %s293
      %p295 = scmp.lt.s32.totalorder %s21, 1
      %s296 = scalar_select %p295, %s21, 1
      %p297 = scmp.lt.s32.totalorder %s22, 0
      %s298 = scalar_select %p297, %s22, 0
      %s299 = sadd.s32 %s298, %s296
      %s300 = smul.addr %s299, 4
      %s301 = scalar_lea.vmem %s1, %s300
      %p302 = scmp.lt.s32.totalorder %s21, 1
      %s303 = scalar_select %p302, %s21, 1
      %p304 = scmp.lt.s32.totalorder %s22, 0
      %s305 = scalar_select %p304, %s22, 0
      %s306 = sadd.s32 %s305, %s303
      %s307 = smul.addr %s306, 4
      %s308 = scalar_lea.vmem %s6, %s307
      %v310 = vld [vmem:[%s294] sm:$0xf]
      %s311 = scalar_lea.vmem %s294, 4
      %v312 = vld [vmem:[%s311] sm:$0xf]
      %s313 = scalar_lea.vmem %s294, 8
      %v314 = vld [vmem:[%s313] sm:$0xf]
      %s315 = scalar_lea.vmem %s294, 12
      %v316 = vld [vmem:[%s315] sm:$0xf]
      %v318 = vunpack.c.l.b16 %v312
      %v319 = vpack.c.b16 %v318, %v318
      %320 = vrot.lane.b32.xlu0 %v319, 8
      %v321 = vpop.permute.xlu0 %320
      %v323 = vunpack.c.l.b16 %v314
      %v324 = vpack.c.b16 %v323, %v323
      %325 = vrot.lane.b32.xlu0 %v324, 16
      %v326 = vpop.permute.xlu0 %325
      %v328 = vunpack.c.l.b16 %v316
      %v329 = vpack.c.b16 %v328, %v328
      %330 = vrot.lane.b32.xlu0 %v329, 24
      %v331 = vpop.permute.xlu0 %330
      %vm332 = vcmask 64512
      %v335 = vsel %vm332, %v310, %v321
      %vm336 = vcmask 130048
      %v338 = vsel %vm336, %v335, %v326
      %vm339 = vcmask 195584
      %v341 = vsel %vm339, %v338, %v331
      %v342 = vld [vmem:[%s2] sm:$0xf]
      %v343 = vld [vmem:[%s2 + $0x4] sm:$0xf]
      %v344 = vld [vmem:[%s2 + $0x8] sm:$0xf]
      %v345 = vld [vmem:[%s2 + $0xc] sm:$0xf]
      %v346 = vld [vmem:[%s3] sm:$0x1]
      %v348 = vlaneseq
      %v349 = vshrl.u32 %v348, 7
      %v350 = vsub.s32 0, %v349
      %v351 = vrot.slane %v346, %v350
      %v357 = vunpack.c.l.b16 %v342
      %v358 = vunpack.c.l.b16 %v343
      %v359 = vunpack.c.l.b16 %v344
      %v360 = vunpack.c.l.b16 %v345
      %v361 = vpack.c.b16 %v358, %v357
      %v362 = vpack.c.b16 %v360, %v359
      %vm365 = vcmask 261120
      %v366 = vsel %vm365, %v341, 0
      %368 = vmatprep.subr.bf16.mxu0 0
      %369 = vmatpush1.bf16.msra.mxu0 %v361
      %370 = vmatprep.subr.bf16.mxu0 0
      %371 = vmatpush1.bf16.msra.mxu0 %v362
      %372 = vmatprep.subr.bf16.mxu0 0
      %373 = vmatpush1.bf16.msra.mxu0 0
      %374 = vmatprep.subr.bf16.mxu0 0
      %375 = vmatpush1.bf16.msra.mxu0 0
      %376 = vmatprep.subr.bf16.mxu0 0
      %377 = vmatpush1.bf16.msra.mxu0 0
      %378 = vmatprep.subr.bf16.mxu0 0
      %379 = vmatpush1.bf16.msra.mxu0 0
      %380 = vmatprep.subr.bf16.mxu0 0
      %381 = vmatpush1.bf16.msra.mxu0 0
      %382 = vmatprep.subr.bf16.mxu0 0
      %383 = vmatpush1.bf16.msra.mxu0 0
      %384 = vmatprep.subr.bf16.mxu0 0
      %385 = vmatpush1.bf16.msra.mxu0 0
      %386 = vmatprep.subr.bf16.mxu0 0
      %387 = vmatpush1.bf16.msra.mxu0 0
      %388 = vmatprep.subr.bf16.mxu0 0
      %389 = vmatpush1.bf16.msra.mxu0 0
      %390 = vmatprep.subr.bf16.mxu0 0
      %391 = vmatpush1.bf16.msra.mxu0 0
      %392 = vmatprep.subr.bf16.mxu0 0
      %393 = vmatpush1.bf16.msra.mxu0 0
      %394 = vmatprep.subr.bf16.mxu0 0
      %395 = vmatpush1.bf16.msra.mxu0 0
      %396 = vmatprep.subr.bf16.mxu0 0
      %397 = vmatpush1.bf16.msra.mxu0 0
      %398 = vmatprep.subr.bf16.mxu0 0
      %399 = vmatpush1.bf16.msra.mxu0 0
      %400 = vmatprep.mubr.bf16.mxu0 0
      %401 = vmatmul.mubr.bf16.gmra.mrb[0].mxu0 %v366
      %v402 = vpop.f32.mrb[0].mxu0
      %v403 = vadd.f32 %v351, %v402
      %v404 = vpop.f32.mrb[0].mxu0
      %v405 = vpop.f32.mrb[0].mxu0
      %v406 = vpop.f32.mrb[0].mxu0
      %407 = vdwg.mxu0
      %v408 = vld [vmem:[%s301] sm:$0xf]
      %v409 = vunpack.c.l.bf16 %v408
      %v410 = vadd.f32 %v403, %v409
      %v411 = vld [vmem:[%s4] sm:$0x1]
      %v412 = vld [vmem:[%s5] sm:$0x1]
      %v413 = vsel %vm365, %v410, 0.0
      %414 = vadd.xlane.f32.xlu0 %v413
      %v415 = vpop.xlane.xlu0 %414
      %v416 = vrcp.pop 32.0
      %v417 = vmul.f32 %v415, %v416
      %v418 = vsub.f32 %v410, %v417
      %v419 = vmul.f32 %v418, %v418
      %v420 = vsel %vm365, %v419, 0.0
      %421 = vadd.xlane.f32.xlu0 %v420
      %v422 = vpop.xlane.xlu0 %421
      %v423 = vmul.f32 %v422, %v416
      %v424 = vadd.f32 %v423, 1e-06
      %v425 = vrsqrt.pop %v424
      %v426 = vmul.f32 %v418, %v425
      %v428 = vlaneseq
      %v429 = vshrl.u32 %v428, 7
      %v430 = vsub.s32 0, %v429
      %v431 = vrot.slane %v411, %v430
      %v433 = vmul.f32 %v426, %v431
      %v435 = vlaneseq
      %v436 = vshrl.u32 %v435, 7
      %v437 = vsub.s32 0, %v436
      %v438 = vrot.slane %v412, %v437
      %v440 = vadd.f32 %v433, %v438
      %v441 = vpack.c.bf16 %v440, %v440
      %vm442 = vcmask 257024
      %443 = vst.msk [vmem:[%s308] sm:$0xf] %vm442, %v441
      %p444 = scmp.lt.s32.totalorder %s21, 1
      %s445 = scalar_select %p444, %s21, 1
      %p446 = scmp.lt.s32.totalorder %s22, 0
      %s447 = scalar_select %p446, %s22, 0
      %s448 = sadd.s32 %s447, %s445
      %s449 = smul.addr %s448, 4
      %s450 = scalar_lea.vmem %s6, %s449
      // Predicated region
      $region45: #{transformer_forward.36} parent=43 // pred_check
        %p451 = pneg %p189
      $region46: #{transformer_forward.36} parent=43 // pred_check_branch
        %453 = sbr.rel (%p451) target = $region48
      $region47: #{transformer_forward.36} parent=43 // pred_region
        _
      $region48: #{transformer_forward.36} parent=43 // pred_fallthru
        _
    $region44: #{transformer_forward.36} parent=5 // pred_fallthru
      _
    %p454 = scmp.le.s32.totalorder 2, %s12
    // Predicated region
    $region49: #{transformer_forward.36} parent=5 // pred_check
      %p455 = pneg %p454
    $region50: #{transformer_forward.36} parent=5 // pred_check_branch
      %457 = sbr.rel (%p455) target = $region52
    $region51: #{transformer_forward.36} parent=5 // pred_region
      %s458 = ssub.s32 %s12, 2
      // Predicated region
      $region53: #{transformer_forward.36} parent=51 // pred_check
        %p459 = pneg %p195
      $region54: #{transformer_forward.36} parent=51 // pred_check_branch
        %461 = sbr.rel (%p459) target = $region56
      $region55: #{transformer_forward.36} parent=51 // pred_region
        %p462 = scmp.lt.s32.totalorder %s23, 1
        %s463 = scalar_select %p462, %s23, 1
        %p464 = scmp.lt.s32.totalorder %s24, 0
        %s465 = scalar_select %p464, %s24, 0
        %s466 = sadd.s32 %s465, %s463
        %s467 = smul.addr %s466, 4
        %s468 = scalar_lea.vmem %s6, %s467
      $region56: #{transformer_forward.36} parent=51 // pred_fallthru
        _
    $region52: #{transformer_forward.36} parent=5 // pred_fallthru
      _
  $region6: #{transformer_forward.36} parent=0 // loop_footer
    %s16 = sadd.s32 1, %s12
  $region7: #{transformer_forward.36} parent=0 // loop_footer_branch
    %11 = sbr.rel target = $region3
  $region8: #{transformer_forward.36} parent=0 // loop_exit
    _

// kernel: transformer_forward.34
$region0: #{transformer_forward.34}
  #allocation0 [shape = 'u32[]', space=smem, size = 0x4, offset = 0x4, fixed_abs, tag = 'smem constant byte address 0x4 - core index']
  #allocation1 [shape = 'u32[144,128]{1,0:T(1,128)}', space=vmem, size = 0x12000, scoped, tag = 'internal scratch']
  %s0 = inlined_call_operand.vmem [shape: bf16[2,8,32], index: 0, kind: input, shape index: {}]
  %s1 = inlined_call_operand.vmem [shape: bf16[32,96], index: 1, kind: input, shape index: {}]
  %s2 = inlined_call_operand.vmem [shape: f32[1,96], index: 2, kind: input, shape index: {}]
  %s3 = inlined_call_operand.vmem [shape: bf16[2,4,8,8], index: 3, kind: output, shape index: {0}]
  %s4 = inlined_call_operand.vmem [shape: bf16[2,4,8,8], index: 4, kind: output, shape index: {1}]
  %s5 = inlined_call_operand.vmem [shape: bf16[2,4,8,8], index: 5, kind: output, shape index: {2}]
  %6 = xla_tuple %s3, %s4, %s5
  %s7 = sld [smem:[#allocation0]]
  $region61: #{transformer_forward.34} parent=0
    _
  %s9 = ssub.s32 1, %s7
  %s10 = scalar_select 0, %s9, %s7
  loop: start=0, step=1, limit=4
  $region2: #{transformer_forward.34} parent=0 // loop_pre_header
    _
  $region3: #{transformer_forward.34} parent=0 // loop_header
    %s12 = sphi 0, %s16
    %p13 = scmp.ge.s32.totalorder %s12, 4
    %s19 = sphi 0, %s31
    %s20 = sphi 0, %s27
    %s21 = sphi 0, %s19
    %s22 = sphi 0, %s20
    %s23 = sphi 0, %s21
    %s24 = sphi 0, %s22
    %s36 = sphi 0, %s38
    %s39 = sphi 0, %s36
    %s40 = sphi 0, %s39
    %s56 = sphi 0, %s40
    %s60 = sphi 0, %s60
    %s62 = sphi 0, %s60
    %s63 = sphi 0, %s62
    %s77 = sphi 0, %s63
    %s81 = sphi 0, %s81
    %s83 = sphi 0, %s81
    %s84 = sphi 0, %s83
    %s98 = sphi 0, %s84
    %s106 = sphi 0, %s108
    %s109 = sphi 0, %s106
    %s110 = sphi 0, %s109
    %s126 = sphi 0, %s110
    %s134 = sphi 0, %s136
    %s137 = sphi 0, %s134
    %s138 = sphi 0, %s137
    %s154 = sphi 0, %s138
    %s162 = sphi 0, %s164
    %s165 = sphi 0, %s162
    %s166 = sphi 0, %s165
    %s182 = sphi 0, %s166
  $region4: #{transformer_forward.34} parent=0 // loop_header_branch
    %15 = sbr.rel (%p13) target = $region8
  $region5: #{transformer_forward.34} parent=0 // loop_body
    %s17 = ssub.s32 %s12, 1
    %s18 = ssub.s32 %s12, 2
    %s25 = sadd.s32 1, %s20
    %p26 = scmp.ge.s32.totalorder %s25, 1
    %s27 = scalar_select %p26, 0, %s25
    %s28 = sadd.s32 1, %s19
    %s29 = scalar_select %p26, %s28, %s19
    %p30 = scmp.ge.s32.totalorder %s29, 2
    %s31 = scalar_select %p30, 0, %s29
    %s32 = ssub.s32 %s19, %s31
    %s33 = ssub.s32 %s20, %s27
    %s34 = sor.u32 %s32, %s33
    %p35 = scmp.eq.s32.totalorder %s34, 0
    %s37 = sadd.s32 %s36, 1
    %s38 = scalar_select %p35, %s36, %s37
    %p41 = pneg %p35
    %p42 = scmp.eq.s32.totalorder %s12, 1
    %p43 = por %p41, %p42
    %p44 = scmp.ne.s32.totalorder %s36, %s39
    %p45 = scmp.eq.s32.totalorder %s12, 0
    %p46 = por %p44, %p45
    %p47 = scmp.ne.s32.totalorder %s36, %s39
    %p48 = scmp.eq.s32.totalorder %s17, 1
    %p49 = por %p47, %p48
    %p50 = scmp.ne.s32.totalorder %s39, %s40
    %p51 = scmp.eq.s32.totalorder %s17, 0
    %p52 = por %p50, %p51
    %p53 = scmp.ne.s32.totalorder %s39, %s40
    %p54 = scmp.eq.s32.totalorder %s18, 1
    %p55 = por %p53, %p54
    %p57 = scmp.ne.s32.totalorder %s40, %s56
    %p58 = scmp.eq.s32.totalorder %s18, 0
    %p59 = por %p57, %p58
    %s61 = sadd.s32 %s60, 1
    %p64 = scmp.eq.s32.totalorder %s12, 1
    %p65 = scmp.ne.s32.totalorder %s60, %s62
    %p66 = scmp.eq.s32.totalorder %s12, 0
    %p67 = por %p65, %p66
    %p68 = scmp.ne.s32.totalorder %s60, %s62
    %p69 = scmp.eq.s32.totalorder %s17, 1
    %p70 = por %p68, %p69
    %p71 = scmp.ne.s32.totalorder %s62, %s63
    %p72 = scmp.eq.s32.totalorder %s17, 0
    %p73 = por %p71, %p72
    %p74 = scmp.ne.s32.totalorder %s62, %s63
    %p75 = scmp.eq.s32.totalorder %s18, 1
    %p76 = por %p74, %p75
    %p78 = scmp.ne.s32.totalorder %s63, %s77
    %p79 = scmp.eq.s32.totalorder %s18, 0
    %p80 = por %p78, %p79
    %s82 = sadd.s32 %s81, 1
    %p85 = scmp.eq.s32.totalorder %s12, 1
    %p86 = scmp.ne.s32.totalorder %s81, %s83
    %p87 = scmp.eq.s32.totalorder %s12, 0
    %p88 = por %p86, %p87
    %p89 = scmp.ne.s32.totalorder %s81, %s83
    %p90 = scmp.eq.s32.totalorder %s17, 1
    %p91 = por %p89, %p90
    %p92 = scmp.ne.s32.totalorder %s83, %s84
    %p93 = scmp.eq.s32.totalorder %s17, 0
    %p94 = por %p92, %p93
    %p95 = scmp.ne.s32.totalorder %s83, %s84
    %p96 = scmp.eq.s32.totalorder %s18, 1
    %p97 = por %p95, %p96
    %p99 = scmp.ne.s32.totalorder %s84, %s98
    %p100 = scmp.eq.s32.totalorder %s18, 0
    %p101 = por %p99, %p100
    %s102 = ssub.s32 %s19, %s31
    %s103 = ssub.s32 %s20, %s27
    %s104 = sor.u32 %s102, %s103
    %p105 = scmp.eq.s32.totalorder %s104, 0
    %s107 = sadd.s32 %s106, 1
    %s108 = scalar_select %p105, %s106, %s107
    %p111 = pneg %p105
    %p112 = scmp.eq.s32.totalorder %s12, 1
    %p113 = por %p111, %p112
    %p114 = scmp.ne.s32.totalorder %s106, %s109
    %p115 = scmp.eq.s32.totalorder %s12, 0
    %p116 = por %p114, %p115
    %p117 = scmp.ne.s32.totalorder %s106, %s109
    %p118 = scmp.eq.s32.totalorder %s17, 1
    %p119 = por %p117, %p118
    %p120 = scmp.ne.s32.totalorder %s109, %s110
    %p121 = scmp.eq.s32.totalorder %s17, 0
    %p122 = por %p120, %p121
    %p123 = scmp.ne.s32.totalorder %s109, %s110
    %p124 = scmp.eq.s32.totalorder %s18, 1
    %p125 = por %p123, %p124
    %p127 = scmp.ne.s32.totalorder %s110, %s126
    %p128 = scmp.eq.s32.totalorder %s18, 0
    %p129 = por %p127, %p128
    %s130 = ssub.s32 %s19, %s31
    %s131 = ssub.s32 %s20, %s27
    %s132 = sor.u32 %s130, %s131
    %p133 = scmp.eq.s32.totalorder %s132, 0
    %s135 = sadd.s32 %s134, 1
    %s136 = scalar_select %p133, %s134, %s135
    %p139 = pneg %p133
    %p140 = scmp.eq.s32.totalorder %s12, 1
    %p141 = por %p139, %p140
    %p142 = scmp.ne.s32.totalorder %s134, %s137
    %p143 = scmp.eq.s32.totalorder %s12, 0
    %p144 = por %p142, %p143
    %p145 = scmp.ne.s32.totalorder %s134, %s137
    %p146 = scmp.eq.s32.totalorder %s17, 1
    %p147 = por %p145, %p146
    %p148 = scmp.ne.s32.totalorder %s137, %s138
    %p149 = scmp.eq.s32.totalorder %s17, 0
    %p150 = por %p148, %p149
    %p151 = scmp.ne.s32.totalorder %s137, %s138
    %p152 = scmp.eq.s32.totalorder %s18, 1
    %p153 = por %p151, %p152
    %p155 = scmp.ne.s32.totalorder %s138, %s154
    %p156 = scmp.eq.s32.totalorder %s18, 0
    %p157 = por %p155, %p156
    %s158 = ssub.s32 %s19, %s31
    %s159 = ssub.s32 %s20, %s27
    %s160 = sor.u32 %s158, %s159
    %p161 = scmp.eq.s32.totalorder %s160, 0
    %s163 = sadd.s32 %s162, 1
    %s164 = scalar_select %p161, %s162, %s163
    %p167 = pneg %p161
    %p168 = scmp.eq.s32.totalorder %s12, 1
    %p169 = por %p167, %p168
    %p170 = scmp.ne.s32.totalorder %s162, %s165
    %p171 = scmp.eq.s32.totalorder %s12, 0
    %p172 = por %p170, %p171
    %p173 = scmp.ne.s32.totalorder %s162, %s165
    %p174 = scmp.eq.s32.totalorder %s17, 1
    %p175 = por %p173, %p174
    %p176 = scmp.ne.s32.totalorder %s165, %s166
    %p177 = scmp.eq.s32.totalorder %s17, 0
    %p178 = por %p176, %p177
    %p179 = scmp.ne.s32.totalorder %s165, %s166
    %p180 = scmp.eq.s32.totalorder %s18, 1
    %p181 = por %p179, %p180
    %p183 = scmp.ne.s32.totalorder %s166, %s182
    %p184 = scmp.eq.s32.totalorder %s18, 0
    %p185 = por %p183, %p184
    %p186 = scmp.le.s32.totalorder 1, %s12
    %p187 = scmp.lt.s32.totalorder %s12, 3
    %p188 = pnand %p186, %p187
    %p189 = pneg %p188
    // Predicated region
    $region9: #{transformer_forward.34} parent=5 // pred_check
      _
    $region10: #{transformer_forward.34} parent=5 // pred_check_branch
      %191 = sbr.rel (%p188) target = $region12
    $region11: #{transformer_forward.34} parent=5 // pred_region
      %s192 = ssub.s32 %s12, 1
      // Predicated region
      $region13: #{transformer_forward.34} parent=11 // pred_check
        %p193 = pneg %p73
      $region14: #{transformer_forward.34} parent=11 // pred_check_branch
        %195 = sbr.rel (%p193) target = $region16
      $region15: #{transformer_forward.34} parent=11 // pred_region
        _
      $region16: #{transformer_forward.34} parent=11 // pred_fallthru
        _
      // Predicated region
      $region17: #{transformer_forward.34} parent=11 // pred_check
        %p196 = pneg %p94
      $region18: #{transformer_forward.34} parent=11 // pred_check_branch
        %198 = sbr.rel (%p196) target = $region20
      $region19: #{transformer_forward.34} parent=11 // pred_region
        _
      $region20: #{transformer_forward.34} parent=11 // pred_fallthru
        _
    $region12: #{transformer_forward.34} parent=5 // pred_fallthru
      _
    %p199 = scmp.lt.s32.totalorder %s12, 2
    // Predicated region
    $region21: #{transformer_forward.34} parent=5 // pred_check
      %p200 = pneg %p199
    $region22: #{transformer_forward.34} parent=5 // pred_check_branch
      %202 = sbr.rel (%p200) target = $region24
    $region23: #{transformer_forward.34} parent=5 // pred_region
      // Predicated region
      $region25: #{transformer_forward.34} parent=23 // pred_check
        %p203 = pneg %p46
      $region26: #{transformer_forward.34} parent=23 // pred_check_branch
        %205 = sbr.rel (%p203) target = $region28
      $region27: #{transformer_forward.34} parent=23 // pred_region
        %p206 = scmp.lt.s32.totalorder %s19, 1
        %s207 = scalar_select %p206, %s19, 1
        %p208 = scmp.lt.s32.totalorder %s20, 0
        %s209 = scalar_select %p208, %s20, 0
        %s210 = sadd.s32 %s209, %s207
        %s211 = smul.addr %s210, 4
        %s212 = scalar_lea.vmem %s0, %s211
      $region28: #{transformer_forward.34} parent=23 // pred_fallthru
        _
    $region24: #{transformer_forward.34} parent=5 // pred_fallthru
      _
    %p213 = scmp.le.s32.totalorder 1, %s12
    %p214 = scmp.lt.s32.totalorder %s12, 3
    %p215 = pnand %p213, %p214
    %p216 = pneg %p215
    // Predicated region
    $region29: #{transformer_forward.34} parent=5 // pred_check
      _
    $region30: #{transformer_forward.34} parent=5 // pred_check_branch
      %218 = sbr.rel (%p215) target = $region32
    $region31: #{transformer_forward.34} parent=5 // pred_region
      %s219 = ssub.s32 %s12, 1
      %p220 = scmp.lt.s32.totalorder %s21, 1
      %s221 = scalar_select %p220, %s21, 1
      %p222 = scmp.lt.s32.totalorder %s22, 0
      %s223 = scalar_select %p222, %s22, 0
      %s224 = sadd.s32 %s223, %s221
      %s225 = smul.addr %s224, 4
      %s226 = scalar_lea.vmem %s0, %s225
      %p227 = pneg %p52
      %p228 = pneg %p49
      %p229 = pneg %p73
      %p230 = pneg %p70
      %p231 = pneg %p94
      %p232 = pneg %p91
      %p233 = pneg %p122
      %p234 = pneg %p119
      %p235 = scmp.lt.s32.totalorder %s21, 1
      %s236 = scalar_select %p235, %s21, 1
      %p237 = scmp.lt.s32.totalorder %s22, 0
      %s238 = scalar_select %p237, %s22, 0
      %s239 = smul.addr %s236, 4
      %s240 = sadd.s32 %s238, %s239
      %s241 = smul.addr %s240, 4
      %s242 = scalar_lea.vmem %s3, %s241
      %p243 = pneg %p150
      %p244 = pneg %p147
      %p245 = scmp.lt.s32.totalorder %s21, 1
      %s246 = scalar_select %p245, %s21, 1
      %p247 = scmp.lt.s32.totalorder %s22, 0
      %s248 = scalar_select %p247, %s22, 0
      %s249 = smul.addr %s246, 4
      %s250 = sadd.s32 %s248, %s249
      %s251 = smul.addr %s250, 4
      %s252 = scalar_lea.vmem %s4, %s251
      %p253 = pneg %p178
      %p254 = pneg %p175
      %p255 = scmp.lt.s32.totalorder %s21, 1
      %s256 = scalar_select %p255, %s21, 1
      %p257 = scmp.lt.s32.totalorder %s22, 0
      %s258 = scalar_select %p257, %s22, 0
      %s259 = smul.addr %s256, 4
      %s260 = sadd.s32 %s258, %s259
      %s261 = smul.addr %s260, 4
      %s262 = scalar_lea.vmem %s5, %s261
      %p263 = scmp.lt.s32.totalorder %s21, 1
      %s264 = scalar_select %p263, %s21, 1
      %p265 = scmp.lt.s32.totalorder %s22, 0
      %s266 = scalar_select %p265, %s22, 0
      %s267 = sadd.s32 %s266, %s264
      %s268 = smul.addr %s267, 4
      %s269 = scalar_lea.vmem %s0, %s268
      %p270 = scmp.lt.s32.totalorder %s21, 1
      %s271 = scalar_select %p270, %s21, 1
      %p272 = scmp.lt.s32.totalorder %s22, 0
      %s273 = scalar_select %p272, %s22, 0
      %s274 = smul.addr %s271, 4
      %s275 = sadd.s32 %s273, %s274
      %s276 = smul.addr %s275, 4
      %s277 = scalar_lea.vmem %s3, %s276
      %p278 = scmp.lt.s32.totalorder %s21, 1
      %s279 = scalar_select %p278, %s21, 1
      %p280 = scmp.lt.s32.totalorder %s22, 0
      %s281 = scalar_select %p280, %s22, 0
      %s282 = smul.addr %s279, 4
      %s283 = sadd.s32 %s281, %s282
      %s284 = smul.addr %s283, 4
      %s285 = scalar_lea.vmem %s4, %s284
      %p286 = scmp.lt.s32.totalorder %s21, 1
      %s287 = scalar_select %p286, %s21, 1
      %p288 = scmp.lt.s32.totalorder %s22, 0
      %s289 = scalar_select %p288, %s22, 0
      %s290 = smul.addr %s287, 4
      %s291 = sadd.s32 %s289, %s290
      %s292 = smul.addr %s291, 4
      %s293 = scalar_lea.vmem %s5, %s292
      %v295 = vld [vmem:[%s269] sm:$0xf]
      %v296 = vld [vmem:[%s1] sm:$0xf]
      %v297 = vld [vmem:[%s1 + $0x4] sm:$0xf]
      %v298 = vld [vmem:[%s1 + $0x8] sm:$0xf]
      %v299 = vld [vmem:[%s1 + $0xc] sm:$0xf]
      %v300 = vld [vmem:[%s2] sm:$0x1]
      %v302 = vlaneseq
      %v303 = vshrl.u32 %v302, 7
      %v304 = vsub.s32 0, %v303
      %v305 = vrot.slane %v300, %v304
      %v311 = vunpack.c.l.b16 %v296
      %v312 = vunpack.c.l.b16 %v297
      %v313 = vunpack.c.l.b16 %v298
      %v314 = vunpack.c.l.b16 %v299
      %v315 = vpack.c.b16 %v312, %v311
      %v316 = vpack.c.b16 %v314, %v313
      %vm319 = vcmask 261120
      %v321 = vsel %vm319, %v295, 0
      %323 = vmatprep.subr.bf16.mxu0 0
      %324 = vmatpush1.bf16.msra.mxu0 %v315
      %325 = vmatprep.subr.bf16.mxu0 0
      %326 = vmatpush1.bf16.msra.mxu0 %v316
      %327 = vmatprep.subr.bf16.mxu0 0
      %328 = vmatpush1.bf16.msra.mxu0 0
      %329 = vmatprep.subr.bf16.mxu0 0
      %330 = vmatpush1.bf16.msra.mxu0 0
      %331 = vmatprep.subr.bf16.mxu0 0
      %332 = vmatpush1.bf16.msra.mxu0 0
      %333 = vmatprep.subr.bf16.mxu0 0
      %334 = vmatpush1.bf16.msra.mxu0 0
      %335 = vmatprep.subr.bf16.mxu0 0
      %336 = vmatpush1.bf16.msra.mxu0 0
      %337 = vmatprep.subr.bf16.mxu0 0
      %338 = vmatpush1.bf16.msra.mxu0 0
      %339 = vmatprep.subr.bf16.mxu0 0
      %340 = vmatpush1.bf16.msra.mxu0 0
      %341 = vmatprep.subr.bf16.mxu0 0
      %342 = vmatpush1.bf16.msra.mxu0 0
      %343 = vmatprep.subr.bf16.mxu0 0
      %344 = vmatpush1.bf16.msra.mxu0 0
      %345 = vmatprep.subr.bf16.mxu0 0
      %346 = vmatpush1.bf16.msra.mxu0 0
      %347 = vmatprep.subr.bf16.mxu0 0
      %348 = vmatpush1.bf16.msra.mxu0 0
      %349 = vmatprep.subr.bf16.mxu0 0
      %350 = vmatpush1.bf16.msra.mxu0 0
      %351 = vmatprep.subr.bf16.mxu0 0
      %352 = vmatpush1.bf16.msra.mxu0 0
      %353 = vmatprep.subr.bf16.mxu0 0
      %354 = vmatpush1.bf16.msra.mxu0 0
      %355 = vmatprep.mubr.bf16.mxu0 0
      %356 = vmatmul.mubr.bf16.gmra.mrb[0].mxu0 %v321
      %v357 = vpop.f32.mrb[0].mxu0
      %v358 = vadd.f32 %v305, %v357
      %v359 = vpop.f32.mrb[0].mxu0
      %v360 = vpop.f32.mrb[0].mxu0
      %v361 = vpop.f32.mrb[0].mxu0
      %362 = vdwg.mxu0
      %v363 = vpack.c.bf16 %v358, %v358
      %vm364 = vcmask 60416
      %365 = vst.msk [vmem:[%s277] sm:$0xf] %vm364, %v363
      %v367 = vunpack.c.l.b16 %v363
      %v368 = vpack.c.b16 %v367, %v367
      %369 = vrot.lane.b32.xlu0 %v368, 120
      %v370 = vpop.permute.xlu0 %369
      %s372 = scalar_lea.vmem %s277, 4
      %373 = vst.msk [vmem:[%s372] sm:$0xf] %vm364, %v370
      %374 = vrot.lane.b32.xlu0 %v368, 112
      %v375 = vpop.permute.xlu0 %374
      %s377 = scalar_lea.vmem %s277, 8
      %378 = vst.msk [vmem:[%s377] sm:$0xf] %vm364, %v375
      %379 = vrot.lane.b32.xlu0 %v368, 104
      %v380 = vpop.permute.xlu0 %379
      %s382 = scalar_lea.vmem %s277, 12
      %383 = vst.msk [vmem:[%s382] sm:$0xf] %vm364, %v380
      %384 = vrot.lane.b32.xlu0 %v368, 96
      %v385 = vpop.permute.xlu0 %384
      %387 = vst.msk [vmem:[%s285] sm:$0xf] %vm364, %v385
      %388 = vrot.lane.b32.xlu0 %v368, 88
      %v389 = vpop.permute.xlu0 %388
      %s391 = scalar_lea.vmem %s285, 4
      %392 = vst.msk [vmem:[%s391] sm:$0xf] %vm364, %v389
      %393 = vrot.lane.b32.xlu0 %v368, 80
      %v394 = vpop.permute.xlu0 %393
      %s396 = scalar_lea.vmem %s285, 8
      %397 = vst.msk [vmem:[%s396] sm:$0xf] %vm364, %v394
      %398 = vrot.lane.b32.xlu0 %v368, 72
      %v399 = vpop.permute.xlu0 %398
      %s401 = scalar_lea.vmem %s285, 12
      %402 = vst.msk [vmem:[%s401] sm:$0xf] %vm364, %v399
      %403 = vrot.lane.b32.xlu0 %v368, 64
      %v404 = vpop.permute.xlu0 %403
      %406 = vst.msk [vmem:[%s293] sm:$0xf] %vm364, %v404
      %407 = vrot.lane.b32.xlu0 %v368, 56
      %v408 = vpop.permute.xlu0 %407
      %s410 = scalar_lea.vmem %s293, 4
      %411 = vst.msk [vmem:[%s410] sm:$0xf] %vm364, %v408
      %412 = vrot.lane.b32.xlu0 %v368, 48
      %v413 = vpop.permute.xlu0 %412
      %s415 = scalar_lea.vmem %s293, 8
      %416 = vst.msk [vmem:[%s415] sm:$0xf] %vm364, %v413
      %417 = vrot.lane.b32.xlu0 %v368, 40
      %v418 = vpop.permute.xlu0 %417
      %s420 = scalar_lea.vmem %s293, 12
      %421 = vst.msk [vmem:[%s420] sm:$0xf] %vm364, %v418
      %p422 = scmp.lt.s32.totalorder %s21, 1
      %s423 = scalar_select %p422, %s21, 1
      %p424 = scmp.lt.s32.totalorder %s22, 0
      %s425 = scalar_select %p424, %s22, 0
      %s426 = smul.addr %s423, 4
      %s427 = sadd.s32 %s425, %s426
      %s428 = smul.addr %s427, 4
      %s429 = scalar_lea.vmem %s3, %s428
      %p430 = scmp.lt.s32.totalorder %s21, 1
      %s431 = scalar_select %p430, %s21, 1
      %p432 = scmp.lt.s32.totalorder %s22, 0
      %s433 = scalar_select %p432, %s22, 0
      %s434 = smul.addr %s431, 4
      %s435 = sadd.s32 %s433, %s434
      %s436 = smul.addr %s435, 4
      %s437 = scalar_lea.vmem %s4, %s436
      %p438 = scmp.lt.s32.totalorder %s21, 1
      %s439 = scalar_select %p438, %s21, 1
      %p440 = scmp.lt.s32.totalorder %s22, 0
      %s441 = scalar_select %p440, %s22, 0
      %s442 = smul.addr %s439, 4
      %s443 = sadd.s32 %s441, %s442
      %s444 = smul.addr %s443, 4
      %s445 = scalar_lea.vmem %s5, %s444
      // Predicated region
      $region33: #{transformer_forward.34} parent=31 // pred_check
        %p446 = pneg %p119
      $region34: #{transformer_forward.34} parent=31 // pred_check_branch
        %448 = sbr.rel (%p446) target = $region36
      $region35: #{transformer_forward.34} parent=31 // pred_region
        _
      $region36: #{transformer_forward.34} parent=31 // pred_fallthru
        _
      // Predicated region
      $region37: #{transformer_forward.34} parent=31 // pred_check
        %p449 = pneg %p147
      $region38: #{transformer_forward.34} parent=31 // pred_check_branch
        %451 = sbr.rel (%p449) target = $region40
      $region39: #{transformer_forward.34} parent=31 // pred_region
        _
      $region40: #{transformer_forward.34} parent=31 // pred_fallthru
        _
      // Predicated region
      $region41: #{transformer_forward.34} parent=31 // pred_check
        %p452 = pneg %p175
      $region42: #{transformer_forward.34} parent=31 // pred_check_branch
        %454 = sbr.rel (%p452) target = $region44
      $region43: #{transformer_forward.34} parent=31 // pred_region
        _
      $region44: #{transformer_forward.34} parent=31 // pred_fallthru
        _
    $region32: #{transformer_forward.34} parent=5 // pred_fallthru
      _
    %p455 = scmp.le.s32.totalorder 2, %s12
    // Predicated region
    $region45: #{transformer_forward.34} parent=5 // pred_check
      %p456 = pneg %p455
    $region46: #{transformer_forward.34} parent=5 // pred_check_branch
      %458 = sbr.rel (%p456) target = $region48
    $region47: #{transformer_forward.34} parent=5 // pred_region
      %s459 = ssub.s32 %s12, 2
      // Predicated region
      $region49: #{transformer_forward.34} parent=47 // pred_check
        %p460 = pneg %p125
      $region50: #{transformer_forward.34} parent=47 // pred_check_branch
        %462 = sbr.rel (%p460) target = $region52
      $region51: #{transformer_forward.34} parent=47 // pred_region
        %p463 = scmp.lt.s32.totalorder %s23, 1
        %s464 = scalar_select %p463, %s23, 1
        %p465 = scmp.lt.s32.totalorder %s24, 0
        %s466 = scalar_select %p465, %s24, 0
        %s467 = smul.addr %s464, 4
        %s468 = sadd.s32 %s466, %s467
        %s469 = smul.addr %s468, 4
        %s470 = scalar_lea.vmem %s3, %s469
      $region52: #{transformer_forward.34} parent=47 // pred_fallthru
        _
      // Predicated region
      $region53: #{transformer_forward.34} parent=47 // pred_check
        %p471 = pneg %p153
      $region54: #{transformer_forward.34} parent=47 // pred_check_branch
        %473 = sbr.rel (%p471) target = $region56
      $region55: #{transformer_forward.34} parent=47 // pred_region
        %p474 = scmp.lt.s32.totalorder %s23, 1
        %s475 = scalar_select %p474, %s23, 1
        %p476 = scmp.lt.s32.totalorder %s24, 0
        %s477 = scalar_select %p476, %s24, 0
        %s478 = smul.addr %s475, 4
        %s479 = sadd.s32 %s477, %s478
        %s480 = smul.addr %s479, 4
        %s481 = scalar_lea.vmem %s4, %s480
      $region56: #{transformer_forward.34} parent=47 // pred_fallthru
        _
      // Predicated region
      $region57: #{transformer_forward.34} parent=47 // pred_check
        %p482 = pneg %p181
      $region58: #{transformer_forward.34} parent=47 // pred_check_branch
        %484 = sbr.rel (%p482) target = $region60
      $region59: #{transformer_forward.34} parent=47 // pred_region
        %p485 = scmp.lt.s32.totalorder %s23, 1
        %s486 = scalar_select %p485, %s23, 1
        %p487 = scmp.lt.s32.totalorder %s24, 0
        %s488 = scalar_select %p487, %s24, 0
        %s489 = smul.addr %s486, 4
        %s490 = sadd.s32 %s488, %s489
        %s491 = smul.addr %s490, 4
        %s492 = scalar_lea.vmem %s5, %s491
      $region60: #{transformer_forward.34} parent=47 // pred_fallthru
        _
    $region48: #{transformer_forward.34} parent=5 // pred_fallthru
      _
  $region6: #{transformer_forward.34} parent=0 // loop_footer
    %s16 = sadd.s32 1, %s12
  $region7: #{transformer_forward.34} parent=0 // loop_footer_branch
    %11 = sbr.rel target = $region3
  $region8: #{transformer_forward.34} parent=0 // loop_exit
    _

// kernel: transformer_forward.37
$region0: #{transformer_forward.37}
  #allocation0 [shape = 'u32[]', space=smem, size = 0x4, offset = 0x4, fixed_abs, tag = 'smem constant byte address 0x4 - core index']
  #allocation1 [shape = 'u32[144,128]{1,0:T(1,128)}', space=vmem, size = 0x12000, scoped, tag = 'internal scratch']
  %s0 = inlined_call_operand.vmem [shape: bf16[2,8,32], index: 0, kind: input, shape index: {}]
  %s1 = inlined_call_operand.vmem [shape: bf16[32,32], index: 1, kind: input, shape index: {}]
  %s2 = inlined_call_operand.vmem [shape: f32[1,32], index: 2, kind: input, shape index: {}]
  %s3 = inlined_call_operand.vmem [shape: bf16[2,4,8,8], index: 3, kind: output, shape index: {}]
  %s4 = sld [smem:[#allocation0]]
  $region45: #{transformer_forward.37} parent=0
    _
  %s6 = ssub.s32 1, %s4
  %s7 = scalar_select 0, %s6, %s4
  loop: start=0, step=1, limit=4
  $region2: #{transformer_forward.37} parent=0 // loop_pre_header
    _
  $region3: #{transformer_forward.37} parent=0 // loop_header
    %s9 = sphi 0, %s13
    %p10 = scmp.ge.s32.totalorder %s9, 4
    %s16 = sphi 0, %s28
    %s17 = sphi 0, %s24
    %s18 = sphi 0, %s16
    %s19 = sphi 0, %s17
    %s20 = sphi 0, %s18
    %s21 = sphi 0, %s19
    %s33 = sphi 0, %s35
    %s36 = sphi 0, %s33
    %s37 = sphi 0, %s36
    %s53 = sphi 0, %s37
    %s57 = sphi 0, %s57
    %s59 = sphi 0, %s57
    %s60 = sphi 0, %s59
    %s74 = sphi 0, %s60
    %s78 = sphi 0, %s78
    %s80 = sphi 0, %s78
    %s81 = sphi 0, %s80
    %s95 = sphi 0, %s81
    %s103 = sphi 0, %s105
    %s106 = sphi 0, %s103
    %s107 = sphi 0, %s106
    %s123 = sphi 0, %s107
  $region4: #{transformer_forward.37} parent=0 // loop_header_branch
    %12 = sbr.rel (%p10) target = $region8
  $region5: #{transformer_forward.37} parent=0 // loop_body
    %s14 = ssub.s32 %s9, 1
    %s15 = ssub.s32 %s9, 2
    %s22 = sadd.s32 1, %s17
    %p23 = scmp.ge.s32.totalorder %s22, 1
    %s24 = scalar_select %p23, 0, %s22
    %s25 = sadd.s32 1, %s16
    %s26 = scalar_select %p23, %s25, %s16
    %p27 = scmp.ge.s32.totalorder %s26, 2
    %s28 = scalar_select %p27, 0, %s26
    %s29 = ssub.s32 %s16, %s28
    %s30 = ssub.s32 %s17, %s24
    %s31 = sor.u32 %s29, %s30
    %p32 = scmp.eq.s32.totalorder %s31, 0
    %s34 = sadd.s32 %s33, 1
    %s35 = scalar_select %p32, %s33, %s34
    %p38 = pneg %p32
    %p39 = scmp.eq.s32.totalorder %s9, 1
    %p40 = por %p38, %p39
    %p41 = scmp.ne.s32.totalorder %s33, %s36
    %p42 = scmp.eq.s32.totalorder %s9, 0
    %p43 = por %p41, %p42
    %p44 = scmp.ne.s32.totalorder %s33, %s36
    %p45 = scmp.eq.s32.totalorder %s14, 1
    %p46 = por %p44, %p45
    %p47 = scmp.ne.s32.totalorder %s36, %s37
    %p48 = scmp.eq.s32.totalorder %s14, 0
    %p49 = por %p47, %p48
    %p50 = scmp.ne.s32.totalorder %s36, %s37
    %p51 = scmp.eq.s32.totalorder %s15, 1
    %p52 = por %p50, %p51
    %p54 = scmp.ne.s32.totalorder %s37, %s53
    %p55 = scmp.eq.s32.totalorder %s15, 0
    %p56 = por %p54, %p55
    %s58 = sadd.s32 %s57, 1
    %p61 = scmp.eq.s32.totalorder %s9, 1
    %p62 = scmp.ne.s32.totalorder %s57, %s59
    %p63 = scmp.eq.s32.totalorder %s9, 0
    %p64 = por %p62, %p63
    %p65 = scmp.ne.s32.totalorder %s57, %s59
    %p66 = scmp.eq.s32.totalorder %s14, 1
    %p67 = por %p65, %p66
    %p68 = scmp.ne.s32.totalorder %s59, %s60
    %p69 = scmp.eq.s32.totalorder %s14, 0
    %p70 = por %p68, %p69
    %p71 = scmp.ne.s32.totalorder %s59, %s60
    %p72 = scmp.eq.s32.totalorder %s15, 1
    %p73 = por %p71, %p72
    %p75 = scmp.ne.s32.totalorder %s60, %s74
    %p76 = scmp.eq.s32.totalorder %s15, 0
    %p77 = por %p75, %p76
    %s79 = sadd.s32 %s78, 1
    %p82 = scmp.eq.s32.totalorder %s9, 1
    %p83 = scmp.ne.s32.totalorder %s78, %s80
    %p84 = scmp.eq.s32.totalorder %s9, 0
    %p85 = por %p83, %p84
    %p86 = scmp.ne.s32.totalorder %s78, %s80
    %p87 = scmp.eq.s32.totalorder %s14, 1
    %p88 = por %p86, %p87
    %p89 = scmp.ne.s32.totalorder %s80, %s81
    %p90 = scmp.eq.s32.totalorder %s14, 0
    %p91 = por %p89, %p90
    %p92 = scmp.ne.s32.totalorder %s80, %s81
    %p93 = scmp.eq.s32.totalorder %s15, 1
    %p94 = por %p92, %p93
    %p96 = scmp.ne.s32.totalorder %s81, %s95
    %p97 = scmp.eq.s32.totalorder %s15, 0
    %p98 = por %p96, %p97
    %s99 = ssub.s32 %s16, %s28
    %s100 = ssub.s32 %s17, %s24
    %s101 = sor.u32 %s99, %s100
    %p102 = scmp.eq.s32.totalorder %s101, 0
    %s104 = sadd.s32 %s103, 1
    %s105 = scalar_select %p102, %s103, %s104
    %p108 = pneg %p102
    %p109 = scmp.eq.s32.totalorder %s9, 1
    %p110 = por %p108, %p109
    %p111 = scmp.ne.s32.totalorder %s103, %s106
    %p112 = scmp.eq.s32.totalorder %s9, 0
    %p113 = por %p111, %p112
    %p114 = scmp.ne.s32.totalorder %s103, %s106
    %p115 = scmp.eq.s32.totalorder %s14, 1
    %p116 = por %p114, %p115
    %p117 = scmp.ne.s32.totalorder %s106, %s107
    %p118 = scmp.eq.s32.totalorder %s14, 0
    %p119 = por %p117, %p118
    %p120 = scmp.ne.s32.totalorder %s106, %s107
    %p121 = scmp.eq.s32.totalorder %s15, 1
    %p122 = por %p120, %p121
    %p124 = scmp.ne.s32.totalorder %s107, %s123
    %p125 = scmp.eq.s32.totalorder %s15, 0
    %p126 = por %p124, %p125
    %p127 = scmp.le.s32.totalorder 1, %s9
    %p128 = scmp.lt.s32.totalorder %s9, 3
    %p129 = pnand %p127, %p128
    %p130 = pneg %p129
    // Predicated region
    $region9: #{transformer_forward.37} parent=5 // pred_check
      _
    $region10: #{transformer_forward.37} parent=5 // pred_check_branch
      %132 = sbr.rel (%p129) target = $region12
    $region11: #{transformer_forward.37} parent=5 // pred_region
      %s133 = ssub.s32 %s9, 1
      // Predicated region
      $region13: #{transformer_forward.37} parent=11 // pred_check
        %p134 = pneg %p70
      $region14: #{transformer_forward.37} parent=11 // pred_check_branch
        %136 = sbr.rel (%p134) target = $region16
      $region15: #{transformer_forward.37} parent=11 // pred_region
        _
      $region16: #{transformer_forward.37} parent=11 // pred_fallthru
        _
      // Predicated region
      $region17: #{transformer_forward.37} parent=11 // pred_check
        %p137 = pneg %p91
      $region18: #{transformer_forward.37} parent=11 // pred_check_branch
        %139 = sbr.rel (%p137) target = $region20
      $region19: #{transformer_forward.37} parent=11 // pred_region
        _
      $region20: #{transformer_forward.37} parent=11 // pred_fallthru
        _
    $region12: #{transformer_forward.37} parent=5 // pred_fallthru
      _
    %p140 = scmp.lt.s32.totalorder %s9, 2
    // Predicated region
    $region21: #{transformer_forward.37} parent=5 // pred_check
      %p141 = pneg %p140
    $region22: #{transformer_forward.37} parent=5 // pred_check_branch
      %143 = sbr.rel (%p141) target = $region24
    $region23: #{transformer_forward.37} parent=5 // pred_region
      // Predicated region
      $region25: #{transformer_forward.37} parent=23 // pred_check
        %p144 = pneg %p43
      $region26: #{transformer_forward.37} parent=23 // pred_check_branch
        %146 = sbr.rel (%p144) target = $region28
      $region27: #{transformer_forward.37} parent=23 // pred_region
        %p147 = scmp.lt.s32.totalorder %s16, 1
        %s148 = scalar_select %p147, %s16, 1
        %p149 = scmp.lt.s32.totalorder %s17, 0
        %s150 = scalar_select %p149, %s17, 0
        %s151 = sadd.s32 %s150, %s148
        %s152 = smul.addr %s151, 4
        %s153 = scalar_lea.vmem %s0, %s152
      $region28: #{transformer_forward.37} parent=23 // pred_fallthru
        _
    $region24: #{transformer_forward.37} parent=5 // pred_fallthru
      _
    %p154 = scmp.le.s32.totalorder 1, %s9
    %p155 = scmp.lt.s32.totalorder %s9, 3
    %p156 = pnand %p154, %p155
    %p157 = pneg %p156
    // Predicated region
    $region29: #{transformer_forward.37} parent=5 // pred_check
      _
    $region30: #{transformer_forward.37} parent=5 // pred_check_branch
      %159 = sbr.rel (%p156) target = $region32
    $region31: #{transformer_forward.37} parent=5 // pred_region
      %s160 = ssub.s32 %s9, 1
      %p161 = scmp.lt.s32.totalorder %s18, 1
      %s162 = scalar_select %p161, %s18, 1
      %p163 = scmp.lt.s32.totalorder %s19, 0
      %s164 = scalar_select %p163, %s19, 0
      %s165 = sadd.s32 %s164, %s162
      %s166 = smul.addr %s165, 4
      %s167 = scalar_lea.vmem %s0, %s166
      %p168 = pneg %p49
      %p169 = pneg %p46
      %p170 = pneg %p70
      %p171 = pneg %p67
      %p172 = pneg %p91
      %p173 = pneg %p88
      %p174 = pneg %p119
      %p175 = pneg %p116
      %p176 = scmp.lt.s32.totalorder %s18, 1
      %s177 = scalar_select %p176, %s18, 1
      %p178 = scmp.lt.s32.totalorder %s19, 0
      %s179 = scalar_select %p178, %s19, 0
      %s180 = smul.addr %s177, 4
      %s181 = sadd.s32 %s179, %s180
      %s182 = smul.addr %s181, 4
      %s183 = scalar_lea.vmem %s3, %s182
      %p184 = scmp.lt.s32.totalorder %s18, 1
      %s185 = scalar_select %p184, %s18, 1
      %p186 = scmp.lt.s32.totalorder %s19, 0
      %s187 = scalar_select %p186, %s19, 0
      %s188 = sadd.s32 %s187, %s185
      %s189 = smul.addr %s188, 4
      %s190 = scalar_lea.vmem %s0, %s189
      %p191 = scmp.lt.s32.totalorder %s18, 1
      %s192 = scalar_select %p191, %s18, 1
      %p193 = scmp.lt.s32.totalorder %s19, 0
      %s194 = scalar_select %p193, %s19, 0
      %s195 = smul.addr %s192, 4
      %s196 = sadd.s32 %s194, %s195
      %s197 = smul.addr %s196, 4
      %s198 = scalar_lea.vmem %s3, %s197
      %v200 = vld [vmem:[%s190] sm:$0xf]
      %v201 = vld [vmem:[%s1] sm:$0xf]
      %v202 = vld [vmem:[%s1 + $0x4] sm:$0xf]
      %v203 = vld [vmem:[%s1 + $0x8] sm:$0xf]
      %v204 = vld [vmem:[%s1 + $0xc] sm:$0xf]
      %v205 = vld [vmem:[%s2] sm:$0x1]
      %v207 = vlaneseq
      %v208 = vshrl.u32 %v207, 7
      %v209 = vsub.s32 0, %v208
      %v210 = vrot.slane %v205, %v209
      %v216 = vunpack.c.l.b16 %v201
      %v217 = vunpack.c.l.b16 %v202
      %v218 = vunpack.c.l.b16 %v203
      %v219 = vunpack.c.l.b16 %v204
      %v220 = vpack.c.b16 %v217, %v216
      %v221 = vpack.c.b16 %v219, %v218
      %vm224 = vcmask 261120
      %v226 = vsel %vm224, %v200, 0
      %228 = vmatprep.subr.bf16.mxu0 0
      %229 = vmatpush1.bf16.msra.mxu0 %v220
      %230 = vmatprep.subr.bf16.mxu0 0
      %231 = vmatpush1.bf16.msra.mxu0 %v221
      %232 = vmatprep.subr.bf16.mxu0 0
      %233 = vmatpush1.bf16.msra.mxu0 0
      %234 = vmatprep.subr.bf16.mxu0 0
      %235 = vmatpush1.bf16.msra.mxu0 0
      %236 = vmatprep.subr.bf16.mxu0 0
      %237 = vmatpush1.bf16.msra.mxu0 0
      %238 = vmatprep.subr.bf16.mxu0 0
      %239 = vmatpush1.bf16.msra.mxu0 0
      %240 = vmatprep.subr.bf16.mxu0 0
      %241 = vmatpush1.bf16.msra.mxu0 0
      %242 = vmatprep.subr.bf16.mxu0 0
      %243 = vmatpush1.bf16.msra.mxu0 0
      %244 = vmatprep.subr.bf16.mxu0 0
      %245 = vmatpush1.bf16.msra.mxu0 0
      %246 = vmatprep.subr.bf16.mxu0 0
      %247 = vmatpush1.bf16.msra.mxu0 0
      %248 = vmatprep.subr.bf16.mxu0 0
      %249 = vmatpush1.bf16.msra.mxu0 0
      %250 = vmatprep.subr.bf16.mxu0 0
      %251 = vmatpush1.bf16.msra.mxu0 0
      %252 = vmatprep.subr.bf16.mxu0 0
      %253 = vmatpush1.bf16.msra.mxu0 0
      %254 = vmatprep.subr.bf16.mxu0 0
      %255 = vmatpush1.bf16.msra.mxu0 0
      %256 = vmatprep.subr.bf16.mxu0 0
      %257 = vmatpush1.bf16.msra.mxu0 0
      %258 = vmatprep.subr.bf16.mxu0 0
      %259 = vmatpush1.bf16.msra.mxu0 0
      %260 = vmatprep.mubr.bf16.mxu0 0
      %261 = vmatmul.mubr.bf16.gmra.mrb[0].mxu0 %v226
      %v262 = vpop.f32.mrb[0].mxu0
      %v263 = vadd.f32 %v210, %v262
      %v264 = vpop.f32.mrb[0].mxu0
      %v265 = vpop.f32.mrb[0].mxu0
      %v266 = vpop.f32.mrb[0].mxu0
      %267 = vdwg.mxu0
      %v268 = vpack.c.bf16 %v263, %v263
      %vm269 = vcmask 60416
      %270 = vst.msk [vmem:[%s198] sm:$0xf] %vm269, %v268
      %v272 = vunpack.c.l.b16 %v268
      %v273 = vpack.c.b16 %v272, %v272
      %274 = vrot.lane.b32.xlu0 %v273, 120
      %v275 = vpop.permute.xlu0 %274
      %s277 = scalar_lea.vmem %s198, 4
      %278 = vst.msk [vmem:[%s277] sm:$0xf] %vm269, %v275
      %279 = vrot.lane.b32.xlu0 %v273, 112
      %v280 = vpop.permute.xlu0 %279
      %s282 = scalar_lea.vmem %s198, 8
      %283 = vst.msk [vmem:[%s282] sm:$0xf] %vm269, %v280
      %284 = vrot.lane.b32.xlu0 %v273, 104
      %v285 = vpop.permute.xlu0 %284
      %s287 = scalar_lea.vmem %s198, 12
      %288 = vst.msk [vmem:[%s287] sm:$0xf] %vm269, %v285
      %p289 = scmp.lt.s32.totalorder %s18, 1
      %s290 = scalar_select %p289, %s18, 1
      %p291 = scmp.lt.s32.totalorder %s19, 0
      %s292 = scalar_select %p291, %s19, 0
      %s293 = smul.addr %s290, 4
      %s294 = sadd.s32 %s292, %s293
      %s295 = smul.addr %s294, 4
      %s296 = scalar_lea.vmem %s3, %s295
      // Predicated region
      $region33: #{transformer_forward.37} parent=31 // pred_check
        %p297 = pneg %p116
      $region34: #{transformer_forward.37} parent=31 // pred_check_branch
        %299 = sbr.rel (%p297) target = $region36
      $region35: #{transformer_forward.37} parent=31 // pred_region
        _
      $region36: #{transformer_forward.37} parent=31 // pred_fallthru
        _
    $region32: #{transformer_forward.37} parent=5 // pred_fallthru
      _
    %p300 = scmp.le.s32.totalorder 2, %s9
    // Predicated region
    $region37: #{transformer_forward.37} parent=5 // pred_check
      %p301 = pneg %p300
    $region38: #{transformer_forward.37} parent=5 // pred_check_branch
      %303 = sbr.rel (%p301) target = $region40
    $region39: #{transformer_forward.37} parent=5 // pred_region
      %s304 = ssub.s32 %s9, 2
      // Predicated region
      $region41: #{transformer_forward.37} parent=39 // pred_check
        %p305 = pneg %p122
      $region42: #{transformer_forward.37} parent=39 // pred_check_branch
        %307 = sbr.rel (%p305) target = $region44
      $region43: #{transformer_forward.37} parent=39 // pred_region
        %p308 = scmp.lt.s32.totalorder %s20, 1
        %s309 = scalar_select %p308, %s20, 1
        %p310 = scmp.lt.s32.totalorder %s21, 0
        %s311 = scalar_select %p310, %s21, 0
        %s312 = smul.addr %s309, 4
        %s313 = sadd.s32 %s311, %s312
        %s314 = smul.addr %s313, 4
        %s315 = scalar_lea.vmem %s3, %s314
      $region44: #{transformer_forward.37} parent=39 // pred_fallthru
        _
    $region40: #{transformer_forward.37} parent=5 // pred_fallthru
      _
  $region6: #{transformer_forward.37} parent=0 // loop_footer
    %s13 = sadd.s32 1, %s9
  $region7: #{transformer_forward.37} parent=0 // loop_footer_branch
    %8 = sbr.rel target = $region3
  $region8: #{transformer_forward.37} parent=0 // loop_exit
    _

// kernel: transformer_forward.35
$region0: #{transformer_forward.35}
  #allocation0 [shape = 'u32[]', space=smem, size = 0x4, offset = 0x4, fixed_abs, tag = 'smem constant byte address 0x4 - core index']
  #allocation1 [shape = 'u32[144,128]{1,0:T(1,128)}', space=vmem, size = 0x12000, scoped, tag = 'internal scratch']
  %s0 = inlined_call_operand.vmem [shape: bf16[2,4,8,8], index: 0, kind: input, shape index: {}]
  %s1 = inlined_call_operand.vmem [shape: bf16[2,4,8,8], index: 1, kind: input, shape index: {}]
  %s2 = inlined_call_operand.vmem [shape: bf16[2,4,8,8], index: 2, kind: input, shape index: {}]
  %s3 = inlined_call_operand.vmem [shape: f32[2,1,8], index: 3, kind: input, shape index: {}]
  %s4 = inlined_call_operand.vmem [shape: bf16[2,4,8,8], index: 4, kind: output, shape index: {}]
  %s5 = sld [smem:[#allocation0]]
  $region49: #{transformer_forward.35} parent=0
    _
  %s7 = ssub.s32 1, %s5
  %s8 = scalar_select 0, %s7, %s5
  loop: start=0, step=1, limit=10
  $region2: #{transformer_forward.35} parent=0 // loop_pre_header
    _
  $region3: #{transformer_forward.35} parent=0 // loop_header
    %s10 = sphi 0, %s14
    %p11 = scmp.ge.s32.totalorder %s10, 10
    %s17 = sphi 0, %s29
    %s18 = sphi 0, %s25
    %s19 = sphi 0, %s17
    %s20 = sphi 0, %s18
    %s21 = sphi 0, %s19
    %s22 = sphi 0, %s20
    %s34 = sphi 0, %s36
    %s37 = sphi 0, %s34
    %s38 = sphi 0, %s37
    %s54 = sphi 0, %s38
    %s62 = sphi 0, %s64
    %s65 = sphi 0, %s62
    %s66 = sphi 0, %s65
    %s82 = sphi 0, %s66
    %s90 = sphi 0, %s92
    %s93 = sphi 0, %s90
    %s94 = sphi 0, %s93
    %s110 = sphi 0, %s94
    %s116 = sphi 0, %s118
    %s119 = sphi 0, %s116
    %s120 = sphi 0, %s119
    %s136 = sphi 0, %s120
    %s144 = sphi 0, %s146
    %s147 = sphi 0, %s144
    %s148 = sphi 0, %s147
    %s164 = sphi 0, %s148
  $region4: #{transformer_forward.35} parent=0 // loop_header_branch
    %13 = sbr.rel (%p11) target = $region8
  $region5: #{transformer_forward.35} parent=0 // loop_body
    %s15 = ssub.s32 %s10, 1
    %s16 = ssub.s32 %s10, 2
    %s23 = sadd.s32 1, %s18
    %p24 = scmp.ge.s32.totalorder %s23, 4
    %s25 = scalar_select %p24, 0, %s23
    %s26 = sadd.s32 1, %s17
    %s27 = scalar_select %p24, %s26, %s17
    %p28 = scmp.ge.s32.totalorder %s27, 2
    %s29 = scalar_select %p28, 0, %s27
    %s30 = ssub.s32 %s17, %s29
    %s31 = ssub.s32 %s18, %s25
    %s32 = sor.u32 %s30, %s31
    %p33 = scmp.eq.s32.totalorder %s32, 0
    %s35 = sadd.s32 %s34, 1
    %s36 = scalar_select %p33, %s34, %s35
    %p39 = pneg %p33
    %p40 = scmp.eq.s32.totalorder %s10, 7
    %p41 = por %p39, %p40
    %p42 = scmp.ne.s32.totalorder %s34, %s37
    %p43 = scmp.eq.s32.totalorder %s10, 0
    %p44 = por %p42, %p43
    %p45 = scmp.ne.s32.totalorder %s34, %s37
    %p46 = scmp.eq.s32.totalorder %s15, 7
    %p47 = por %p45, %p46
    %p48 = scmp.ne.s32.totalorder %s37, %s38
    %p49 = scmp.eq.s32.totalorder %s15, 0
    %p50 = por %p48, %p49
    %p51 = scmp.ne.s32.totalorder %s37, %s38
    %p52 = scmp.eq.s32.totalorder %s16, 7
    %p53 = por %p51, %p52
    %p55 = scmp.ne.s32.totalorder %s38, %s54
    %p56 = scmp.eq.s32.totalorder %s16, 0
    %p57 = por %p55, %p56
    %s58 = ssub.s32 %s17, %s29
    %s59 = ssub.s32 %s18, %s25
    %s60 = sor.u32 %s58, %s59
    %p61 = scmp.eq.s32.totalorder %s60, 0
    %s63 = sadd.s32 %s62, 1
    %s64 = scalar_select %p61, %s62, %s63
    %p67 = pneg %p61
    %p68 = scmp.eq.s32.totalorder %s10, 7
    %p69 = por %p67, %p68
    %p70 = scmp.ne.s32.totalorder %s62, %s65
    %p71 = scmp.eq.s32.totalorder %s10, 0
    %p72 = por %p70, %p71
    %p73 = scmp.ne.s32.totalorder %s62, %s65
    %p74 = scmp.eq.s32.totalorder %s15, 7
    %p75 = por %p73, %p74
    %p76 = scmp.ne.s32.totalorder %s65, %s66
    %p77 = scmp.eq.s32.totalorder %s15, 0
    %p78 = por %p76, %p77
    %p79 = scmp.ne.s32.totalorder %s65, %s66
    %p80 = scmp.eq.s32.totalorder %s16, 7
    %p81 = por %p79, %p80
    %p83 = scmp.ne.s32.totalorder %s66, %s82
    %p84 = scmp.eq.s32.totalorder %s16, 0
    %p85 = por %p83, %p84
    %s86 = ssub.s32 %s17, %s29
    %s87 = ssub.s32 %s18, %s25
    %s88 = sor.u32 %s86, %s87
    %p89 = scmp.eq.s32.totalorder %s88, 0
    %s91 = sadd.s32 %s90, 1
    %s92 = scalar_select %p89, %s90, %s91
    %p95 = pneg %p89
    %p96 = scmp.eq.s32.totalorder %s10, 7
    %p97 = por %p95, %p96
    %p98 = scmp.ne.s32.totalorder %s90, %s93
    %p99 = scmp.eq.s32.totalorder %s10, 0
    %p100 = por %p98, %p99
    %p101 = scmp.ne.s32.totalorder %s90, %s93
    %p102 = scmp.eq.s32.totalorder %s15, 7
    %p103 = por %p101, %p102
    %p104 = scmp.ne.s32.totalorder %s93, %s94
    %p105 = scmp.eq.s32.totalorder %s15, 0
    %p106 = por %p104, %p105
    %p107 = scmp.ne.s32.totalorder %s93, %s94
    %p108 = scmp.eq.s32.totalorder %s16, 7
    %p109 = por %p107, %p108
    %p111 = scmp.ne.s32.totalorder %s94, %s110
    %p112 = scmp.eq.s32.totalorder %s16, 0
    %p113 = por %p111, %p112
    %s114 = ssub.s32 %s17, %s29
    %p115 = scmp.eq.s32.totalorder %s114, 0
    %s117 = sadd.s32 %s116, 1
    %s118 = scalar_select %p115, %s116, %s117
    %p121 = pneg %p115
    %p122 = scmp.eq.s32.totalorder %s10, 7
    %p123 = por %p121, %p122
    %p124 = scmp.ne.s32.totalorder %s116, %s119
    %p125 = scmp.eq.s32.totalorder %s10, 0
    %p126 = por %p124, %p125
    %p127 = scmp.ne.s32.totalorder %s116, %s119
    %p128 = scmp.eq.s32.totalorder %s15, 7
    %p129 = por %p127, %p128
    %p130 = scmp.ne.s32.totalorder %s119, %s120
    %p131 = scmp.eq.s32.totalorder %s15, 0
    %p132 = por %p130, %p131
    %p133 = scmp.ne.s32.totalorder %s119, %s120
    %p134 = scmp.eq.s32.totalorder %s16, 7
    %p135 = por %p133, %p134
    %p137 = scmp.ne.s32.totalorder %s120, %s136
    %p138 = scmp.eq.s32.totalorder %s16, 0
    %p139 = por %p137, %p138
    %s140 = ssub.s32 %s17, %s29
    %s141 = ssub.s32 %s18, %s25
    %s142 = sor.u32 %s140, %s141
    %p143 = scmp.eq.s32.totalorder %s142, 0
    %s145 = sadd.s32 %s144, 1
    %s146 = scalar_select %p143, %s144, %s145
    %p149 = pneg %p143
    %p150 = scmp.eq.s32.totalorder %s10, 7
    %p151 = por %p149, %p150
    %p152 = scmp.ne.s32.totalorder %s144, %s147
    %p153 = scmp.eq.s32.totalorder %s10, 0
    %p154 = por %p152, %p153
    %p155 = scmp.ne.s32.totalorder %s144, %s147
    %p156 = scmp.eq.s32.totalorder %s15, 7
    %p157 = por %p155, %p156
    %p158 = scmp.ne.s32.totalorder %s147, %s148
    %p159 = scmp.eq.s32.totalorder %s15, 0
    %p160 = por %p158, %p159
    %p161 = scmp.ne.s32.totalorder %s147, %s148
    %p162 = scmp.eq.s32.totalorder %s16, 7
    %p163 = por %p161, %p162
    %p165 = scmp.ne.s32.totalorder %s148, %s164
    %p166 = scmp.eq.s32.totalorder %s16, 0
    %p167 = por %p165, %p166
    %p168 = scmp.le.s32.totalorder 1, %s10
    %p169 = scmp.lt.s32.totalorder %s10, 9
    %p170 = pnand %p168, %p169
    %p171 = pneg %p170
    // Predicated region
    $region9: #{transformer_forward.35} parent=5 // pred_check
      _
    $region10: #{transformer_forward.35} parent=5 // pred_check_branch
      %173 = sbr.rel (%p170) target = $region12
    $region11: #{transformer_forward.35} parent=5 // pred_region
      %s174 = ssub.s32 %s10, 1
    $region12: #{transformer_forward.35} parent=5 // pred_fallthru
      _
    %p175 = scmp.lt.s32.totalorder %s10, 8
    // Predicated region
    $region13: #{transformer_forward.35} parent=5 // pred_check
      %p176 = pneg %p175
    $region14: #{transformer_forward.35} parent=5 // pred_check_branch
      %178 = sbr.rel (%p176) target = $region16
    $region15: #{transformer_forward.35} parent=5 // pred_region
      // Predicated region
      $region17: #{transformer_forward.35} parent=15 // pred_check
        %p179 = pneg %p44
      $region18: #{transformer_forward.35} parent=15 // pred_check_branch
        %181 = sbr.rel (%p179) target = $region20
      $region19: #{transformer_forward.35} parent=15 // pred_region
        %p182 = scmp.lt.s32.totalorder %s17, 1
        %s183 = scalar_select %p182, %s17, 1
        %p184 = scmp.lt.s32.totalorder %s18, 3
        %s185 = scalar_select %p184, %s18, 3
        %s186 = smul.addr %s183, 4
        %s187 = sadd.s32 %s185, %s186
        %s188 = smul.addr %s187, 4
        %s189 = scalar_lea.vmem %s0, %s188
      $region20: #{transformer_forward.35} parent=15 // pred_fallthru
        _
      // Predicated region
      $region21: #{transformer_forward.35} parent=15 // pred_check
        %p190 = pneg %p72
      $region22: #{transformer_forward.35} parent=15 // pred_check_branch
        %192 = sbr.rel (%p190) target = $region24
      $region23: #{transformer_forward.35} parent=15 // pred_region
        %p193 = scmp.lt.s32.totalorder %s17, 1
        %s194 = scalar_select %p193, %s17, 1
        %p195 = scmp.lt.s32.totalorder %s18, 3
        %s196 = scalar_select %p195, %s18, 3
        %s197 = smul.addr %s194, 4
        %s198 = sadd.s32 %s196, %s197
        %s199 = smul.addr %s198, 4
        %s200 = scalar_lea.vmem %s1, %s199
      $region24: #{transformer_forward.35} parent=15 // pred_fallthru
        _
      // Predicated region
      $region25: #{transformer_forward.35} parent=15 // pred_check
        %p201 = pneg %p100
      $region26: #{transformer_forward.35} parent=15 // pred_check_branch
        %203 = sbr.rel (%p201) target = $region28
      $region27: #{transformer_forward.35} parent=15 // pred_region
        %p204 = scmp.lt.s32.totalorder %s17, 1
        %s205 = scalar_select %p204, %s17, 1
        %p206 = scmp.lt.s32.totalorder %s18, 3
        %s207 = scalar_select %p206, %s18, 3
        %s208 = smul.addr %s205, 4
        %s209 = sadd.s32 %s207, %s208
        %s210 = smul.addr %s209, 4
        %s211 = scalar_lea.vmem %s2, %s210
      $region28: #{transformer_forward.35} parent=15 // pred_fallthru
        _
      // Predicated region
      $region29: #{transformer_forward.35} parent=15 // pred_check
        %p212 = pneg %p126
      $region30: #{transformer_forward.35} parent=15 // pred_check_branch
        %214 = sbr.rel (%p212) target = $region32
      $region31: #{transformer_forward.35} parent=15 // pred_region
        %p215 = scmp.lt.s32.totalorder %s17, 1
        %s216 = scalar_select %p215, %s17, 1
        %s217 = scalar_lea.vmem %s3, %s216
      $region32: #{transformer_forward.35} parent=15 // pred_fallthru
        _
    $region16: #{transformer_forward.35} parent=5 // pred_fallthru
      _
    %p218 = scmp.le.s32.totalorder 1, %s10
    %p219 = scmp.lt.s32.totalorder %s10, 9
    %p220 = pnand %p218, %p219
    %p221 = pneg %p220
    // Predicated region
    $region33: #{transformer_forward.35} parent=5 // pred_check
      _
    $region34: #{transformer_forward.35} parent=5 // pred_check_branch
      %223 = sbr.rel (%p220) target = $region36
    $region35: #{transformer_forward.35} parent=5 // pred_region
      %s224 = ssub.s32 %s10, 1
      %p225 = scmp.lt.s32.totalorder %s19, 1
      %s226 = scalar_select %p225, %s19, 1
      %p227 = scmp.lt.s32.totalorder %s20, 3
      %s228 = scalar_select %p227, %s20, 3
      %s229 = smul.addr %s226, 4
      %s230 = sadd.s32 %s228, %s229
      %s231 = smul.addr %s230, 4
      %s232 = scalar_lea.vmem %s0, %s231
      %p233 = pneg %p50
      %p234 = pneg %p47
      %p235 = scmp.lt.s32.totalorder %s19, 1
      %s236 = scalar_select %p235, %s19, 1
      %p237 = scmp.lt.s32.totalorder %s20, 3
      %s238 = scalar_select %p237, %s20, 3
      %s239 = smul.addr %s236, 4
      %s240 = sadd.s32 %s238, %s239
      %s241 = smul.addr %s240, 4
      %s242 = scalar_lea.vmem %s1, %s241
      %p243 = pneg %p78
      %p244 = pneg %p75
      %p245 = scmp.lt.s32.totalorder %s19, 1
      %s246 = scalar_select %p245, %s19, 1
      %p247 = scmp.lt.s32.totalorder %s20, 3
      %s248 = scalar_select %p247, %s20, 3
      %s249 = smul.addr %s246, 4
      %s250 = sadd.s32 %s248, %s249
      %s251 = smul.addr %s250, 4
      %s252 = scalar_lea.vmem %s2, %s251
      %p253 = pneg %p106
      %p254 = pneg %p103
      %p255 = scmp.lt.s32.totalorder %s19, 1
      %s256 = scalar_select %p255, %s19, 1
      %s257 = scalar_lea.vmem %s3, %s256
      %p258 = pneg %p132
      %p259 = pneg %p129
      %p260 = pneg %p160
      %p261 = pneg %p157
      %p262 = scmp.lt.s32.totalorder %s19, 1
      %s263 = scalar_select %p262, %s19, 1
      %p264 = scmp.lt.s32.totalorder %s20, 3
      %s265 = scalar_select %p264, %s20, 3
      %s266 = smul.addr %s263, 4
      %s267 = sadd.s32 %s265, %s266
      %s268 = smul.addr %s267, 4
      %s269 = scalar_lea.vmem %s4, %s268
      %p270 = scmp.lt.s32.totalorder %s19, 1
      %s271 = scalar_select %p270, %s19, 1
      %p272 = scmp.lt.s32.totalorder %s20, 3
      %s273 = scalar_select %p272, %s20, 3
      %s274 = smul.addr %s271, 4
      %s275 = sadd.s32 %s273, %s274
      %s276 = smul.addr %s275, 4
      %s277 = scalar_lea.vmem %s0, %s276
      %p278 = scmp.lt.s32.totalorder %s19, 1
      %s279 = scalar_select %p278, %s19, 1
      %p280 = scmp.lt.s32.totalorder %s20, 3
      %s281 = scalar_select %p280, %s20, 3
      %s282 = smul.addr %s279, 4
      %s283 = sadd.s32 %s281, %s282
      %s284 = smul.addr %s283, 4
      %s285 = scalar_lea.vmem %s1, %s284
      %p286 = scmp.lt.s32.totalorder %s19, 1
      %s287 = scalar_select %p286, %s19, 1
      %p288 = scmp.lt.s32.totalorder %s20, 3
      %s289 = scalar_select %p288, %s20, 3
      %s290 = smul.addr %s287, 4
      %s291 = sadd.s32 %s289, %s290
      %s292 = smul.addr %s291, 4
      %s293 = scalar_lea.vmem %s2, %s292
      %p294 = scmp.lt.s32.totalorder %s19, 1
      %s295 = scalar_select %p294, %s19, 1
      %s296 = scalar_lea.vmem %s3, %s295
      %p297 = scmp.lt.s32.totalorder %s19, 1
      %s298 = scalar_select %p297, %s19, 1
      %p299 = scmp.lt.s32.totalorder %s20, 3
      %s300 = scalar_select %p299, %s20, 3
      %s301 = smul.addr %s298, 4
      %s302 = sadd.s32 %s300, %s301
      %s303 = smul.addr %s302, 4
      %s304 = scalar_lea.vmem %s4, %s303
      %v307 = vld [vmem:[%s277] sm:$0xf]
      %v308 = vmul.bf16 %v307, 1052065461
      %v309 = vld [vmem:[%s285] sm:$0xf]
      %v310 = vld [vmem:[%s293] sm:$0xf]
      %v311 = vld [vmem:[%s296] sm:$0x1]
      %v313 = vlaneseq
      %v314 = vshrl.u32 %v313, 7
      %v315 = vsub.s32 0, %v314
      %v316 = vrot.slane %v311, %v315
      %vm318 = vcmask 64512
      %v320 = vsel %vm318, %v308, 0
      %v323 = vsel %vm318, %v309, 0
      %325 = vmatprep.subr.bf16.mxu0 0
      %326 = vmatpush1.bf16.xpose.msra.mxu0 %v323
      %327 = vmatprep.subr.bf16.mxu0 0
      %328 = vmatpush1.bf16.xpose.msra.mxu0 0
      %329 = vmatprep.subr.bf16.mxu0 0
      %330 = vmatpush1.bf16.xpose.msra.mxu0 0
      %331 = vmatprep.subr.bf16.mxu0 0
      %332 = vmatpush1.bf16.xpose.msra.mxu0 0
      %333 = vmatprep.subr.bf16.mxu0 0
      %334 = vmatpush1.bf16.xpose.msra.mxu0 0
      %335 = vmatprep.subr.bf16.mxu0 0
      %336 = vmatpush1.bf16.xpose.msra.mxu0 0
      %337 = vmatprep.subr.bf16.mxu0 0
      %338 = vmatpush1.bf16.xpose.msra.mxu0 0
      %339 = vmatprep.subr.bf16.mxu0 0
      %340 = vmatpush1.bf16.xpose.msra.mxu0 0
      %341 = vmatprep.subr.bf16.mxu0 0
      %342 = vmatpush1.bf16.xpose.msra.mxu0 0
      %343 = vmatprep.subr.bf16.mxu0 0
      %344 = vmatpush1.bf16.xpose.msra.mxu0 0
      %345 = vmatprep.subr.bf16.mxu0 0
      %346 = vmatpush1.bf16.xpose.msra.mxu0 0
      %347 = vmatprep.subr.bf16.mxu0 0
      %348 = vmatpush1.bf16.xpose.msra.mxu0 0
      %349 = vmatprep.subr.bf16.mxu0 0
      %350 = vmatpush1.bf16.xpose.msra.mxu0 0
      %351 = vmatprep.subr.bf16.mxu0 0
      %352 = vmatpush1.bf16.xpose.msra.mxu0 0
      %353 = vmatprep.subr.bf16.mxu0 0
      %354 = vmatpush1.bf16.xpose.msra.mxu0 0
      %355 = vmatprep.subr.bf16.mxu0 0
      %356 = vmatpush1.bf16.xpose.msra.mxu0 0
      %357 = vmatprep.mubr.bf16.mxu0 0
      %358 = vmatmul.mubr.bf16.gmra.mrb[0].mxu0 %v320
      %v359 = vpop.f32.mrb[0].mxu0
      %v360 = vadd.f32 %v316, %v359
      %v361 = vpop.f32.mrb[0].mxu0
      %v362 = vpop.f32.mrb[0].mxu0
      %v363 = vpop.f32.mrb[0].mxu0
      %364 = vdwg.mxu0
      %v365 = vlaneseq
      %v366 = vshrl.u32 %v365, 7
      %v367 = vlaneseq
      %v368 = vand.u32 %v367, 127
      %vm369 = vcmp.le.s32.totalorder %v368, %v366
      %v370 = vsel %vm369, %v360, -1e+09
      %v371 = vsel %vm318, %v370, -inf
      %372 = vmax.xlane.f32.xlu0 %v371
      %v373 = vpop.xlane.xlu0 %372
      %v374 = vsub.f32 %v370, %v373
      %v375 = vmul.f32 %v374, 1.442695
      %v376 = vpow.pop %v375
      %v377 = vpack.c.bf16 %v376, %v376
      %v379 = vsel %vm318, %v377, 0
      %vm381 = vcmask 1043456
      %v383 = vsel %vm381, %v310, 0
      %385 = vmatprep.subr.bf16.mxu0 0
      %386 = vmatpush1.bf16.msra.mxu0 %v383
      %387 = vmatprep.subr.bf16.mxu0 0
      %388 = vmatpush1.bf16.msra.mxu0 0
      %389 = vmatprep.subr.bf16.mxu0 0
      %390 = vmatpush1.bf16.msra.mxu0 0
      %391 = vmatprep.subr.bf16.mxu0 0
      %392 = vmatpush1.bf16.msra.mxu0 0
      %393 = vmatprep.subr.bf16.mxu0 0
      %394 = vmatpush1.bf16.msra.mxu0 0
      %395 = vmatprep.subr.bf16.mxu0 0
      %396 = vmatpush1.bf16.msra.mxu0 0
      %397 = vmatprep.subr.bf16.mxu0 0
      %398 = vmatpush1.bf16.msra.mxu0 0
      %399 = vmatprep.subr.bf16.mxu0 0
      %400 = vmatpush1.bf16.msra.mxu0 0
      %401 = vmatprep.subr.bf16.mxu0 0
      %402 = vmatpush1.bf16.msra.mxu0 0
      %403 = vmatprep.subr.bf16.mxu0 0
      %404 = vmatpush1.bf16.msra.mxu0 0
      %405 = vmatprep.subr.bf16.mxu0 0
      %406 = vmatpush1.bf16.msra.mxu0 0
      %407 = vmatprep.subr.bf16.mxu0 0
      %408 = vmatpush1.bf16.msra.mxu0 0
      %409 = vmatprep.subr.bf16.mxu0 0
      %410 = vmatpush1.bf16.msra.mxu0 0
      %411 = vmatprep.subr.bf16.mxu0 0
      %412 = vmatpush1.bf16.msra.mxu0 0
      %413 = vmatprep.subr.bf16.mxu0 0
      %414 = vmatpush1.bf16.msra.mxu0 0
      %415 = vmatprep.subr.bf16.mxu0 0
      %416 = vmatpush1.bf16.msra.mxu0 0
      %417 = vmatprep.mubr.bf16.mxu0 0
      %418 = vmatmul.mubr.bf16.gmra.mrb[0].mxu0 %v379
      %v419 = vpop.f32.mrb[0].mxu0
      %v420 = vadd.f32 0.0, %v419
      %v421 = vpop.f32.mrb[0].mxu0
      %v422 = vpop.f32.mrb[0].mxu0
      %v423 = vpop.f32.mrb[0].mxu0
      %424 = vdwg.mxu0
      %v425 = vsel %vm318, %v376, 0.0
      %426 = vadd.xlane.f32.xlu0 %v425
      %v427 = vpop.xlane.xlu0 %426
      %v428 = vrcp.pop %v427
      %v429 = vmul.f32 %v420, %v428
      %v430 = vpack.c.bf16 %v429, %v429
      %vm431 = vcmask 60416
      %432 = vst.msk [vmem:[%s304] sm:$0xf] %vm431, %v430
      %p433 = scmp.lt.s32.totalorder %s19, 1
      %s434 = scalar_select %p433, %s19, 1
      %p435 = scmp.lt.s32.totalorder %s20, 3
      %s436 = scalar_select %p435, %s20, 3
      %s437 = smul.addr %s434, 4
      %s438 = sadd.s32 %s436, %s437
      %s439 = smul.addr %s438, 4
      %s440 = scalar_lea.vmem %s4, %s439
      // Predicated region
      $region37: #{transformer_forward.35} parent=35 // pred_check
        %p441 = pneg %p157
      $region38: #{transformer_forward.35} parent=35 // pred_check_branch
        %443 = sbr.rel (%p441) target = $region40
      $region39: #{transformer_forward.35} parent=35 // pred_region
        _
      $region40: #{transformer_forward.35} parent=35 // pred_fallthru
        _
    $region36: #{transformer_forward.35} parent=5 // pred_fallthru
      _
    %p444 = scmp.le.s32.totalorder 2, %s10
    // Predicated region
    $region41: #{transformer_forward.35} parent=5 // pred_check
      %p445 = pneg %p444
    $region42: #{transformer_forward.35} parent=5 // pred_check_branch
      %447 = sbr.rel (%p445) target = $region44
    $region43: #{transformer_forward.35} parent=5 // pred_region
      %s448 = ssub.s32 %s10, 2
      // Predicated region
      $region45: #{transformer_forward.35} parent=43 // pred_check
        %p449 = pneg %p163
      $region46: #{transformer_forward.35} parent=43 // pred_check_branch
        %451 = sbr.rel (%p449) target = $region48
      $region47: #{transformer_forward.35} parent=43 // pred_region
        %p452 = scmp.lt.s32.totalorder %s21, 1
        %s453 = scalar_select %p452, %s21, 1
        %p454 = scmp.lt.s32.totalorder %s22, 3
        %s455 = scalar_select %p454, %s22, 3
        %s456 = smul.addr %s453, 4
        %s457 = sadd.s32 %s455, %s456
        %s458 = smul.addr %s457, 4
        %s459 = scalar_lea.vmem %s4, %s458
      $region48: #{transformer_forward.35} parent=43 // pred_fallthru
        _
    $region44: #{transformer_forward.35} parent=5 // pred_fallthru
      _
  $region6: #{transformer_forward.35} parent=0 // loop_footer
    %s14 = sadd.s32 1, %s10
  $region7: #{transformer_forward.35} parent=0 // loop_footer_branch
    %9 = sbr.rel target = $region3
  $region8: #{transformer_forward.35} parent=0 // loop_exit
    _

// kernel: transformer_forward.50
$region0: #{transformer_forward.50}
  #allocation0 [shape = 'u32[]', space=smem, size = 0x4, offset = 0x4, fixed_abs, tag = 'smem constant byte address 0x4 - core index']
  #allocation1 [shape = 'u32[144,128]{1,0:T(1,128)}', space=vmem, size = 0x12000, scoped, tag = 'internal scratch']
  #allocation2 [shape = 'f32[16,1]{1,0:T(8,128)}', space=vmem, size = 0x2000, scoped, tag = 'scratch operand']
  #allocation3 [shape = 'f32[16,1]{1,0:T(8,128)}', space=vmem, size = 0x2000, scoped, tag = 'scratch operand']
  %s0 = inlined_call_operand.vmem [shape: bf16[16,32], index: 0, kind: input, shape index: {}]
  %s1 = inlined_call_operand.vmem [shape: bf16[32,48], index: 1, kind: input, shape index: {}]
  %s2 = inlined_call_operand.vmem [shape: f32[1,48], index: 2, kind: input, shape index: {}]
  %s3 = inlined_call_operand.vmem [shape: f32[16,48], index: 3, kind: output, shape index: {0}]
  %s4 = inlined_call_operand.vmem [shape: f32[16,1], index: 4, kind: output, shape index: {1}]
  %5 = xla_tuple %s3, %s4
  %s6 = sld [smem:[#allocation0]]
  $region38: #{transformer_forward.50} parent=0
    _
  %s8 = ssub.s32 1, %s6
  %s9 = scalar_select 0, %s8, %s6
  // Predicated region
  $region2: #{transformer_forward.50} parent=0 // pred_check
    _
  $region3: #{transformer_forward.50} parent=0 // pred_check_branch
    %11 = sbr.rel (0) target = $region5
  $region4: #{transformer_forward.50} parent=0 // pred_region
    _
  $region5: #{transformer_forward.50} parent=0 // pred_fallthru
    _
  // Predicated region
  $region6: #{transformer_forward.50} parent=0 // pred_check
    _
  $region7: #{transformer_forward.50} parent=0 // pred_check_branch
    %13 = sbr.rel (0) target = $region9
  $region8: #{transformer_forward.50} parent=0 // pred_region
    _
  $region9: #{transformer_forward.50} parent=0 // pred_fallthru
    _
  // Predicated region
  $region10: #{transformer_forward.50} parent=0 // pred_check
    _
  $region11: #{transformer_forward.50} parent=0 // pred_check_branch
    %15 = sbr.rel (0) target = $region13
  $region12: #{transformer_forward.50} parent=0 // pred_region
    _
  $region13: #{transformer_forward.50} parent=0 // pred_fallthru
    _
  %p17 = scmp.eq.s32.totalorder 0, 0
  // Predicated region
  $region14: #{transformer_forward.50} parent=0 // pred_check
    %p18 = pneg %p17
  $region15: #{transformer_forward.50} parent=0 // pred_check_branch
    %20 = sbr.rel (%p18) target = $region17
  $region16: #{transformer_forward.50} parent=0 // pred_region
    %vm21 = vcmask 7168
    %22 = vst.msk [vmem:[#allocation2] sm:$0xff] %vm21, -inf
    %23 = vst.msk [vmem:[#allocation2 + $0x8] sm:$0xff] %vm21, -inf
    %24 = vst.msk [vmem:[#allocation3] sm:$0xff] %vm21, 0.0
    %25 = vst.msk [vmem:[#allocation3 + $0x8] sm:$0xff] %vm21, 0.0
  $region17: #{transformer_forward.50} parent=0 // pred_fallthru
    _
  %v26 = vld [vmem:[%s0] sm:$0xf]
  %v27 = vld [vmem:[%s0 + $0x4] sm:$0xf]
  %v28 = vld [vmem:[%s1] sm:$0xf]
  %v29 = vld [vmem:[%s1 + $0x4] sm:$0xf]
  %v30 = vld [vmem:[%s1 + $0x8] sm:$0xf]
  %v31 = vld [vmem:[%s1 + $0xc] sm:$0xf]
  %v32 = vld [vmem:[%s2] sm:$0x1]
  %v34 = vlaneseq
  %v35 = vshrl.u32 %v34, 7
  %v36 = vsub.s32 0, %v35
  %v37 = vrot.slane %v32, %v36
  %v41 = vunpack.c.l.b16 %v26
  %v42 = vunpack.c.l.b16 %v27
  %v43 = vpack.c.b16 %v42, %v41
  %v48 = vunpack.c.l.b16 %v28
  %v49 = vunpack.c.l.b16 %v29
  %v50 = vunpack.c.l.b16 %v30
  %v51 = vunpack.c.l.b16 %v31
  %v52 = vpack.c.b16 %v49, %v48
  %v53 = vpack.c.b16 %v51, %v50
  %vm56 = vcmask 261120
  %v58 = vsel %vm56, %v43, 0
  %60 = vmatprep.subr.bf16.mxu0 0
  %61 = vmatpush1.bf16.msra.mxu0 %v52
  %62 = vmatprep.subr.bf16.mxu0 0
  %63 = vmatpush1.bf16.msra.mxu0 %v53
  %64 = vmatprep.subr.bf16.mxu0 0
  %65 = vmatpush1.bf16.msra.mxu0 0
  %66 = vmatprep.subr.bf16.mxu0 0
  %67 = vmatpush1.bf16.msra.mxu0 0
  %68 = vmatprep.subr.bf16.mxu0 0
  %69 = vmatpush1.bf16.msra.mxu0 0
  %70 = vmatprep.subr.bf16.mxu0 0
  %71 = vmatpush1.bf16.msra.mxu0 0
  %72 = vmatprep.subr.bf16.mxu0 0
  %73 = vmatpush1.bf16.msra.mxu0 0
  %74 = vmatprep.subr.bf16.mxu0 0
  %75 = vmatpush1.bf16.msra.mxu0 0
  %76 = vmatprep.subr.bf16.mxu0 0
  %77 = vmatpush1.bf16.msra.mxu0 0
  %78 = vmatprep.subr.bf16.mxu0 0
  %79 = vmatpush1.bf16.msra.mxu0 0
  %80 = vmatprep.subr.bf16.mxu0 0
  %81 = vmatpush1.bf16.msra.mxu0 0
  %82 = vmatprep.subr.bf16.mxu0 0
  %83 = vmatpush1.bf16.msra.mxu0 0
  %84 = vmatprep.subr.bf16.mxu0 0
  %85 = vmatpush1.bf16.msra.mxu0 0
  %86 = vmatprep.subr.bf16.mxu0 0
  %87 = vmatpush1.bf16.msra.mxu0 0
  %88 = vmatprep.subr.bf16.mxu0 0
  %89 = vmatpush1.bf16.msra.mxu0 0
  %90 = vmatprep.subr.bf16.mxu0 0
  %91 = vmatpush1.bf16.msra.mxu0 0
  %92 = vmatprep.mubr.bf16.mxu0 0
  %93 = vmatmul.mubr.bf16.gmra.mrb[0].mxu0 %v58
  %v94 = vpop.f32.mrb[0].mxu0
  %v95 = vadd.f32 %v37, %v94
  %v96 = vpop.f32.mrb[0].mxu0
  %v97 = vpop.f32.mrb[0].mxu0
  %v98 = vadd.f32 %v37, %v97
  %v99 = vpop.f32.mrb[0].mxu0
  %100 = vdwg.mxu0
  %vm101 = vcmask 392192
  %102 = vst.msk [vmem:[%s3] sm:$0xff] %vm101, %v95
  %103 = vst.msk [vmem:[%s3 + $0x8] sm:$0xff] %vm101, %v98
  %v104 = vld [vmem:[#allocation2] sm:$0xff]
  %v105 = vld [vmem:[#allocation2 + $0x8] sm:$0xff]
  %v106 = vsel %vm101, %v95, -inf
  %107 = vmax.xlane.f32.xlu0 %v106
  %v108 = vpop.xlane.xlu0 %107
  %v109 = vsel %vm101, %v98, -inf
  %110 = vmax.xlane.f32.xlu0 %v109
  %v111 = vpop.xlane.xlu0 %110
  %v112 = vmax.f32 %v104, %v108
  %v113 = vmax.f32 %v105, %v111
  %v114 = vld [vmem:[#allocation3] sm:$0xff]
  %v115 = vld [vmem:[#allocation3 + $0x8] sm:$0xff]
  %v116 = vsub.f32 %v104, %v112
  %v117 = vsub.f32 %v105, %v113
  %v118 = vmul.f32 %v116, 1.442695
  %v119 = vpow.pop %v118
  %v120 = vmul.f32 %v117, 1.442695
  %v121 = vpow.pop %v120
  %v122 = vmul.f32 %v114, %v119
  %v123 = vmul.f32 %v115, %v121
  %125 = vset.pattern.permute.xlu0 0
  %126 = vperm.xlu0 %125, %v112
  %v127 = vpop.permute.xlu0 %126
  %130 = vset.pattern.permute.xlu0 0
  %131 = vperm.xlu0 %130, %v113
  %v132 = vpop.permute.xlu0 %131
  %v134 = vsub.f32 %v95, %v127
  %v135 = vsub.f32 %v98, %v132
  %v136 = vmul.f32 %v134, 1.442695
  %v137 = vpow.pop %v136
  %v138 = vmul.f32 %v135, 1.442695
  %v139 = vpow.pop %v138
  %v140 = vsel %vm101, %v137, 0.0
  %141 = vadd.xlane.f32.xlu0 %v140
  %v142 = vpop.xlane.xlu0 %141
  %v143 = vsel %vm101, %v139, 0.0
  %144 = vadd.xlane.f32.xlu0 %v143
  %v145 = vpop.xlane.xlu0 %144
  %v146 = vadd.f32 %v122, %v142
  %v147 = vadd.f32 %v123, %v145
  %vm148 = vcmask 7168
  %149 = vst.msk [vmem:[#allocation3] sm:$0xff] %vm148, %v146
  %150 = vst.msk [vmem:[#allocation3 + $0x8] sm:$0xff] %vm148, %v147
  %151 = vst.msk [vmem:[#allocation2] sm:$0xff] %vm148, %v112
  %152 = vst.msk [vmem:[#allocation2 + $0x8] sm:$0xff] %vm148, %v113
  // Predicated region
  $region18: #{transformer_forward.50} parent=0 // pred_check
    %p153 = pneg %p17
  $region19: #{transformer_forward.50} parent=0 // pred_check_branch
    %155 = sbr.rel (%p153) target = $region21
  $region20: #{transformer_forward.50} parent=0 // pred_region
    %v156 = vld [vmem:[#allocation2] sm:$0xff]
    %v157 = vld [vmem:[#allocation2 + $0x8] sm:$0xff]
    %v158 = vld [vmem:[#allocation3] sm:$0xff]
    %v159 = vld [vmem:[#allocation3 + $0x8] sm:$0xff]
    %v160 = vlog2.pop %v158
    %v161 = vmul.f32 %v160, 0.6931472
    %v162 = vlog2.pop %v159
    %v163 = vmul.f32 %v162, 0.6931472
    %v164 = vadd.f32 %v156, %v161
    %v165 = vadd.f32 %v157, %v163
    %166 = vst.msk [vmem:[%s4] sm:$0xff] %vm148, %v164
    %167 = vst.msk [vmem:[%s4 + $0x8] sm:$0xff] %vm148, %v165
  $region21: #{transformer_forward.50} parent=0 // pred_fallthru
    _
  // Predicated region
  $region22: #{transformer_forward.50} parent=0 // pred_check
    _
  $region23: #{transformer_forward.50} parent=0 // pred_check_branch
    %169 = sbr.rel (0) target = $region25
  $region24: #{transformer_forward.50} parent=0 // pred_region
    _
  $region25: #{transformer_forward.50} parent=0 // pred_fallthru
    _
  // Predicated region
  $region26: #{transformer_forward.50} parent=0 // pred_check
    _
  $region27: #{transformer_forward.50} parent=0 // pred_check_branch
    %171 = sbr.rel (0) target = $region29
  $region28: #{transformer_forward.50} parent=0 // pred_region
    _
  $region29: #{transformer_forward.50} parent=0 // pred_fallthru
    _
  // Predicated region
  $region30: #{transformer_forward.50} parent=0 // pred_check
    _
  $region31: #{transformer_forward.50} parent=0 // pred_check_branch
    %173 = sbr.rel (0) target = $region33
  $region32: #{transformer_forward.50} parent=0 // pred_region
    _
  $region33: #{transformer_forward.50} parent=0 // pred_fallthru
    _
  // Predicated region
  $region34: #{transformer_forward.50} parent=0 // pred_check
    _
  $region35: #{transformer_forward.50} parent=0 // pred_check_branch
    %175 = sbr.rel (0) target = $region37
  $region36: #{transformer_forward.50} parent=0 // pred_region
    _
  $region37: #{transformer_forward.50} parent=0 // pred_fallthru
    _

// kernel: transformer_forward.29
$region0: #{transformer_forward.29}
  #allocation0 [shape = 'u32[]', space=smem, size = 0x4, offset = 0x4, fixed_abs, tag = 'smem constant byte address 0x4 - core index']
  #allocation1 [shape = 'u32[144,128]{1,0:T(1,128)}', space=vmem, size = 0x12000, scoped, tag = 'internal scratch']
  %s0 = inlined_call_operand.vmem [shape: bf16[16,32], index: 0, kind: input, shape index: {}]
  %s1 = inlined_call_operand.vmem [shape: bf16[32,64], index: 1, kind: input, shape index: {}]
  %s2 = inlined_call_operand.vmem [shape: f32[1,64], index: 2, kind: input, shape index: {}]
  %s3 = inlined_call_operand.vmem [shape: bf16[64,32], index: 3, kind: input, shape index: {}]
  %s4 = inlined_call_operand.vmem [shape: f32[1,32], index: 4, kind: input, shape index: {}]
  %s5 = inlined_call_operand.vmem [shape: f32[1,32], index: 5, kind: input, shape index: {}]
  %s6 = inlined_call_operand.vmem [shape: f32[1,32], index: 6, kind: input, shape index: {}]
  %s7 = inlined_call_operand.vmem [shape: bf16[16,32], index: 7, kind: output, shape index: {}]
  %s8 = sld [smem:[#allocation0]]
  $region38: #{transformer_forward.29} parent=0
    _
  %s10 = ssub.s32 1, %s8
  %s11 = scalar_select 0, %s10, %s8
  // Predicated region
  $region2: #{transformer_forward.29} parent=0 // pred_check
    _
  $region3: #{transformer_forward.29} parent=0 // pred_check_branch
    %13 = sbr.rel (0) target = $region5
  $region4: #{transformer_forward.29} parent=0 // pred_region
    _
  $region5: #{transformer_forward.29} parent=0 // pred_fallthru
    _
  // Predicated region
  $region6: #{transformer_forward.29} parent=0 // pred_check
    _
  $region7: #{transformer_forward.29} parent=0 // pred_check_branch
    %15 = sbr.rel (0) target = $region9
  $region8: #{transformer_forward.29} parent=0 // pred_region
    _
  $region9: #{transformer_forward.29} parent=0 // pred_fallthru
    _
  // Predicated region
  $region10: #{transformer_forward.29} parent=0 // pred_check
    _
  $region11: #{transformer_forward.29} parent=0 // pred_check_branch
    %17 = sbr.rel (0) target = $region13
  $region12: #{transformer_forward.29} parent=0 // pred_region
    _
  $region13: #{transformer_forward.29} parent=0 // pred_fallthru
    _
  // Predicated region
  $region14: #{transformer_forward.29} parent=0 // pred_check
    _
  $region15: #{transformer_forward.29} parent=0 // pred_check_branch
    %19 = sbr.rel (0) target = $region17
  $region16: #{transformer_forward.29} parent=0 // pred_region
    _
  $region17: #{transformer_forward.29} parent=0 // pred_fallthru
    _
  // Predicated region
  $region18: #{transformer_forward.29} parent=0 // pred_check
    _
  $region19: #{transformer_forward.29} parent=0 // pred_check_branch
    %21 = sbr.rel (0) target = $region21
  $region20: #{transformer_forward.29} parent=0 // pred_region
    _
  $region21: #{transformer_forward.29} parent=0 // pred_fallthru
    _
  // Predicated region
  $region22: #{transformer_forward.29} parent=0 // pred_check
    _
  $region23: #{transformer_forward.29} parent=0 // pred_check_branch
    %23 = sbr.rel (0) target = $region25
  $region24: #{transformer_forward.29} parent=0 // pred_region
    _
  $region25: #{transformer_forward.29} parent=0 // pred_fallthru
    _
  // Predicated region
  $region26: #{transformer_forward.29} parent=0 // pred_check
    _
  $region27: #{transformer_forward.29} parent=0 // pred_check_branch
    %25 = sbr.rel (0) target = $region29
  $region28: #{transformer_forward.29} parent=0 // pred_region
    _
  $region29: #{transformer_forward.29} parent=0 // pred_fallthru
    _
  %v27 = vld [vmem:[%s0] sm:$0xf]
  %v28 = vld [vmem:[%s0 + $0x4] sm:$0xf]
  %v29 = vld [vmem:[%s1] sm:$0xf]
  %v30 = vld [vmem:[%s1 + $0x4] sm:$0xf]
  %v31 = vld [vmem:[%s1 + $0x8] sm:$0xf]
  %v32 = vld [vmem:[%s1 + $0xc] sm:$0xf]
  %v33 = vld [vmem:[%s2] sm:$0x1]
  %v35 = vlaneseq
  %v36 = vshrl.u32 %v35, 7
  %v37 = vsub.s32 0, %v36
  %v38 = vrot.slane %v33, %v37
  %v42 = vunpack.c.l.b16 %v27
  %v43 = vunpack.c.l.b16 %v28
  %v44 = vpack.c.b16 %v43, %v42
  %v49 = vunpack.c.l.b16 %v29
  %v50 = vunpack.c.l.b16 %v30
  %v51 = vunpack.c.l.b16 %v31
  %v52 = vunpack.c.l.b16 %v32
  %v53 = vpack.c.b16 %v50, %v49
  %v54 = vpack.c.b16 %v52, %v51
  %vm57 = vcmask 261120
  %v59 = vsel %vm57, %v44, 0
  %61 = vmatprep.subr.bf16.mxu0 0
  %62 = vmatpush1.bf16.msra.mxu0 %v53
  %63 = vmatprep.subr.bf16.mxu0 0
  %64 = vmatpush1.bf16.msra.mxu0 %v54
  %65 = vmatprep.subr.bf16.mxu0 0
  %66 = vmatpush1.bf16.msra.mxu0 0
  %67 = vmatprep.subr.bf16.mxu0 0
  %68 = vmatpush1.bf16.msra.mxu0 0
  %69 = vmatprep.subr.bf16.mxu0 0
  %70 = vmatpush1.bf16.msra.mxu0 0
  %71 = vmatprep.subr.bf16.mxu0 0
  %72 = vmatpush1.bf16.msra.mxu0 0
  %73 = vmatprep.subr.bf16.mxu0 0
  %74 = vmatpush1.bf16.msra.mxu0 0
  %75 = vmatprep.subr.bf16.mxu0 0
  %76 = vmatpush1.bf16.msra.mxu0 0
  %77 = vmatprep.subr.bf16.mxu0 0
  %78 = vmatpush1.bf16.msra.mxu0 0
  %79 = vmatprep.subr.bf16.mxu0 0
  %80 = vmatpush1.bf16.msra.mxu0 0
  %81 = vmatprep.subr.bf16.mxu0 0
  %82 = vmatpush1.bf16.msra.mxu0 0
  %83 = vmatprep.subr.bf16.mxu0 0
  %84 = vmatpush1.bf16.msra.mxu0 0
  %85 = vmatprep.subr.bf16.mxu0 0
  %86 = vmatpush1.bf16.msra.mxu0 0
  %87 = vmatprep.subr.bf16.mxu0 0
  %88 = vmatpush1.bf16.msra.mxu0 0
  %89 = vmatprep.subr.bf16.mxu0 0
  %90 = vmatpush1.bf16.msra.mxu0 0
  %91 = vmatprep.subr.bf16.mxu0 0
  %92 = vmatpush1.bf16.msra.mxu0 0
  %93 = vmatprep.mubr.bf16.mxu0 0
  %94 = vmatmul.mubr.bf16.gmra.mrb[0].mxu0 %v59
  %v95 = vpop.f32.mrb[0].mxu0
  %v96 = vadd.f32 %v38, %v95
  %v97 = vpop.f32.mrb[0].mxu0
  %v98 = vpop.f32.mrb[0].mxu0
  %v99 = vadd.f32 %v38, %v98
  %v100 = vpop.f32.mrb[0].mxu0
  %101 = vdwg.mxu0
  %v102 = vmax.f32 %v96, 0.0
  %v103 = vmax.f32 %v99, 0.0
  %v104 = vpack.c.bf16 %v103, %v102
  %v105 = vld [vmem:[%s3] sm:$0xf]
  %v106 = vld [vmem:[%s3 + $0x4] sm:$0xf]
  %v107 = vld [vmem:[%s3 + $0x8] sm:$0xf]
  %v108 = vld [vmem:[%s3 + $0xc] sm:$0xf]
  %v109 = vld [vmem:[%s3 + $0x10] sm:$0xf]
  %v110 = vld [vmem:[%s3 + $0x14] sm:$0xf]
  %v111 = vld [vmem:[%s3 + $0x18] sm:$0xf]
  %v112 = vld [vmem:[%s3 + $0x1c] sm:$0xf]
  %v113 = vld [vmem:[%s4] sm:$0x1]
  %v115 = vlaneseq
  %v116 = vshrl.u32 %v115, 7
  %v117 = vsub.s32 0, %v116
  %v118 = vrot.slane %v113, %v117
  %v128 = vunpack.c.l.b16 %v105
  %v129 = vunpack.c.l.b16 %v106
  %v130 = vunpack.c.l.b16 %v107
  %v131 = vunpack.c.l.b16 %v108
  %v132 = vunpack.c.l.b16 %v109
  %v133 = vunpack.c.l.b16 %v110
  %v134 = vunpack.c.l.b16 %v111
  %v135 = vunpack.c.l.b16 %v112
  %v136 = vpack.c.b16 %v129, %v128
  %v137 = vpack.c.b16 %v131, %v130
  %v138 = vpack.c.b16 %v133, %v132
  %v139 = vpack.c.b16 %v135, %v134
  %vm144 = vcmask 523264
  %v146 = vsel %vm144, %v104, 0
  %148 = vmatprep.subr.bf16.mxu0 0
  %149 = vmatpush1.bf16.msra.mxu0 %v136
  %150 = vmatprep.subr.bf16.mxu0 0
  %151 = vmatpush1.bf16.msra.mxu0 %v137
  %152 = vmatprep.subr.bf16.mxu0 0
  %153 = vmatpush1.bf16.msra.mxu0 %v138
  %154 = vmatprep.subr.bf16.mxu0 0
  %155 = vmatpush1.bf16.msra.mxu0 %v139
  %156 = vmatprep.subr.bf16.mxu0 0
  %157 = vmatpush1.bf16.msra.mxu0 0
  %158 = vmatprep.subr.bf16.mxu0 0
  %159 = vmatpush1.bf16.msra.mxu0 0
  %160 = vmatprep.subr.bf16.mxu0 0
  %161 = vmatpush1.bf16.msra.mxu0 0
  %162 = vmatprep.subr.bf16.mxu0 0
  %163 = vmatpush1.bf16.msra.mxu0 0
  %164 = vmatprep.subr.bf16.mxu0 0
  %165 = vmatpush1.bf16.msra.mxu0 0
  %166 = vmatprep.subr.bf16.mxu0 0
  %167 = vmatpush1.bf16.msra.mxu0 0
  %168 = vmatprep.subr.bf16.mxu0 0
  %169 = vmatpush1.bf16.msra.mxu0 0
  %170 = vmatprep.subr.bf16.mxu0 0
  %171 = vmatpush1.bf16.msra.mxu0 0
  %172 = vmatprep.subr.bf16.mxu0 0
  %173 = vmatpush1.bf16.msra.mxu0 0
  %174 = vmatprep.subr.bf16.mxu0 0
  %175 = vmatpush1.bf16.msra.mxu0 0
  %176 = vmatprep.subr.bf16.mxu0 0
  %177 = vmatpush1.bf16.msra.mxu0 0
  %178 = vmatprep.subr.bf16.mxu0 0
  %179 = vmatpush1.bf16.msra.mxu0 0
  %180 = vmatprep.mubr.bf16.mxu0 0
  %181 = vmatmul.mubr.bf16.gmra.mrb[0].mxu0 %v146
  %v182 = vpop.f32.mrb[0].mxu0
  %v183 = vadd.f32 %v118, %v182
  %v184 = vpop.f32.mrb[0].mxu0
  %v185 = vpop.f32.mrb[0].mxu0
  %v186 = vadd.f32 %v118, %v185
  %v187 = vpop.f32.mrb[0].mxu0
  %188 = vdwg.mxu0
  %v189 = vunpack.c.l.bf16 %v27
  %v190 = vunpack.c.l.bf16 %v28
  %v191 = vadd.f32 %v183, %v189
  %v192 = vadd.f32 %v186, %v190
  %v193 = vld [vmem:[%s5] sm:$0x1]
  %v194 = vld [vmem:[%s6] sm:$0x1]
  %v195 = vsel %vm57, %v191, 0.0
  %196 = vadd.xlane.f32.xlu0 %v195
  %v197 = vpop.xlane.xlu0 %196
  %v198 = vsel %vm57, %v192, 0.0
  %199 = vadd.xlane.f32.xlu0 %v198
  %v200 = vpop.xlane.xlu0 %199
  %v201 = vrcp.pop 32.0
  %v202 = vmul.f32 %v197, %v201
  %v203 = vmul.f32 %v200, %v201
  %v204 = vsub.f32 %v191, %v202
  %v205 = vsub.f32 %v192, %v203
  %v206 = vmul.f32 %v204, %v204
  %v207 = vmul.f32 %v205, %v205
  %v208 = vsel %vm57, %v206, 0.0
  %209 = vadd.xlane.f32.xlu0 %v208
  %v210 = vpop.xlane.xlu0 %209
  %v211 = vsel %vm57, %v207, 0.0
  %212 = vadd.xlane.f32.xlu0 %v211
  %v213 = vpop.xlane.xlu0 %212
  %v214 = vmul.f32 %v210, %v201
  %v215 = vmul.f32 %v213, %v201
  %v216 = vadd.f32 %v214, 1e-06
  %v217 = vadd.f32 %v215, 1e-06
  %v218 = vrsqrt.pop %v216
  %v219 = vrsqrt.pop %v217
  %v220 = vmul.f32 %v204, %v218
  %v221 = vmul.f32 %v205, %v219
  %v223 = vlaneseq
  %v224 = vshrl.u32 %v223, 7
  %v225 = vsub.s32 0, %v224
  %v226 = vrot.slane %v193, %v225
  %v228 = vmul.f32 %v220, %v226
  %v229 = vmul.f32 %v221, %v226
  %v231 = vlaneseq
  %v232 = vshrl.u32 %v231, 7
  %v233 = vsub.s32 0, %v232
  %v234 = vrot.slane %v194, %v233
  %v236 = vadd.f32 %v228, %v234
  %v237 = vadd.f32 %v229, %v234
  %v238 = vpack.c.bf16 %v237, %v236
  %v240 = vunpack.c.l.b16 %v238
  %v241 = vunpack.c.h.b16 %v238
  %v242 = vpack.c.b16 %v240, %v240
  %v243 = vpack.c.b16 %v241, %v241
  %vm246 = vcmask 257024
  %247 = vst.msk [vmem:[%s7] sm:$0xf] %vm246, %v242
  %248 = vst.msk [vmem:[%s7 + $0x4] sm:$0xf] %vm246, %v243
  // Predicated region
  $region30: #{transformer_forward.29} parent=0 // pred_check
    _
  $region31: #{transformer_forward.29} parent=0 // pred_check_branch
    %250 = sbr.rel (0) target = $region33
  $region32: #{transformer_forward.29} parent=0 // pred_region
    _
  $region33: #{transformer_forward.29} parent=0 // pred_fallthru
    _
  // Predicated region
  $region34: #{transformer_forward.29} parent=0 // pred_check
    _
  $region35: #{transformer_forward.29} parent=0 // pred_check_branch
    %252 = sbr.rel (0) target = $region37
  $region36: #{transformer_forward.29} parent=0 // pred_region
    _
  $region37: #{transformer_forward.29} parent=0 // pred_fallthru
    _

// kernel: transformer_forward.38
$region0: #{transformer_forward.38}
  #allocation0 [shape = 'u32[]', space=smem, size = 0x4, offset = 0x4, fixed_abs, tag = 'smem constant byte address 0x4 - core index']
  #allocation1 [shape = 'u32[144,128]{1,0:T(1,128)}', space=vmem, size = 0x12000, scoped, tag = 'internal scratch']
  %s0 = inlined_call_operand.vmem [shape: bf16[2,8,32], index: 0, kind: input, shape index: {}]
  %s1 = inlined_call_operand.vmem [shape: bf16[32,64], index: 1, kind: input, shape index: {}]
  %s2 = inlined_call_operand.vmem [shape: f32[1,64], index: 2, kind: input, shape index: {}]
  %s3 = inlined_call_operand.vmem [shape: bf16[2,4,8,8], index: 3, kind: output, shape index: {0}]
  %s4 = inlined_call_operand.vmem [shape: bf16[2,4,8,8], index: 4, kind: output, shape index: {1}]
  %5 = xla_tuple %s3, %s4
  %s6 = sld [smem:[#allocation0]]
  $region53: #{transformer_forward.38} parent=0
    _
  %s8 = ssub.s32 1, %s6
  %s9 = scalar_select 0, %s8, %s6
  loop: start=0, step=1, limit=4
  $region2: #{transformer_forward.38} parent=0 // loop_pre_header
    _
  $region3: #{transformer_forward.38} parent=0 // loop_header
    %s11 = sphi 0, %s15
    %p12 = scmp.ge.s32.totalorder %s11, 4
    %s18 = sphi 0, %s30
    %s19 = sphi 0, %s26
    %s20 = sphi 0, %s18
    %s21 = sphi 0, %s19
    %s22 = sphi 0, %s20
    %s23 = sphi 0, %s21
    %s35 = sphi 0, %s37
    %s38 = sphi 0, %s35
    %s39 = sphi 0, %s38
    %s55 = sphi 0, %s39
    %s59 = sphi 0, %s59
    %s61 = sphi 0, %s59
    %s62 = sphi 0, %s61
    %s76 = sphi 0, %s62
    %s80 = sphi 0, %s80
    %s82 = sphi 0, %s80
    %s83 = sphi 0, %s82
    %s97 = sphi 0, %s83
    %s105 = sphi 0, %s107
    %s108 = sphi 0, %s105
    %s109 = sphi 0, %s108
    %s125 = sphi 0, %s109
    %s133 = sphi 0, %s135
    %s136 = sphi 0, %s133
    %s137 = sphi 0, %s136
    %s153 = sphi 0, %s137
  $region4: #{transformer_forward.38} parent=0 // loop_header_branch
    %14 = sbr.rel (%p12) target = $region8
  $region5: #{transformer_forward.38} parent=0 // loop_body
    %s16 = ssub.s32 %s11, 1
    %s17 = ssub.s32 %s11, 2
    %s24 = sadd.s32 1, %s19
    %p25 = scmp.ge.s32.totalorder %s24, 1
    %s26 = scalar_select %p25, 0, %s24
    %s27 = sadd.s32 1, %s18
    %s28 = scalar_select %p25, %s27, %s18
    %p29 = scmp.ge.s32.totalorder %s28, 2
    %s30 = scalar_select %p29, 0, %s28
    %s31 = ssub.s32 %s18, %s30
    %s32 = ssub.s32 %s19, %s26
    %s33 = sor.u32 %s31, %s32
    %p34 = scmp.eq.s32.totalorder %s33, 0
    %s36 = sadd.s32 %s35, 1
    %s37 = scalar_select %p34, %s35, %s36
    %p40 = pneg %p34
    %p41 = scmp.eq.s32.totalorder %s11, 1
    %p42 = por %p40, %p41
    %p43 = scmp.ne.s32.totalorder %s35, %s38
    %p44 = scmp.eq.s32.totalorder %s11, 0
    %p45 = por %p43, %p44
    %p46 = scmp.ne.s32.totalorder %s35, %s38
    %p47 = scmp.eq.s32.totalorder %s16, 1
    %p48 = por %p46, %p47
    %p49 = scmp.ne.s32.totalorder %s38, %s39
    %p50 = scmp.eq.s32.totalorder %s16, 0
    %p51 = por %p49, %p50
    %p52 = scmp.ne.s32.totalorder %s38, %s39
    %p53 = scmp.eq.s32.totalorder %s17, 1
    %p54 = por %p52, %p53
    %p56 = scmp.ne.s32.totalorder %s39, %s55
    %p57 = scmp.eq.s32.totalorder %s17, 0
    %p58 = por %p56, %p57
    %s60 = sadd.s32 %s59, 1
    %p63 = scmp.eq.s32.totalorder %s11, 1
    %p64 = scmp.ne.s32.totalorder %s59, %s61
    %p65 = scmp.eq.s32.totalorder %s11, 0
    %p66 = por %p64, %p65
    %p67 = scmp.ne.s32.totalorder %s59, %s61
    %p68 = scmp.eq.s32.totalorder %s16, 1
    %p69 = por %p67, %p68
    %p70 = scmp.ne.s32.totalorder %s61, %s62
    %p71 = scmp.eq.s32.totalorder %s16, 0
    %p72 = por %p70, %p71
    %p73 = scmp.ne.s32.totalorder %s61, %s62
    %p74 = scmp.eq.s32.totalorder %s17, 1
    %p75 = por %p73, %p74
    %p77 = scmp.ne.s32.totalorder %s62, %s76
    %p78 = scmp.eq.s32.totalorder %s17, 0
    %p79 = por %p77, %p78
    %s81 = sadd.s32 %s80, 1
    %p84 = scmp.eq.s32.totalorder %s11, 1
    %p85 = scmp.ne.s32.totalorder %s80, %s82
    %p86 = scmp.eq.s32.totalorder %s11, 0
    %p87 = por %p85, %p86
    %p88 = scmp.ne.s32.totalorder %s80, %s82
    %p89 = scmp.eq.s32.totalorder %s16, 1
    %p90 = por %p88, %p89
    %p91 = scmp.ne.s32.totalorder %s82, %s83
    %p92 = scmp.eq.s32.totalorder %s16, 0
    %p93 = por %p91, %p92
    %p94 = scmp.ne.s32.totalorder %s82, %s83
    %p95 = scmp.eq.s32.totalorder %s17, 1
    %p96 = por %p94, %p95
    %p98 = scmp.ne.s32.totalorder %s83, %s97
    %p99 = scmp.eq.s32.totalorder %s17, 0
    %p100 = por %p98, %p99
    %s101 = ssub.s32 %s18, %s30
    %s102 = ssub.s32 %s19, %s26
    %s103 = sor.u32 %s101, %s102
    %p104 = scmp.eq.s32.totalorder %s103, 0
    %s106 = sadd.s32 %s105, 1
    %s107 = scalar_select %p104, %s105, %s106
    %p110 = pneg %p104
    %p111 = scmp.eq.s32.totalorder %s11, 1
    %p112 = por %p110, %p111
    %p113 = scmp.ne.s32.totalorder %s105, %s108
    %p114 = scmp.eq.s32.totalorder %s11, 0
    %p115 = por %p113, %p114
    %p116 = scmp.ne.s32.totalorder %s105, %s108
    %p117 = scmp.eq.s32.totalorder %s16, 1
    %p118 = por %p116, %p117
    %p119 = scmp.ne.s32.totalorder %s108, %s109
    %p120 = scmp.eq.s32.totalorder %s16, 0
    %p121 = por %p119, %p120
    %p122 = scmp.ne.s32.totalorder %s108, %s109
    %p123 = scmp.eq.s32.totalorder %s17, 1
    %p124 = por %p122, %p123
    %p126 = scmp.ne.s32.totalorder %s109, %s125
    %p127 = scmp.eq.s32.totalorder %s17, 0
    %p128 = por %p126, %p127
    %s129 = ssub.s32 %s18, %s30
    %s130 = ssub.s32 %s19, %s26
    %s131 = sor.u32 %s129, %s130
    %p132 = scmp.eq.s32.totalorder %s131, 0
    %s134 = sadd.s32 %s133, 1
    %s135 = scalar_select %p132, %s133, %s134
    %p138 = pneg %p132
    %p139 = scmp.eq.s32.totalorder %s11, 1
    %p140 = por %p138, %p139
    %p141 = scmp.ne.s32.totalorder %s133, %s136
    %p142 = scmp.eq.s32.totalorder %s11, 0
    %p143 = por %p141, %p142
    %p144 = scmp.ne.s32.totalorder %s133, %s136
    %p145 = scmp.eq.s32.totalorder %s16, 1
    %p146 = por %p144, %p145
    %p147 = scmp.ne.s32.totalorder %s136, %s137
    %p148 = scmp.eq.s32.totalorder %s16, 0
    %p149 = por %p147, %p148
    %p150 = scmp.ne.s32.totalorder %s136, %s137
    %p151 = scmp.eq.s32.totalorder %s17, 1
    %p152 = por %p150, %p151
    %p154 = scmp.ne.s32.totalorder %s137, %s153
    %p155 = scmp.eq.s32.totalorder %s17, 0
    %p156 = por %p154, %p155
    %p157 = scmp.le.s32.totalorder 1, %s11
    %p158 = scmp.lt.s32.totalorder %s11, 3
    %p159 = pnand %p157, %p158
    %p160 = pneg %p159
    // Predicated region
    $region9: #{transformer_forward.38} parent=5 // pred_check
      _
    $region10: #{transformer_forward.38} parent=5 // pred_check_branch
      %162 = sbr.rel (%p159) target = $region12
    $region11: #{transformer_forward.38} parent=5 // pred_region
      %s163 = ssub.s32 %s11, 1
      // Predicated region
      $region13: #{transformer_forward.38} parent=11 // pred_check
        %p164 = pneg %p72
      $region14: #{transformer_forward.38} parent=11 // pred_check_branch
        %166 = sbr.rel (%p164) target = $region16
      $region15: #{transformer_forward.38} parent=11 // pred_region
        _
      $region16: #{transformer_forward.38} parent=11 // pred_fallthru
        _
      // Predicated region
      $region17: #{transformer_forward.38} parent=11 // pred_check
        %p167 = pneg %p93
      $region18: #{transformer_forward.38} parent=11 // pred_check_branch
        %169 = sbr.rel (%p167) target = $region20
      $region19: #{transformer_forward.38} parent=11 // pred_region
        _
      $region20: #{transformer_forward.38} parent=11 // pred_fallthru
        _
    $region12: #{transformer_forward.38} parent=5 // pred_fallthru
      _
    %p170 = scmp.lt.s32.totalorder %s11, 2
    // Predicated region
    $region21: #{transformer_forward.38} parent=5 // pred_check
      %p171 = pneg %p170
    $region22: #{transformer_forward.38} parent=5 // pred_check_branch
      %173 = sbr.rel (%p171) target = $region24
    $region23: #{transformer_forward.38} parent=5 // pred_region
      // Predicated region
      $region25: #{transformer_forward.38} parent=23 // pred_check
        %p174 = pneg %p45
      $region26: #{transformer_forward.38} parent=23 // pred_check_branch
        %176 = sbr.rel (%p174) target = $region28
      $region27: #{transformer_forward.38} parent=23 // pred_region
        %p177 = scmp.lt.s32.totalorder %s18, 1
        %s178 = scalar_select %p177, %s18, 1
        %p179 = scmp.lt.s32.totalorder %s19, 0
        %s180 = scalar_select %p179, %s19, 0
        %s181 = sadd.s32 %s180, %s178
        %s182 = smul.addr %s181, 4
        %s183 = scalar_lea.vmem %s0, %s182
      $region28: #{transformer_forward.38} parent=23 // pred_fallthru
        _
    $region24: #{transformer_forward.38} parent=5 // pred_fallthru
      _
    %p184 = scmp.le.s32.totalorder 1, %s11
    %p185 = scmp.lt.s32.totalorder %s11, 3
    %p186 = pnand %p184, %p185
    %p187 = pneg %p186
    // Predicated region
    $region29: #{transformer_forward.38} parent=5 // pred_check
      _
    $region30: #{transformer_forward.38} parent=5 // pred_check_branch
      %189 = sbr.rel (%p186) target = $region32
    $region31: #{transformer_forward.38} parent=5 // pred_region
      %s190 = ssub.s32 %s11, 1
      %p191 = scmp.lt.s32.totalorder %s20, 1
      %s192 = scalar_select %p191, %s20, 1
      %p193 = scmp.lt.s32.totalorder %s21, 0
      %s194 = scalar_select %p193, %s21, 0
      %s195 = sadd.s32 %s194, %s192
      %s196 = smul.addr %s195, 4
      %s197 = scalar_lea.vmem %s0, %s196
      %p198 = pneg %p51
      %p199 = pneg %p48
      %p200 = pneg %p72
      %p201 = pneg %p69
      %p202 = pneg %p93
      %p203 = pneg %p90
      %p204 = pneg %p121
      %p205 = pneg %p118
      %p206 = scmp.lt.s32.totalorder %s20, 1
      %s207 = scalar_select %p206, %s20, 1
      %p208 = scmp.lt.s32.totalorder %s21, 0
      %s209 = scalar_select %p208, %s21, 0
      %s210 = smul.addr %s207, 4
      %s211 = sadd.s32 %s209, %s210
      %s212 = smul.addr %s211, 4
      %s213 = scalar_lea.vmem %s3, %s212
      %p214 = pneg %p149
      %p215 = pneg %p146
      %p216 = scmp.lt.s32.totalorder %s20, 1
      %s217 = scalar_select %p216, %s20, 1
      %p218 = scmp.lt.s32.totalorder %s21, 0
      %s219 = scalar_select %p218, %s21, 0
      %s220 = smul.addr %s217, 4
      %s221 = sadd.s32 %s219, %s220
      %s222 = smul.addr %s221, 4
      %s223 = scalar_lea.vmem %s4, %s222
      %p224 = scmp.lt.s32.totalorder %s20, 1
      %s225 = scalar_select %p224, %s20, 1
      %p226 = scmp.lt.s32.totalorder %s21, 0
      %s227 = scalar_select %p226, %s21, 0
      %s228 = sadd.s32 %s227, %s225
      %s229 = smul.addr %s228, 4
      %s230 = scalar_lea.vmem %s0, %s229
      %p231 = scmp.lt.s32.totalorder %s20, 1
      %s232 = scalar_select %p231, %s20, 1
      %p233 = scmp.lt.s32.totalorder %s21, 0
      %s234 = scalar_select %p233, %s21, 0
      %s235 = smul.addr %s232, 4
      %s236 = sadd.s32 %s234, %s235
      %s237 = smul.addr %s236, 4
      %s238 = scalar_lea.vmem %s3, %s237
      %p239 = scmp.lt.s32.totalorder %s20, 1
      %s240 = scalar_select %p239, %s20, 1
      %p241 = scmp.lt.s32.totalorder %s21, 0
      %s242 = scalar_select %p241, %s21, 0
      %s243 = smul.addr %s240, 4
      %s244 = sadd.s32 %s242, %s243
      %s245 = smul.addr %s244, 4
      %s246 = scalar_lea.vmem %s4, %s245
      %v248 = vld [vmem:[%s230] sm:$0xf]
      %v249 = vld [vmem:[%s1] sm:$0xf]
      %v250 = vld [vmem:[%s1 + $0x4] sm:$0xf]
      %v251 = vld [vmem:[%s1 + $0x8] sm:$0xf]
      %v252 = vld [vmem:[%s1 + $0xc] sm:$0xf]
      %v253 = vld [vmem:[%s2] sm:$0x1]
      %v255 = vlaneseq
      %v256 = vshrl.u32 %v255, 7
      %v257 = vsub.s32 0, %v256
      %v258 = vrot.slane %v253, %v257
      %v264 = vunpack.c.l.b16 %v249
      %v265 = vunpack.c.l.b16 %v250
      %v266 = vunpack.c.l.b16 %v251
      %v267 = vunpack.c.l.b16 %v252
      %v268 = vpack.c.b16 %v265, %v264
      %v269 = vpack.c.b16 %v267, %v266
      %vm272 = vcmask 261120
      %v274 = vsel %vm272, %v248, 0
      %276 = vmatprep.subr.bf16.mxu0 0
      %277 = vmatpush1.bf16.msra.mxu0 %v268
      %278 = vmatprep.subr.bf16.mxu0 0
      %279 = vmatpush1.bf16.msra.mxu0 %v269
      %280 = vmatprep.subr.bf16.mxu0 0
      %281 = vmatpush1.bf16.msra.mxu0 0
      %282 = vmatprep.subr.bf16.mxu0 0
      %283 = vmatpush1.bf16.msra.mxu0 0
      %284 = vmatprep.subr.bf16.mxu0 0
      %285 = vmatpush1.bf16.msra.mxu0 0
      %286 = vmatprep.subr.bf16.mxu0 0
      %287 = vmatpush1.bf16.msra.mxu0 0
      %288 = vmatprep.subr.bf16.mxu0 0
      %289 = vmatpush1.bf16.msra.mxu0 0
      %290 = vmatprep.subr.bf16.mxu0 0
      %291 = vmatpush1.bf16.msra.mxu0 0
      %292 = vmatprep.subr.bf16.mxu0 0
      %293 = vmatpush1.bf16.msra.mxu0 0
      %294 = vmatprep.subr.bf16.mxu0 0
      %295 = vmatpush1.bf16.msra.mxu0 0
      %296 = vmatprep.subr.bf16.mxu0 0
      %297 = vmatpush1.bf16.msra.mxu0 0
      %298 = vmatprep.subr.bf16.mxu0 0
      %299 = vmatpush1.bf16.msra.mxu0 0
      %300 = vmatprep.subr.bf16.mxu0 0
      %301 = vmatpush1.bf16.msra.mxu0 0
      %302 = vmatprep.subr.bf16.mxu0 0
      %303 = vmatpush1.bf16.msra.mxu0 0
      %304 = vmatprep.subr.bf16.mxu0 0
      %305 = vmatpush1.bf16.msra.mxu0 0
      %306 = vmatprep.subr.bf16.mxu0 0
      %307 = vmatpush1.bf16.msra.mxu0 0
      %308 = vmatprep.mubr.bf16.mxu0 0
      %309 = vmatmul.mubr.bf16.gmra.mrb[0].mxu0 %v274
      %v310 = vpop.f32.mrb[0].mxu0
      %v311 = vadd.f32 %v258, %v310
      %v312 = vpop.f32.mrb[0].mxu0
      %v313 = vpop.f32.mrb[0].mxu0
      %v314 = vpop.f32.mrb[0].mxu0
      %315 = vdwg.mxu0
      %v316 = vpack.c.bf16 %v311, %v311
      %vm317 = vcmask 60416
      %318 = vst.msk [vmem:[%s238] sm:$0xf] %vm317, %v316
      %v320 = vunpack.c.l.b16 %v316
      %v321 = vpack.c.b16 %v320, %v320
      %322 = vrot.lane.b32.xlu0 %v321, 120
      %v323 = vpop.permute.xlu0 %322
      %s325 = scalar_lea.vmem %s238, 4
      %326 = vst.msk [vmem:[%s325] sm:$0xf] %vm317, %v323
      %327 = vrot.lane.b32.xlu0 %v321, 112
      %v328 = vpop.permute.xlu0 %327
      %s330 = scalar_lea.vmem %s238, 8
      %331 = vst.msk [vmem:[%s330] sm:$0xf] %vm317, %v328
      %332 = vrot.lane.b32.xlu0 %v321, 104
      %v333 = vpop.permute.xlu0 %332
      %s335 = scalar_lea.vmem %s238, 12
      %336 = vst.msk [vmem:[%s335] sm:$0xf] %vm317, %v333
      %337 = vrot.lane.b32.xlu0 %v321, 96
      %v338 = vpop.permute.xlu0 %337
      %340 = vst.msk [vmem:[%s246] sm:$0xf] %vm317, %v338
      %341 = vrot.lane.b32.xlu0 %v321, 88
      %v342 = vpop.permute.xlu0 %341
      %s344 = scalar_lea.vmem %s246, 4
      %345 = vst.msk [vmem:[%s344] sm:$0xf] %vm317, %v342
      %346 = vrot.lane.b32.xlu0 %v321, 80
      %v347 = vpop.permute.xlu0 %346
      %s349 = scalar_lea.vmem %s246, 8
      %350 = vst.msk [vmem:[%s349] sm:$0xf] %vm317, %v347
      %351 = vrot.lane.b32.xlu0 %v321, 72
      %v352 = vpop.permute.xlu0 %351
      %s354 = scalar_lea.vmem %s246, 12
      %355 = vst.msk [vmem:[%s354] sm:$0xf] %vm317, %v352
      %p356 = scmp.lt.s32.totalorder %s20, 1
      %s357 = scalar_select %p356, %s20, 1
      %p358 = scmp.lt.s32.totalorder %s21, 0
      %s359 = scalar_select %p358, %s21, 0
      %s360 = smul.addr %s357, 4
      %s361 = sadd.s32 %s359, %s360
      %s362 = smul.addr %s361, 4
      %s363 = scalar_lea.vmem %s3, %s362
      %p364 = scmp.lt.s32.totalorder %s20, 1
      %s365 = scalar_select %p364, %s20, 1
      %p366 = scmp.lt.s32.totalorder %s21, 0
      %s367 = scalar_select %p366, %s21, 0
      %s368 = smul.addr %s365, 4
      %s369 = sadd.s32 %s367, %s368
      %s370 = smul.addr %s369, 4
      %s371 = scalar_lea.vmem %s4, %s370
      // Predicated region
      $region33: #{transformer_forward.38} parent=31 // pred_check
        %p372 = pneg %p118
      $region34: #{transformer_forward.38} parent=31 // pred_check_branch
        %374 = sbr.rel (%p372) target = $region36
      $region35: #{transformer_forward.38} parent=31 // pred_region
        _
      $region36: #{transformer_forward.38} parent=31 // pred_fallthru
        _
      // Predicated region
      $region37: #{transformer_forward.38} parent=31 // pred_check
        %p375 = pneg %p146
      $region38: #{transformer_forward.38} parent=31 // pred_check_branch
        %377 = sbr.rel (%p375) target = $region40
      $region39: #{transformer_forward.38} parent=31 // pred_region
        _
      $region40: #{transformer_forward.38} parent=31 // pred_fallthru
        _
    $region32: #{transformer_forward.38} parent=5 // pred_fallthru
      _
    %p378 = scmp.le.s32.totalorder 2, %s11
    // Predicated region
    $region41: #{transformer_forward.38} parent=5 // pred_check
      %p379 = pneg %p378
    $region42: #{transformer_forward.38} parent=5 // pred_check_branch
      %381 = sbr.rel (%p379) target = $region44
    $region43: #{transformer_forward.38} parent=5 // pred_region
      %s382 = ssub.s32 %s11, 2
      // Predicated region
      $region45: #{transformer_forward.38} parent=43 // pred_check
        %p383 = pneg %p124
      $region46: #{transformer_forward.38} parent=43 // pred_check_branch
        %385 = sbr.rel (%p383) target = $region48
      $region47: #{transformer_forward.38} parent=43 // pred_region
        %p386 = scmp.lt.s32.totalorder %s22, 1
        %s387 = scalar_select %p386, %s22, 1
        %p388 = scmp.lt.s32.totalorder %s23, 0
        %s389 = scalar_select %p388, %s23, 0
        %s390 = smul.addr %s387, 4
        %s391 = sadd.s32 %s389, %s390
        %s392 = smul.addr %s391, 4
        %s393 = scalar_lea.vmem %s3, %s392
      $region48: #{transformer_forward.38} parent=43 // pred_fallthru
        _
      // Predicated region
      $region49: #{transformer_forward.38} parent=43 // pred_check
        %p394 = pneg %p152
      $region50: #{transformer_forward.38} parent=43 // pred_check_branch
        %396 = sbr.rel (%p394) target = $region52
      $region51: #{transformer_forward.38} parent=43 // pred_region
        %p397 = scmp.lt.s32.totalorder %s22, 1
        %s398 = scalar_select %p397, %s22, 1
        %p399 = scmp.lt.s32.totalorder %s23, 0
        %s400 = scalar_select %p399, %s23, 0
        %s401 = smul.addr %s398, 4
        %s402 = sadd.s32 %s400, %s401
        %s403 = smul.addr %s402, 4
        %s404 = scalar_lea.vmem %s4, %s403
      $region52: #{transformer_forward.38} parent=43 // pred_fallthru
        _
    $region44: #{transformer_forward.38} parent=5 // pred_fallthru
      _
  $region6: #{transformer_forward.38} parent=0 // loop_footer
    %s15 = sadd.s32 1, %s11
  $region7: #{transformer_forward.38} parent=0 // loop_footer_branch
    %10 = sbr.rel target = $region3
  $region8: #{transformer_forward.38} parent=0 // loop_exit
    _

// kernel: transformer_forward.27
$region0: #{transformer_forward.27}
  #allocation0 [shape = 'u32[]', space=smem, size = 0x4, offset = 0x4, fixed_abs, tag = 'smem constant byte address 0x4 - core index']
  #allocation1 [shape = 'u32[144,128]{1,0:T(1,128)}', space=vmem, size = 0x12000, scoped, tag = 'internal scratch']
  %s0 = inlined_call_operand.vmem [shape: bf16[2,4,8,8], index: 0, kind: input, shape index: {}]
  %s1 = inlined_call_operand.vmem [shape: bf16[2,4,8,8], index: 1, kind: input, shape index: {}]
  %s2 = inlined_call_operand.vmem [shape: bf16[2,4,8,8], index: 2, kind: input, shape index: {}]
  %s3 = inlined_call_operand.vmem [shape: f32[2,1,8], index: 3, kind: input, shape index: {}]
  %s4 = inlined_call_operand.vmem [shape: bf16[2,4,8,8], index: 4, kind: output, shape index: {}]
  %s5 = sld [smem:[#allocation0]]
  $region49: #{transformer_forward.27} parent=0
    _
  %s7 = ssub.s32 1, %s5
  %s8 = scalar_select 0, %s7, %s5
  loop: start=0, step=1, limit=10
  $region2: #{transformer_forward.27} parent=0 // loop_pre_header
    _
  $region3: #{transformer_forward.27} parent=0 // loop_header
    %s10 = sphi 0, %s14
    %p11 = scmp.ge.s32.totalorder %s10, 10
    %s17 = sphi 0, %s29
    %s18 = sphi 0, %s25
    %s19 = sphi 0, %s17
    %s20 = sphi 0, %s18
    %s21 = sphi 0, %s19
    %s22 = sphi 0, %s20
    %s34 = sphi 0, %s36
    %s37 = sphi 0, %s34
    %s38 = sphi 0, %s37
    %s54 = sphi 0, %s38
    %s62 = sphi 0, %s64
    %s65 = sphi 0, %s62
    %s66 = sphi 0, %s65
    %s82 = sphi 0, %s66
    %s90 = sphi 0, %s92
    %s93 = sphi 0, %s90
    %s94 = sphi 0, %s93
    %s110 = sphi 0, %s94
    %s116 = sphi 0, %s118
    %s119 = sphi 0, %s116
    %s120 = sphi 0, %s119
    %s136 = sphi 0, %s120
    %s144 = sphi 0, %s146
    %s147 = sphi 0, %s144
    %s148 = sphi 0, %s147
    %s164 = sphi 0, %s148
  $region4: #{transformer_forward.27} parent=0 // loop_header_branch
    %13 = sbr.rel (%p11) target = $region8
  $region5: #{transformer_forward.27} parent=0 // loop_body
    %s15 = ssub.s32 %s10, 1
    %s16 = ssub.s32 %s10, 2
    %s23 = sadd.s32 1, %s18
    %p24 = scmp.ge.s32.totalorder %s23, 4
    %s25 = scalar_select %p24, 0, %s23
    %s26 = sadd.s32 1, %s17
    %s27 = scalar_select %p24, %s26, %s17
    %p28 = scmp.ge.s32.totalorder %s27, 2
    %s29 = scalar_select %p28, 0, %s27
    %s30 = ssub.s32 %s17, %s29
    %s31 = ssub.s32 %s18, %s25
    %s32 = sor.u32 %s30, %s31
    %p33 = scmp.eq.s32.totalorder %s32, 0
    %s35 = sadd.s32 %s34, 1
    %s36 = scalar_select %p33, %s34, %s35
    %p39 = pneg %p33
    %p40 = scmp.eq.s32.totalorder %s10, 7
    %p41 = por %p39, %p40
    %p42 = scmp.ne.s32.totalorder %s34, %s37
    %p43 = scmp.eq.s32.totalorder %s10, 0
    %p44 = por %p42, %p43
    %p45 = scmp.ne.s32.totalorder %s34, %s37
    %p46 = scmp.eq.s32.totalorder %s15, 7
    %p47 = por %p45, %p46
    %p48 = scmp.ne.s32.totalorder %s37, %s38
    %p49 = scmp.eq.s32.totalorder %s15, 0
    %p50 = por %p48, %p49
    %p51 = scmp.ne.s32.totalorder %s37, %s38
    %p52 = scmp.eq.s32.totalorder %s16, 7
    %p53 = por %p51, %p52
    %p55 = scmp.ne.s32.totalorder %s38, %s54
    %p56 = scmp.eq.s32.totalorder %s16, 0
    %p57 = por %p55, %p56
    %s58 = ssub.s32 %s17, %s29
    %s59 = ssub.s32 %s18, %s25
    %s60 = sor.u32 %s58, %s59
    %p61 = scmp.eq.s32.totalorder %s60, 0
    %s63 = sadd.s32 %s62, 1
    %s64 = scalar_select %p61, %s62, %s63
    %p67 = pneg %p61
    %p68 = scmp.eq.s32.totalorder %s10, 7
    %p69 = por %p67, %p68
    %p70 = scmp.ne.s32.totalorder %s62, %s65
    %p71 = scmp.eq.s32.totalorder %s10, 0
    %p72 = por %p70, %p71
    %p73 = scmp.ne.s32.totalorder %s62, %s65
    %p74 = scmp.eq.s32.totalorder %s15, 7
    %p75 = por %p73, %p74
    %p76 = scmp.ne.s32.totalorder %s65, %s66
    %p77 = scmp.eq.s32.totalorder %s15, 0
    %p78 = por %p76, %p77
    %p79 = scmp.ne.s32.totalorder %s65, %s66
    %p80 = scmp.eq.s32.totalorder %s16, 7
    %p81 = por %p79, %p80
    %p83 = scmp.ne.s32.totalorder %s66, %s82
    %p84 = scmp.eq.s32.totalorder %s16, 0
    %p85 = por %p83, %p84
    %s86 = ssub.s32 %s17, %s29
    %s87 = ssub.s32 %s18, %s25
    %s88 = sor.u32 %s86, %s87
    %p89 = scmp.eq.s32.totalorder %s88, 0
    %s91 = sadd.s32 %s90, 1
    %s92 = scalar_select %p89, %s90, %s91
    %p95 = pneg %p89
    %p96 = scmp.eq.s32.totalorder %s10, 7
    %p97 = por %p95, %p96
    %p98 = scmp.ne.s32.totalorder %s90, %s93
    %p99 = scmp.eq.s32.totalorder %s10, 0
    %p100 = por %p98, %p99
    %p101 = scmp.ne.s32.totalorder %s90, %s93
    %p102 = scmp.eq.s32.totalorder %s15, 7
    %p103 = por %p101, %p102
    %p104 = scmp.ne.s32.totalorder %s93, %s94
    %p105 = scmp.eq.s32.totalorder %s15, 0
    %p106 = por %p104, %p105
    %p107 = scmp.ne.s32.totalorder %s93, %s94
    %p108 = scmp.eq.s32.totalorder %s16, 7
    %p109 = por %p107, %p108
    %p111 = scmp.ne.s32.totalorder %s94, %s110
    %p112 = scmp.eq.s32.totalorder %s16, 0
    %p113 = por %p111, %p112
    %s114 = ssub.s32 %s17, %s29
    %p115 = scmp.eq.s32.totalorder %s114, 0
    %s117 = sadd.s32 %s116, 1
    %s118 = scalar_select %p115, %s116, %s117
    %p121 = pneg %p115
    %p122 = scmp.eq.s32.totalorder %s10, 7
    %p123 = por %p121, %p122
    %p124 = scmp.ne.s32.totalorder %s116, %s119
    %p125 = scmp.eq.s32.totalorder %s10, 0
    %p126 = por %p124, %p125
    %p127 = scmp.ne.s32.totalorder %s116, %s119
    %p128 = scmp.eq.s32.totalorder %s15, 7
    %p129 = por %p127, %p128
    %p130 = scmp.ne.s32.totalorder %s119, %s120
    %p131 = scmp.eq.s32.totalorder %s15, 0
    %p132 = por %p130, %p131
    %p133 = scmp.ne.s32.totalorder %s119, %s120
    %p134 = scmp.eq.s32.totalorder %s16, 7
    %p135 = por %p133, %p134
    %p137 = scmp.ne.s32.totalorder %s120, %s136
    %p138 = scmp.eq.s32.totalorder %s16, 0
    %p139 = por %p137, %p138
    %s140 = ssub.s32 %s17, %s29
    %s141 = ssub.s32 %s18, %s25
    %s142 = sor.u32 %s140, %s141
    %p143 = scmp.eq.s32.totalorder %s142, 0
    %s145 = sadd.s32 %s144, 1
    %s146 = scalar_select %p143, %s144, %s145
    %p149 = pneg %p143
    %p150 = scmp.eq.s32.totalorder %s10, 7
    %p151 = por %p149, %p150
    %p152 = scmp.ne.s32.totalorder %s144, %s147
    %p153 = scmp.eq.s32.totalorder %s10, 0
    %p154 = por %p152, %p153
    %p155 = scmp.ne.s32.totalorder %s144, %s147
    %p156 = scmp.eq.s32.totalorder %s15, 7
    %p157 = por %p155, %p156
    %p158 = scmp.ne.s32.totalorder %s147, %s148
    %p159 = scmp.eq.s32.totalorder %s15, 0
    %p160 = por %p158, %p159
    %p161 = scmp.ne.s32.totalorder %s147, %s148
    %p162 = scmp.eq.s32.totalorder %s16, 7
    %p163 = por %p161, %p162
    %p165 = scmp.ne.s32.totalorder %s148, %s164
    %p166 = scmp.eq.s32.totalorder %s16, 0
    %p167 = por %p165, %p166
    %p168 = scmp.le.s32.totalorder 1, %s10
    %p169 = scmp.lt.s32.totalorder %s10, 9
    %p170 = pnand %p168, %p169
    %p171 = pneg %p170
    // Predicated region
    $region9: #{transformer_forward.27} parent=5 // pred_check
      _
    $region10: #{transformer_forward.27} parent=5 // pred_check_branch
      %173 = sbr.rel (%p170) target = $region12
    $region11: #{transformer_forward.27} parent=5 // pred_region
      %s174 = ssub.s32 %s10, 1
    $region12: #{transformer_forward.27} parent=5 // pred_fallthru
      _
    %p175 = scmp.lt.s32.totalorder %s10, 8
    // Predicated region
    $region13: #{transformer_forward.27} parent=5 // pred_check
      %p176 = pneg %p175
    $region14: #{transformer_forward.27} parent=5 // pred_check_branch
      %178 = sbr.rel (%p176) target = $region16
    $region15: #{transformer_forward.27} parent=5 // pred_region
      // Predicated region
      $region17: #{transformer_forward.27} parent=15 // pred_check
        %p179 = pneg %p44
      $region18: #{transformer_forward.27} parent=15 // pred_check_branch
        %181 = sbr.rel (%p179) target = $region20
      $region19: #{transformer_forward.27} parent=15 // pred_region
        %p182 = scmp.lt.s32.totalorder %s17, 1
        %s183 = scalar_select %p182, %s17, 1
        %p184 = scmp.lt.s32.totalorder %s18, 3
        %s185 = scalar_select %p184, %s18, 3
        %s186 = smul.addr %s183, 4
        %s187 = sadd.s32 %s185, %s186
        %s188 = smul.addr %s187, 4
        %s189 = scalar_lea.vmem %s0, %s188
      $region20: #{transformer_forward.27} parent=15 // pred_fallthru
        _
      // Predicated region
      $region21: #{transformer_forward.27} parent=15 // pred_check
        %p190 = pneg %p72
      $region22: #{transformer_forward.27} parent=15 // pred_check_branch
        %192 = sbr.rel (%p190) target = $region24
      $region23: #{transformer_forward.27} parent=15 // pred_region
        %p193 = scmp.lt.s32.totalorder %s17, 1
        %s194 = scalar_select %p193, %s17, 1
        %p195 = scmp.lt.s32.totalorder %s18, 3
        %s196 = scalar_select %p195, %s18, 3
        %s197 = smul.addr %s194, 4
        %s198 = sadd.s32 %s196, %s197
        %s199 = smul.addr %s198, 4
        %s200 = scalar_lea.vmem %s1, %s199
      $region24: #{transformer_forward.27} parent=15 // pred_fallthru
        _
      // Predicated region
      $region25: #{transformer_forward.27} parent=15 // pred_check
        %p201 = pneg %p100
      $region26: #{transformer_forward.27} parent=15 // pred_check_branch
        %203 = sbr.rel (%p201) target = $region28
      $region27: #{transformer_forward.27} parent=15 // pred_region
        %p204 = scmp.lt.s32.totalorder %s17, 1
        %s205 = scalar_select %p204, %s17, 1
        %p206 = scmp.lt.s32.totalorder %s18, 3
        %s207 = scalar_select %p206, %s18, 3
        %s208 = smul.addr %s205, 4
        %s209 = sadd.s32 %s207, %s208
        %s210 = smul.addr %s209, 4
        %s211 = scalar_lea.vmem %s2, %s210
      $region28: #{transformer_forward.27} parent=15 // pred_fallthru
        _
      // Predicated region
      $region29: #{transformer_forward.27} parent=15 // pred_check
        %p212 = pneg %p126
      $region30: #{transformer_forward.27} parent=15 // pred_check_branch
        %214 = sbr.rel (%p212) target = $region32
      $region31: #{transformer_forward.27} parent=15 // pred_region
        %p215 = scmp.lt.s32.totalorder %s17, 1
        %s216 = scalar_select %p215, %s17, 1
        %s217 = scalar_lea.vmem %s3, %s216
      $region32: #{transformer_forward.27} parent=15 // pred_fallthru
        _
    $region16: #{transformer_forward.27} parent=5 // pred_fallthru
      _
    %p218 = scmp.le.s32.totalorder 1, %s10
    %p219 = scmp.lt.s32.totalorder %s10, 9
    %p220 = pnand %p218, %p219
    %p221 = pneg %p220
    // Predicated region
    $region33: #{transformer_forward.27} parent=5 // pred_check
      _
    $region34: #{transformer_forward.27} parent=5 // pred_check_branch
      %223 = sbr.rel (%p220) target = $region36
    $region35: #{transformer_forward.27} parent=5 // pred_region
      %s224 = ssub.s32 %s10, 1
      %p225 = scmp.lt.s32.totalorder %s19, 1
      %s226 = scalar_select %p225, %s19, 1
      %p227 = scmp.lt.s32.totalorder %s20, 3
      %s228 = scalar_select %p227, %s20, 3
      %s229 = smul.addr %s226, 4
      %s230 = sadd.s32 %s228, %s229
      %s231 = smul.addr %s230, 4
      %s232 = scalar_lea.vmem %s0, %s231
      %p233 = pneg %p50
      %p234 = pneg %p47
      %p235 = scmp.lt.s32.totalorder %s19, 1
      %s236 = scalar_select %p235, %s19, 1
      %p237 = scmp.lt.s32.totalorder %s20, 3
      %s238 = scalar_select %p237, %s20, 3
      %s239 = smul.addr %s236, 4
      %s240 = sadd.s32 %s238, %s239
      %s241 = smul.addr %s240, 4
      %s242 = scalar_lea.vmem %s1, %s241
      %p243 = pneg %p78
      %p244 = pneg %p75
      %p245 = scmp.lt.s32.totalorder %s19, 1
      %s246 = scalar_select %p245, %s19, 1
      %p247 = scmp.lt.s32.totalorder %s20, 3
      %s248 = scalar_select %p247, %s20, 3
      %s249 = smul.addr %s246, 4
      %s250 = sadd.s32 %s248, %s249
      %s251 = smul.addr %s250, 4
      %s252 = scalar_lea.vmem %s2, %s251
      %p253 = pneg %p106
      %p254 = pneg %p103
      %p255 = scmp.lt.s32.totalorder %s19, 1
      %s256 = scalar_select %p255, %s19, 1
      %s257 = scalar_lea.vmem %s3, %s256
      %p258 = pneg %p132
      %p259 = pneg %p129
      %p260 = pneg %p160
      %p261 = pneg %p157
      %p262 = scmp.lt.s32.totalorder %s19, 1
      %s263 = scalar_select %p262, %s19, 1
      %p264 = scmp.lt.s32.totalorder %s20, 3
      %s265 = scalar_select %p264, %s20, 3
      %s266 = smul.addr %s263, 4
      %s267 = sadd.s32 %s265, %s266
      %s268 = smul.addr %s267, 4
      %s269 = scalar_lea.vmem %s4, %s268
      %p270 = scmp.lt.s32.totalorder %s19, 1
      %s271 = scalar_select %p270, %s19, 1
      %p272 = scmp.lt.s32.totalorder %s20, 3
      %s273 = scalar_select %p272, %s20, 3
      %s274 = smul.addr %s271, 4
      %s275 = sadd.s32 %s273, %s274
      %s276 = smul.addr %s275, 4
      %s277 = scalar_lea.vmem %s0, %s276
      %p278 = scmp.lt.s32.totalorder %s19, 1
      %s279 = scalar_select %p278, %s19, 1
      %p280 = scmp.lt.s32.totalorder %s20, 3
      %s281 = scalar_select %p280, %s20, 3
      %s282 = smul.addr %s279, 4
      %s283 = sadd.s32 %s281, %s282
      %s284 = smul.addr %s283, 4
      %s285 = scalar_lea.vmem %s1, %s284
      %p286 = scmp.lt.s32.totalorder %s19, 1
      %s287 = scalar_select %p286, %s19, 1
      %p288 = scmp.lt.s32.totalorder %s20, 3
      %s289 = scalar_select %p288, %s20, 3
      %s290 = smul.addr %s287, 4
      %s291 = sadd.s32 %s289, %s290
      %s292 = smul.addr %s291, 4
      %s293 = scalar_lea.vmem %s2, %s292
      %p294 = scmp.lt.s32.totalorder %s19, 1
      %s295 = scalar_select %p294, %s19, 1
      %s296 = scalar_lea.vmem %s3, %s295
      %p297 = scmp.lt.s32.totalorder %s19, 1
      %s298 = scalar_select %p297, %s19, 1
      %p299 = scmp.lt.s32.totalorder %s20, 3
      %s300 = scalar_select %p299, %s20, 3
      %s301 = smul.addr %s298, 4
      %s302 = sadd.s32 %s300, %s301
      %s303 = smul.addr %s302, 4
      %s304 = scalar_lea.vmem %s4, %s303
      %v307 = vld [vmem:[%s277] sm:$0xf]
      %v308 = vmul.bf16 %v307, 1052065461
      %v309 = vld [vmem:[%s285] sm:$0xf]
      %v310 = vld [vmem:[%s293] sm:$0xf]
      %v311 = vld [vmem:[%s296] sm:$0x1]
      %v313 = vlaneseq
      %v314 = vshrl.u32 %v313, 7
      %v315 = vsub.s32 0, %v314
      %v316 = vrot.slane %v311, %v315
      %vm318 = vcmask 64512
      %v320 = vsel %vm318, %v308, 0
      %v323 = vsel %vm318, %v309, 0
      %325 = vmatprep.subr.bf16.mxu0 0
      %326 = vmatpush1.bf16.xpose.msra.mxu0 %v323
      %327 = vmatprep.subr.bf16.mxu0 0
      %328 = vmatpush1.bf16.xpose.msra.mxu0 0
      %329 = vmatprep.subr.bf16.mxu0 0
      %330 = vmatpush1.bf16.xpose.msra.mxu0 0
      %331 = vmatprep.subr.bf16.mxu0 0
      %332 = vmatpush1.bf16.xpose.msra.mxu0 0
      %333 = vmatprep.subr.bf16.mxu0 0
      %334 = vmatpush1.bf16.xpose.msra.mxu0 0
      %335 = vmatprep.subr.bf16.mxu0 0
      %336 = vmatpush1.bf16.xpose.msra.mxu0 0
      %337 = vmatprep.subr.bf16.mxu0 0
      %338 = vmatpush1.bf16.xpose.msra.mxu0 0
      %339 = vmatprep.subr.bf16.mxu0 0
      %340 = vmatpush1.bf16.xpose.msra.mxu0 0
      %341 = vmatprep.subr.bf16.mxu0 0
      %342 = vmatpush1.bf16.xpose.msra.mxu0 0
      %343 = vmatprep.subr.bf16.mxu0 0
      %344 = vmatpush1.bf16.xpose.msra.mxu0 0
      %345 = vmatprep.subr.bf16.mxu0 0
      %346 = vmatpush1.bf16.xpose.msra.mxu0 0
      %347 = vmatprep.subr.bf16.mxu0 0
      %348 = vmatpush1.bf16.xpose.msra.mxu0 0
      %349 = vmatprep.subr.bf16.mxu0 0
      %350 = vmatpush1.bf16.xpose.msra.mxu0 0
      %351 = vmatprep.subr.bf16.mxu0 0
      %352 = vmatpush1.bf16.xpose.msra.mxu0 0
      %353 = vmatprep.subr.bf16.mxu0 0
      %354 = vmatpush1.bf16.xpose.msra.mxu0 0
      %355 = vmatprep.subr.bf16.mxu0 0
      %356 = vmatpush1.bf16.xpose.msra.mxu0 0
      %357 = vmatprep.mubr.bf16.mxu0 0
      %358 = vmatmul.mubr.bf16.gmra.mrb[0].mxu0 %v320
      %v359 = vpop.f32.mrb[0].mxu0
      %v360 = vadd.f32 %v316, %v359
      %v361 = vpop.f32.mrb[0].mxu0
      %v362 = vpop.f32.mrb[0].mxu0
      %v363 = vpop.f32.mrb[0].mxu0
      %364 = vdwg.mxu0
      %v365 = vsel %vm318, %v360, -inf
      %366 = vmax.xlane.f32.xlu0 %v365
      %v367 = vpop.xlane.xlu0 %366
      %v368 = vsub.f32 %v360, %v367
      %v369 = vmul.f32 %v368, 1.442695
      %v370 = vpow.pop %v369
      %v371 = vpack.c.bf16 %v370, %v370
      %v373 = vsel %vm318, %v371, 0
      %vm375 = vcmask 1043456
      %v377 = vsel %vm375, %v310, 0
      %379 = vmatprep.subr.bf16.mxu0 0
      %380 = vmatpush1.bf16.msra.mxu0 %v377
      %381 = vmatprep.subr.bf16.mxu0 0
      %382 = vmatpush1.bf16.msra.mxu0 0
      %383 = vmatprep.subr.bf16.mxu0 0
      %384 = vmatpush1.bf16.msra.mxu0 0
      %385 = vmatprep.subr.bf16.mxu0 0
      %386 = vmatpush1.bf16.msra.mxu0 0
      %387 = vmatprep.subr.bf16.mxu0 0
      %388 = vmatpush1.bf16.msra.mxu0 0
      %389 = vmatprep.subr.bf16.mxu0 0
      %390 = vmatpush1.bf16.msra.mxu0 0
      %391 = vmatprep.subr.bf16.mxu0 0
      %392 = vmatpush1.bf16.msra.mxu0 0
      %393 = vmatprep.subr.bf16.mxu0 0
      %394 = vmatpush1.bf16.msra.mxu0 0
      %395 = vmatprep.subr.bf16.mxu0 0
      %396 = vmatpush1.bf16.msra.mxu0 0
      %397 = vmatprep.subr.bf16.mxu0 0
      %398 = vmatpush1.bf16.msra.mxu0 0
      %399 = vmatprep.subr.bf16.mxu0 0
      %400 = vmatpush1.bf16.msra.mxu0 0
      %401 = vmatprep.subr.bf16.mxu0 0
      %402 = vmatpush1.bf16.msra.mxu0 0
      %403 = vmatprep.subr.bf16.mxu0 0
      %404 = vmatpush1.bf16.msra.mxu0 0
      %405 = vmatprep.subr.bf16.mxu0 0
      %406 = vmatpush1.bf16.msra.mxu0 0
      %407 = vmatprep.subr.bf16.mxu0 0
      %408 = vmatpush1.bf16.msra.mxu0 0
      %409 = vmatprep.subr.bf16.mxu0 0
      %410 = vmatpush1.bf16.msra.mxu0 0
      %411 = vmatprep.mubr.bf16.mxu0 0
      %412 = vmatmul.mubr.bf16.gmra.mrb[0].mxu0 %v373
      %v413 = vpop.f32.mrb[0].mxu0
      %v414 = vadd.f32 0.0, %v413
      %v415 = vpop.f32.mrb[0].mxu0
      %v416 = vpop.f32.mrb[0].mxu0
      %v417 = vpop.f32.mrb[0].mxu0
      %418 = vdwg.mxu0
      %v419 = vsel %vm318, %v370, 0.0
      %420 = vadd.xlane.f32.xlu0 %v419
      %v421 = vpop.xlane.xlu0 %420
      %v422 = vrcp.pop %v421
      %v423 = vmul.f32 %v414, %v422
      %v424 = vpack.c.bf16 %v423, %v423
      %vm425 = vcmask 60416
      %426 = vst.msk [vmem:[%s304] sm:$0xf] %vm425, %v424
      %p427 = scmp.lt.s32.totalorder %s19, 1
      %s428 = scalar_select %p427, %s19, 1
      %p429 = scmp.lt.s32.totalorder %s20, 3
      %s430 = scalar_select %p429, %s20, 3
      %s431 = smul.addr %s428, 4
      %s432 = sadd.s32 %s430, %s431
      %s433 = smul.addr %s432, 4
      %s434 = scalar_lea.vmem %s4, %s433
      // Predicated region
      $region37: #{transformer_forward.27} parent=35 // pred_check
        %p435 = pneg %p157
      $region38: #{transformer_forward.27} parent=35 // pred_check_branch
        %437 = sbr.rel (%p435) target = $region40
      $region39: #{transformer_forward.27} parent=35 // pred_region
        _
      $region40: #{transformer_forward.27} parent=35 // pred_fallthru
        _
    $region36: #{transformer_forward.27} parent=5 // pred_fallthru
      _
    %p438 = scmp.le.s32.totalorder 2, %s10
    // Predicated region
    $region41: #{transformer_forward.27} parent=5 // pred_check
      %p439 = pneg %p438
    $region42: #{transformer_forward.27} parent=5 // pred_check_branch
      %441 = sbr.rel (%p439) target = $region44
    $region43: #{transformer_forward.27} parent=5 // pred_region
      %s442 = ssub.s32 %s10, 2
      // Predicated region
      $region45: #{transformer_forward.27} parent=43 // pred_check
        %p443 = pneg %p163
      $region46: #{transformer_forward.27} parent=43 // pred_check_branch
        %445 = sbr.rel (%p443) target = $region48
      $region47: #{transformer_forward.27} parent=43 // pred_region
        %p446 = scmp.lt.s32.totalorder %s21, 1
        %s447 = scalar_select %p446, %s21, 1
        %p448 = scmp.lt.s32.totalorder %s22, 3
        %s449 = scalar_select %p448, %s22, 3
        %s450 = smul.addr %s447, 4
        %s451 = sadd.s32 %s449, %s450
        %s452 = smul.addr %s451, 4
        %s453 = scalar_lea.vmem %s4, %s452
      $region48: #{transformer_forward.27} parent=43 // pred_fallthru
        _
    $region44: #{transformer_forward.27} parent=5 // pred_fallthru
      _
  $region6: #{transformer_forward.27} parent=0 // loop_footer
    %s14 = sadd.s32 1, %s10
  $region7: #{transformer_forward.27} parent=0 // loop_footer_branch
    %9 = sbr.rel target = $region3
  $region8: #{transformer_forward.27} parent=0 // loop_exit
    _

// kernel: transformer_forward.51
$region0: #{transformer_forward.51}
  #allocation0 [shape = 'u32[]', space=smem, size = 0x4, offset = 0x4, fixed_abs, tag = 'smem constant byte address 0x4 - core index']
  #allocation1 [shape = 'u32[144,128]{1,0:T(1,128)}', space=vmem, size = 0x12000, scoped, tag = 'internal scratch']
  %s0 = inlined_call_operand.vmem [shape: f32[16,48], index: 0, kind: input, shape index: {}]
  %s1 = inlined_call_operand.vmem [shape: f32[16,1], index: 1, kind: input, shape index: {}]
  %s2 = inlined_call_operand.vmem [shape: f32[16,48], index: 2, kind: output, shape index: {}]
  %s3 = sld [smem:[#allocation0]]
  $region18: #{transformer_forward.51} parent=0
    _
  %s5 = ssub.s32 1, %s3
  %s6 = scalar_select 0, %s5, %s3
  // Predicated region
  $region2: #{transformer_forward.51} parent=0 // pred_check
    _
  $region3: #{transformer_forward.51} parent=0 // pred_check_branch
    %8 = sbr.rel (0) target = $region5
  $region4: #{transformer_forward.51} parent=0 // pred_region
    _
  $region5: #{transformer_forward.51} parent=0 // pred_fallthru
    _
  // Predicated region
  $region6: #{transformer_forward.51} parent=0 // pred_check
    _
  $region7: #{transformer_forward.51} parent=0 // pred_check_branch
    %10 = sbr.rel (0) target = $region9
  $region8: #{transformer_forward.51} parent=0 // pred_region
    _
  $region9: #{transformer_forward.51} parent=0 // pred_fallthru
    _
  %v11 = vld [vmem:[%s0] sm:$0xff]
  %v12 = vld [vmem:[%s0 + $0x8] sm:$0xff]
  %v13 = vld [vmem:[%s1] sm:$0xff]
  %v14 = vld [vmem:[%s1 + $0x8] sm:$0xff]
  %16 = vset.pattern.permute.xlu0 0
  %17 = vperm.xlu0 %16, %v13
  %v18 = vpop.permute.xlu0 %17
  %21 = vset.pattern.permute.xlu0 0
  %22 = vperm.xlu0 %21, %v14
  %v23 = vpop.permute.xlu0 %22
  %v25 = vsub.f32 %v11, %v18
  %v26 = vsub.f32 %v12, %v23
  %vm27 = vcmask 392192
  %28 = vst.msk [vmem:[%s2] sm:$0xff] %vm27, %v25
  %29 = vst.msk [vmem:[%s2 + $0x8] sm:$0xff] %vm27, %v26
  // Predicated region
  $region10: #{transformer_forward.51} parent=0 // pred_check
    _
  $region11: #{transformer_forward.51} parent=0 // pred_check_branch
    %31 = sbr.rel (0) target = $region13
  $region12: #{transformer_forward.51} parent=0 // pred_region
    _
  $region13: #{transformer_forward.51} parent=0 // pred_fallthru
    _
  // Predicated region
  $region14: #{transformer_forward.51} parent=0 // pred_check
    _
  $region15: #{transformer_forward.51} parent=0 // pred_check_branch
    %33 = sbr.rel (0) target = $region17
  $region16: #{transformer_forward.51} parent=0 // pred_region
    _
  $region17: #{transformer_forward.51} parent=0 // pred_fallthru
    _

</llo_original>
